<compile_context>
chip_gen: v6e
topology: v6e:2x2x1
jax: 0.10.0
libtpu: 0.0.40
codegen_flags: <defaults>
</compile_context>

<pallas_src>
import functools
import math
import numpy as np
import jax
import jax.numpy as jnp
from jax import lax
from jax.experimental import pallas as pl
from jax.experimental.pallas import tpu as pltpu


@functools.lru_cache(maxsize=None)
def _build_fft_block_call(B, T, D, DI, H, dk, K1, K2, S):
    """Builds the fused pallas_call for one FFTBlock forward (grid over batch)."""
    HDK = H * dk
    P1 = (K1 - 1) // 2
    P2 = (K2 - 1) // 2
    BT = B * T
    scale = 1.0 / math.sqrt(dk)

    def _mish(v):
        # v * tanh(softplus(v)) == v * (s^2 - 1)/(s^2 + 1), s = 1 + exp(v).
        # One exp + one approx EUP reciprocal (vs exp+log+tanh).
        e = jnp.exp(jnp.minimum(v, 20.0))     # clamp only avoids overflow; result == v there
        s = 1.0 + e
        return v * (1.0 - 2.0 * pl.reciprocal(s * s + 1.0, approx=True))

    def _ln(h):
        mu = jnp.mean(h, axis=-1, keepdims=True)
        var = jnp.mean(jnp.square(h - mu), axis=-1, keepdims=True)
        return (h - mu) * lax.rsqrt(var + 1e-5)

    def _conv(x2, w, b, K, P, Din):
        # "same" 1-D conv as a single im2col matmul: (T, K*Din) @ (K*Din, Dout).
        # w is packed (K*Din, Dout); rows [k*Din:(k+1)*Din] == W_torch[:, :, k].T
        if K == 1:
            cols = x2
        else:
            zpad = jnp.zeros((P, Din), jnp.float32)
            xp = jnp.concatenate([zpad, x2, zpad], axis=0)                    # (T+2P, Din)
            cols = jnp.concatenate([xp[k:k + T, :] for k in range(K)], axis=-1)
        return jnp.dot(cols, w, preferred_element_type=jnp.float32) + b

    def kernel(x_ref, style_ref, mask_ref, attn_mask_ref,
               w_qkv_ref, b_qkv_ref, w_fc_ref, b_fc_ref,
               w_saln_ref, b_saln_ref,
               w1_ref, b1_ref, w2_ref, b2_ref,
               out_ref, attn_ref):
        xf = x_ref[0]                            # (T, D) f32
        style = style_ref[0]                     # (1, S) f32
        keep = 1.0 - mask_ref[0]                 # (T, 1); 0 on padded rows
        key_mask = attn_mask_ref[0]              # (T, T); 1.0 == masked key

        # bf16-stored weights, upcast once; all accumulation in f32.
        w_qkv = w_qkv_ref[...].astype(jnp.float32)
        w_fc = w_fc_ref[...].astype(jnp.float32)
        w_sl = w_saln_ref[...].astype(jnp.float32)
        w1 = w1_ref[...].astype(jnp.float32)
        w2 = w2_ref[...].astype(jnp.float32)

        # Both SALN style affines in one matmul: (1, 4D) = [gamma0|beta0|gamma1|beta1].
        sg = jnp.dot(style, w_sl, preferred_element_type=jnp.float32) + b_saln_ref[...]
        g0, be0 = sg[:, 0 * D:1 * D], sg[:, 1 * D:2 * D]
        g1, be1 = sg[:, 2 * D:3 * D], sg[:, 3 * D:4 * D]

        # ---- multi-head self attention (heads batched, + residual) -----------------
        qkv = jnp.dot(xf, w_qkv, preferred_element_type=jnp.float32) + b_qkv_ref[...]
        q = qkv[:, 0 * HDK:1 * HDK].reshape(T, H, dk)
        k = qkv[:, 1 * HDK:2 * HDK].reshape(T, H, dk)
        v = qkv[:, 2 * HDK:3 * HDK].reshape(T, H, dk)
        s = jnp.einsum('qhd,khd->hqk', q, k,
                       preferred_element_type=jnp.float32) * scale            # (H, T, T)
        # -1e9 (not -inf) matches the reference; fully-masked rows give uniform probs.
        s = jnp.where(key_mask[None, :, :] > 0.5, jnp.float32(-1e9), s)
        s = s - jnp.max(s, axis=-1, keepdims=True)
        e = jnp.exp(s)
        p = e * pl.reciprocal(jnp.sum(e, axis=-1, keepdims=True), approx=True)
        attn_ref[0] = p                                                        # (H, T, T)
        ctx = jnp.einsum('hqk,khd->qhd', p, v,
                         preferred_element_type=jnp.float32).reshape(T, HDK)
        attn_out = (jnp.dot(ctx, w_fc, preferred_element_type=jnp.float32)
                    + b_fc_ref[...] + xf)                                      # + residual

        # ---- SALN 0 + masked_fill ---------------------------------------------------
        y0 = (g0 * _ln(attn_out) + be0) * keep

        # ---- PositionwiseFeedForward: ConvNorm(K1) -> Mish -> ConvNorm(K2), +residual
        h1 = _mish(_conv(y0, w1, b1_ref[...], K1, P1, D))
        h2 = _conv(h1, w2, b2_ref[...], K2, P2, DI)
        ffn = h2 + y0

        # ---- SALN 1 + masked_fill ---------------------------------------------------
        out_ref[0] = (g1 * _ln(ffn) + be1) * keep

    # Advisory cost estimate (matmul flops dominate).
    flops = (2 * BT * D * 3 * HDK            # qkv projection
             + 4 * B * H * T * T * dk        # scores + context
             + 2 * BT * HDK * D              # output projection
             + 2 * B * S * 4 * D             # fused SALN style affine
             + 2 * BT * K1 * D * DI          # conv1 (im2col)
             + 2 * BT * K2 * DI * D)         # conv2
    transcendentals = B * H * T * T + 2 * BT * DI + 6 * BT
    bytes_accessed = (4 * (B * T * D + B * S + B * T + B * T * T)              # f32 activations in
                      + 2 * (D * 3 * HDK + HDK * D + S * 4 * D
                             + K1 * D * DI + K2 * DI * D)                      # bf16 weights
                      + 4 * (3 * HDK + D + 4 * D + DI + D)                     # f32 biases
                      + 4 * (B * T * D + B * H * T * T))                       # outputs

    vmem = pltpu.MemorySpace.VMEM
    return pl.pallas_call(
        kernel,
        grid=(B,),
        out_shape=(jax.ShapeDtypeStruct((B, T, D), jnp.float32),
                   jax.ShapeDtypeStruct((B, H, T, T), jnp.float32)),
        in_specs=([pl.BlockSpec((1, T, D), lambda b: (b, 0, 0)),      # x
                   pl.BlockSpec((1, 1, S), lambda b: (b, 0, 0)),      # style
                   pl.BlockSpec((1, T, 1), lambda b: (b, 0, 0)),      # row keep mask
                   pl.BlockSpec((1, T, T), lambda b: (b, 0, 0))]      # attention key mask
                  + [pl.BlockSpec(memory_space=vmem)] * 10),          # weights / biases (resident)
        out_specs=(pl.BlockSpec((1, T, D), lambda b: (b, 0, 0)),
                   pl.BlockSpec((1, H, T, T), lambda b: (b, 0, 0, 0))),
        compiler_params=pltpu.CompilerParams(
            dimension_semantics=("parallel",)),
        cost_estimate=pl.CostEstimate(flops=flops,
                                      transcendentals=transcendentals,
                                      bytes_accessed=bytes_accessed),
    )


class FFTBlock:
    """JAX/Pallas port of the SCCNN FFTBlock (inference mode)."""

    def __init__(self, key, d_model, d_inner, n_head, d_k, d_v,
                 fft_conv1d_kernel_size=(9, 1), style_dim=128, dropout=0.1):
        assert d_k == d_v, "fused kernel assumes d_k == d_v"
        k1, k2 = fft_conv1d_kernel_size
        assert k1 % 2 == 1 and k2 % 2 == 1, "odd conv kernels assumed (SAME padding)"
        self.d_model, self.d_inner = d_model, d_inner
        self.n_head, self.d_k, self.d_v = n_head, d_k, d_v
        self.k1, self.k2 = k1, k2
        self.style_dim = style_dim
        hdk = n_head * d_k

        ks = jax.random.split(key, 16)

        def uni(k, fan_in, shape):
            b = 1.0 / math.sqrt(fan_in)
            return jax.random.uniform(k, shape, jnp.float32, -b, b)

        def xavier(k, shape):
            fan_out, fan_in, kk = shape
            b = math.sqrt(6.0 / (fan_in * kk + fan_out * kk))
            return jax.random.uniform(k, shape, jnp.float32, -b, b)

        def rb16(w):
            # round weights through bf16 once: kernel (bf16 storage) and the f32
            # reference then operate on bit-identical values.
            return w.astype(jnp.bfloat16).astype(jnp.float32)

        # --- MultiHeadAttention params, stored (in, out) so the kernel does x @ W.
        self.w_qs = rb16(uni(ks[0], d_model, (d_model, hdk))); self.b_qs = uni(ks[1], d_model, (hdk,))
        self.w_ks = rb16(uni(ks[2], d_model, (d_model, hdk))); self.b_ks = uni(ks[3], d_model, (hdk,))
        self.w_vs = rb16(uni(ks[4], d_model, (d_model, hdk))); self.b_vs = uni(ks[5], d_model, (hdk,))
        self.w_fc = rb16(uni(ks[6], hdk, (hdk, d_model)));     self.b_fc = uni(ks[7], hdk, (d_model,))

        # --- StyleAdaptiveLayerNorm affines: Linear(style_dim -> 2*d_model), bias=(1,0).
        self.w_saln0 = rb16(uni(ks[8], style_dim, (style_dim, 2 * d_model)))
        self.w_saln1 = rb16(uni(ks[9], style_dim, (style_dim, 2 * d_model)))
        saln_bias = jnp.concatenate([jnp.ones((d_model,), jnp.float32),
                                     jnp.zeros((d_model,), jnp.float32)])
        self.b_saln0 = saln_bias
        self.b_saln1 = saln_bias

        # --- PositionwiseFeedForward ConvNorm weights (PyTorch layout (out, in, k)).
        self.w1 = rb16(xavier(ks[10], (d_inner, d_model, k1))); self.b1 = uni(ks[11], d_model * k1, (d_inner,))
        self.w2 = rb16(xavier(ks[12], (d_model, d_inner, k2))); self.b2 = uni(ks[13], d_inner * k2, (d_model,))

        # --- packed, kernel-ready forms (bf16 weight slabs, f32 biases) --------------
        self.w_qkv = jnp.concatenate([self.w_qs, self.w_ks, self.w_vs], axis=1).astype(jnp.bfloat16)
        self.b_qkv = jnp.concatenate([self.b_qs, self.b_ks, self.b_vs])[None, :]
        self.w_fc_b = self.w_fc.astype(jnp.bfloat16)
        self.b_fc2 = self.b_fc[None, :]
        self.w_saln = jnp.concatenate([self.w_saln0, self.w_saln1], axis=1).astype(jnp.bfloat16)
        self.b_saln = jnp.concatenate([self.b_saln0, self.b_saln1])[None, :]
        # conv taps packed as (K*Cin, Cout): rows [k*Cin:(k+1)*Cin] = W[:, :, k].T
        self.w1_packed = jnp.transpose(self.w1, (2, 1, 0)).reshape(k1 * d_model, d_inner).astype(jnp.bfloat16)
        self.w2_packed = jnp.transpose(self.w2, (2, 1, 0)).reshape(k2 * d_inner, d_model).astype(jnp.bfloat16)
        self.b1_2 = self.b1[None, :]
        self.b2_2 = self.b2[None, :]

    def __call__(self, x, style_vector, mask=None, slf_attn_mask=None):
        B, T, D = x.shape
        assert D == self.d_model
        if mask is None:
            mask_f = jnp.zeros((B, T), jnp.float32)
        else:
            mask_f = mask.astype(jnp.float32)
        if slf_attn_mask is None:
            attn_mask_f = jnp.broadcast_to(mask_f[:, None, :], (B, T, T))
        else:
            attn_mask_f = slf_attn_mask.astype(jnp.float32)

        call = _build_fft_block_call(B, T, D, self.d_inner, self.n_head, self.d_k,
                                     self.k1, self.k2, self.style_dim)
        out, attn = call(x, style_vector[:, None, :], mask_f[:, :, None], attn_mask_f,
                         self.w_qkv, self.b_qkv, self.w_fc_b, self.b_fc2,
                         self.w_saln, self.b_saln,
                         self.w1_packed, self.b1_2, self.w2_packed, self.b2_2)
        # attention weights in StyleSpeech layout: (n_head * B, T, T), head-major batch.
        slf_attn = jnp.transpose(attn, (1, 0, 2, 3)).reshape(self.n_head * B, T, T)
        return out, slf_attn


def reference_fft_block(m, x, style, mask_f, attn_mask_f):
    """Pure-JAX (XLA) reference with HIGHEST-precision matmuls / convs."""
    HI = lax.Precision.HIGHEST
    B, T, D = x.shape
    H, dk = m.n_head, m.d_k

    q = jnp.einsum('btd,dh->bth', x, m.w_qs, precision=HI) + m.b_qs
    k = jnp.einsum('btd,dh->bth', x, m.w_ks, precision=HI) + m.b_ks
    v = jnp.einsum('btd,dh->bth', x, m.w_vs, precision=HI) + m.b_vs
    q = q.reshape(B, T, H, dk).transpose(0, 2, 1, 3)
    k = k.reshape(B, T, H, dk).transpose(0, 2, 1, 3)
    v = v.reshape(B, T, H, dk).transpose(0, 2, 1, 3)
    s = jnp.einsum('bhqd,bhkd->bhqk', q, k, precision=HI) / math.sqrt(dk)
    s = jnp.where(attn_mask_f[:, None, :, :] > 0.5, -1e9, s)
    p = jax.nn.softmax(s, axis=-1)
    ctx = jnp.einsum('bhqk,bhkd->bhqd', p, v, precision=HI)
    ctx = ctx.transpose(0, 2, 1, 3).reshape(B, T, H * dk)
    attn_out = jnp.einsum('bth,hd->btd', ctx, m.w_fc, precision=HI) + m.b_fc + x

    def saln(h, w, b):
        sg = jnp.einsum('bs,sd->bd', style, w, precision=HI) + b
        gamma, beta = sg[:, :D], sg[:, D:]
        mu = h.mean(-1, keepdims=True)
        var = ((h - mu) ** 2).mean(-1, keepdims=True)
        return gamma[:, None, :] * ((h - mu) / jnp.sqrt(var + 1e-5)) + beta[:, None, :]

    def conv(h, w, b, ksz):
        pad = (ksz - 1) // 2
        return lax.conv_general_dilated(
            h, w, window_strides=(1,), padding=[(pad, pad)],
            dimension_numbers=('NWC', 'OIW', 'NWC'), precision=HI) + b

    keep = (1.0 - mask_f)[:, :, None]
    y0 = saln(attn_out, m.w_saln0, m.b_saln0) * keep
    h1 = conv(y0, m.w1, m.b1, m.k1)
    h1 = h1 * jnp.tanh(jax.nn.softplus(h1))           # Mish
    h2 = conv(h1, m.w2, m.b2, m.k2)
    ffn = h2 + y0
    y1 = saln(ffn, m.w_saln1, m.b_saln1) * keep
    attn_w = p.transpose(1, 0, 2, 3).reshape(H * B, T, T)
    return y1, attn_w


if __name__ == "__main__":
    key = jax.random.PRNGKey(0)
    kp, kx, kstyle = jax.random.split(key, 3)

    B, T = 2, 16
    d_model, d_inner = 128, 256
    n_head, d_k, d_v = 2, 64, 64
    style_dim = 128

    block = FFTBlock(kp, d_model, d_inner, n_head, d_k, d_v,
                     fft_conv1d_kernel_size=(9, 1), style_dim=style_dim, dropout=0.1)

    x = jax.random.normal(kx, (B, T, d_model), jnp.float32)
    style = jax.random.normal(kstyle, (B, style_dim), jnp.float32)
    lengths = jnp.array([T, 11])
    mask = jnp.arange(T)[None, :] >= lengths[:, None]              # (B, T) bool, True = pad
    slf_attn_mask = jnp.broadcast_to(mask[:, None, :], (B, T, T))  # key-axis mask

    out, slf_attn = block(x, style, mask=mask, slf_attn_mask=slf_attn_mask)
    out, slf_attn = jax.block_until_ready((out, slf_attn))

    ref_out, ref_attn = reference_fft_block(block, x, style,
                                            mask.astype(jnp.float32),
                                            slf_attn_mask.astype(jnp.float32))
    # bf16-rounded weights are shared between kernel and reference, so the only
    # deviations are the approx EUP reciprocals (softmax denom, Mish).
    np.testing.assert_allclose(np.asarray(out), np.asarray(ref_out), rtol=5e-3, atol=5e-3)
    np.testing.assert_allclose(np.asarray(slf_attn), np.asarray(ref_attn), rtol=5e-3, atol=5e-3)

    assert out.shape == (B, T, d_model), out.shape
    assert slf_attn.shape == (n_head * B, T, T), slf_attn.shape
    # padded rows must be exactly zero
    assert float(jnp.abs(out[1, 11:, :]).max()) == 0.0

    print("KERNEL_OK")
</pallas_src>

<mosaic_0001>
module attributes {stable_mosaic.version = 11 : i64} {
  func.func @kernel(%arg0: i32, %arg1: memref<1x16x128xf32, #tpu.memory_space<vmem>>, %arg2: memref<1x1x128xf32, #tpu.memory_space<vmem>>, %arg3: memref<1x16x1xf32, #tpu.memory_space<vmem>>, %arg4: memref<1x16x16xf32, #tpu.memory_space<vmem>>, %arg5: memref<128x384xbf16, #tpu.memory_space<vmem>>, %arg6: memref<1x384xf32, #tpu.memory_space<vmem>>, %arg7: memref<128x128xbf16, #tpu.memory_space<vmem>>, %arg8: memref<1x128xf32, #tpu.memory_space<vmem>>, %arg9: memref<128x512xbf16, #tpu.memory_space<vmem>>, %arg10: memref<1x512xf32, #tpu.memory_space<vmem>>, %arg11: memref<1152x256xbf16, #tpu.memory_space<vmem>>, %arg12: memref<1x256xf32, #tpu.memory_space<vmem>>, %arg13: memref<256x128xbf16, #tpu.memory_space<vmem>>, %arg14: memref<1x128xf32, #tpu.memory_space<vmem>>, %arg15: memref<1x16x128xf32, #tpu.memory_space<vmem>>, %arg16: memref<1x2x16x16xf32, #tpu.memory_space<vmem>>) attributes {dimension_semantics = [#tpu.dimension_semantics<parallel>], iteration_bounds = array<i64: 2>, scalar_prefetch = 0 : i64, scratch_operands = 0 : i64, tpu.core_type = #tpu.core_type<tc>, window_params = [{transform_indices = @transform_0, window_bounds = array<i64: 1, 16, 128>}, {transform_indices = @transform_1, window_bounds = array<i64: 1, 1, 128>}, {transform_indices = @transform_2, window_bounds = array<i64: 1, 16, 1>}, {transform_indices = @transform_3, window_bounds = array<i64: 1, 16, 16>}, {pipeline_mode = #tpu.pipeline_mode<synchronous>, transform_indices = @transform_4, window_bounds = array<i64: 128, 384>}, {pipeline_mode = #tpu.pipeline_mode<synchronous>, transform_indices = @transform_5, window_bounds = array<i64: 1, 384>}, {pipeline_mode = #tpu.pipeline_mode<synchronous>, transform_indices = @transform_6, window_bounds = array<i64: 128, 128>}, {pipeline_mode = #tpu.pipeline_mode<synchronous>, transform_indices = @transform_7, window_bounds = array<i64: 1, 128>}, {pipeline_mode = #tpu.pipeline_mode<synchronous>, transform_indices = @transform_8, window_bounds = array<i64: 128, 512>}, {pipeline_mode = #tpu.pipeline_mode<synchronous>, transform_indices = @transform_9, window_bounds = array<i64: 1, 512>}, {pipeline_mode = #tpu.pipeline_mode<synchronous>, transform_indices = @transform_10, window_bounds = array<i64: 1152, 256>}, {pipeline_mode = #tpu.pipeline_mode<synchronous>, transform_indices = @transform_11, window_bounds = array<i64: 1, 256>}, {pipeline_mode = #tpu.pipeline_mode<synchronous>, transform_indices = @transform_12, window_bounds = array<i64: 256, 128>}, {pipeline_mode = #tpu.pipeline_mode<synchronous>, transform_indices = @transform_13, window_bounds = array<i64: 1, 128>}, {transform_indices = @transform_14, window_bounds = array<i64: 1, 16, 128>}, {transform_indices = @transform_15, window_bounds = array<i64: 1, 2, 16, 16>}]} {
    %c0 = arith.constant 0 : index
    %c0_0 = arith.constant 0 : index
    %c0_1 = arith.constant 0 : index
    %0 = vector.load %arg1[%c0, %c0_0, %c0_1] : memref<1x16x128xf32, #tpu.memory_space<vmem>>, vector<1x16x128xf32>
    %1 = vector.shape_cast %0 : vector<1x16x128xf32> to vector<16x128xf32>
    %c0_2 = arith.constant 0 : index
    %c0_3 = arith.constant 0 : index
    %c0_4 = arith.constant 0 : index
    %2 = vector.load %arg2[%c0_2, %c0_3, %c0_4] : memref<1x1x128xf32, #tpu.memory_space<vmem>>, vector<1x1x128xf32>
    %3 = vector.shape_cast %2 : vector<1x1x128xf32> to vector<1x128xf32>
    %c0_5 = arith.constant 0 : index
    %c0_6 = arith.constant 0 : index
    %c0_7 = arith.constant 0 : index
    %4 = vector.load %arg3[%c0_5, %c0_6, %c0_7] : memref<1x16x1xf32, #tpu.memory_space<vmem>>, vector<1x16x1xf32>
    %5 = vector.shape_cast %4 : vector<1x16x1xf32> to vector<16x1xf32>
    %cst = arith.constant 1.000000e+00 : f32
    %6 = vector.broadcast %cst : f32 to vector<16x1xf32>
    %7 = arith.subf %6, %5 : vector<16x1xf32>
    %c0_8 = arith.constant 0 : index
    %c0_9 = arith.constant 0 : index
    %c0_10 = arith.constant 0 : index
    %8 = vector.load %arg4[%c0_8, %c0_9, %c0_10] : memref<1x16x16xf32, #tpu.memory_space<vmem>>, vector<1x16x16xf32>
    %9 = vector.shape_cast %8 : vector<1x16x16xf32> to vector<16x16xf32>
    %c0_11 = arith.constant 0 : index
    %c0_12 = arith.constant 0 : index
    %10 = vector.load %arg5[%c0_11, %c0_12] : memref<128x384xbf16, #tpu.memory_space<vmem>>, vector<128x384xbf16>
    %11 = arith.extf %10 : vector<128x384xbf16> to vector<128x384xf32>
    %c0_13 = arith.constant 0 : index
    %c0_14 = arith.constant 0 : index
    %12 = vector.load %arg7[%c0_13, %c0_14] : memref<128x128xbf16, #tpu.memory_space<vmem>>, vector<128x128xbf16>
    %13 = arith.extf %12 : vector<128x128xbf16> to vector<128x128xf32>
    %c0_15 = arith.constant 0 : index
    %c0_16 = arith.constant 0 : index
    %14 = vector.load %arg9[%c0_15, %c0_16] : memref<128x512xbf16, #tpu.memory_space<vmem>>, vector<128x512xbf16>
    %15 = arith.extf %14 : vector<128x512xbf16> to vector<128x512xf32>
    %c0_17 = arith.constant 0 : index
    %c0_18 = arith.constant 0 : index
    %16 = vector.load %arg11[%c0_17, %c0_18] : memref<1152x256xbf16, #tpu.memory_space<vmem>>, vector<1152x256xbf16>
    %17 = arith.extf %16 : vector<1152x256xbf16> to vector<1152x256xf32>
    %c0_19 = arith.constant 0 : index
    %c0_20 = arith.constant 0 : index
    %18 = vector.load %arg13[%c0_19, %c0_20] : memref<256x128xbf16, #tpu.memory_space<vmem>>, vector<256x128xbf16>
    %19 = arith.extf %18 : vector<256x128xbf16> to vector<256x128xf32>
    %cst_21 = arith.constant dense<0.000000e+00> : vector<1x512xf32>
    %20 = tpu.matmul %3, %15, %cst_21 {dimension_numbers = #tpu.dot_dimension_numbers<[1], [0], [0], [1], [0, 0, 1, 1], [], []>} : vector<1x128xf32>, vector<128x512xf32>, vector<1x512xf32> -> vector<1x512xf32>
    %c0_22 = arith.constant 0 : index
    %c0_23 = arith.constant 0 : index
    %21 = vector.load %arg10[%c0_22, %c0_23] : memref<1x512xf32, #tpu.memory_space<vmem>>, vector<1x512xf32>
    %22 = arith.addf %20, %21 : vector<1x512xf32>
    %23 = vector.extract_strided_slice %22 {offsets = [0, 0], sizes = [1, 128], strides = [1, 1]} : vector<1x512xf32> to vector<1x128xf32>
    %24 = vector.extract_strided_slice %22 {offsets = [0, 128], sizes = [1, 128], strides = [1, 1]} : vector<1x512xf32> to vector<1x128xf32>
    %25 = vector.extract_strided_slice %22 {offsets = [0, 256], sizes = [1, 128], strides = [1, 1]} : vector<1x512xf32> to vector<1x128xf32>
    %26 = vector.extract_strided_slice %22 {offsets = [0, 384], sizes = [1, 128], strides = [1, 1]} : vector<1x512xf32> to vector<1x128xf32>
    %cst_24 = arith.constant dense<0.000000e+00> : vector<16x384xf32>
    %27 = tpu.matmul %1, %11, %cst_24 {dimension_numbers = #tpu.dot_dimension_numbers<[1], [0], [0], [1], [0, 0, 1, 1], [], []>} : vector<16x128xf32>, vector<128x384xf32>, vector<16x384xf32> -> vector<16x384xf32>
    %c0_25 = arith.constant 0 : index
    %c0_26 = arith.constant 0 : index
    %28 = vector.load %arg6[%c0_25, %c0_26] : memref<1x384xf32, #tpu.memory_space<vmem>>, vector<1x384xf32>
    %29 = vector.broadcast %28 : vector<1x384xf32> to vector<16x384xf32>
    %30 = arith.addf %27, %29 : vector<16x384xf32>
    %31 = vector.extract_strided_slice %30 {offsets = [0, 0], sizes = [16, 128], strides = [1, 1]} : vector<16x384xf32> to vector<16x128xf32>
    %32 = vector.shape_cast %31 : vector<16x128xf32> to vector<16x2x64xf32>
    %33 = vector.extract_strided_slice %30 {offsets = [0, 128], sizes = [16, 128], strides = [1, 1]} : vector<16x384xf32> to vector<16x128xf32>
    %34 = vector.shape_cast %33 : vector<16x128xf32> to vector<16x2x64xf32>
    %35 = vector.extract_strided_slice %30 {offsets = [0, 256], sizes = [16, 128], strides = [1, 1]} : vector<16x384xf32> to vector<16x128xf32>
    %36 = vector.shape_cast %35 : vector<16x128xf32> to vector<16x2x64xf32>
    "tpu.trace_start"() <{level = 10 : i32, message = "qhd,khd->hqk"}> : () -> ()
    %cst_27 = arith.constant dense<0.000000e+00> : vector<2x16x16xf32>
    %37 = tpu.matmul %32, %34, %cst_27 {dimension_numbers = #tpu.dot_dimension_numbers<[2], [2], [0], [0], [0, 1, 0, 0, 1, 0], [1], [1]>} : vector<16x2x64xf32>, vector<16x2x64xf32>, vector<2x16x16xf32> -> vector<2x16x16xf32>
    "tpu.trace_stop"() : () -> ()
    %cst_28 = arith.constant 1.250000e-01 : f32
    %38 = vector.broadcast %cst_28 : f32 to vector<2x16x16xf32>
    %39 = arith.mulf %37, %38 : vector<2x16x16xf32>
    %40 = vector.shape_cast %9 : vector<16x16xf32> to vector<1x16x16xf32>
    %cst_29 = arith.constant 5.000000e-01 : f32
    %41 = vector.broadcast %cst_29 : f32 to vector<1x16x16xf32>
    %42 = arith.cmpf ogt, %40, %41 : vector<1x16x16xf32>
    %cst_30 = arith.constant -1.000000e+09 : f32
    %43 = vector.shape_cast %42 : vector<1x16x16xi1> to vector<1x16x16xi1>
    %44 = vector.broadcast %43 : vector<1x16x16xi1> to vector<2x16x16xi1>
    %45 = vector.broadcast %cst_30 : f32 to vector<2x16x16xf32>
    %46 = arith.select %44, %45, %39 : vector<2x16x16xi1>, vector<2x16x16xf32>
    %cst_31 = arith.constant dense<0xFF800000> : vector<2x16xf32>
    %47 = vector.multi_reduction <maximumf>, %46, %cst_31 [2] : vector<2x16x16xf32> to vector<2x16xf32>
    %48 = vector.shape_cast %47 : vector<2x16xf32> to vector<2x16x1xf32>
    %49 = vector.broadcast %48 : vector<2x16x1xf32> to vector<2x16x16xf32>
    %50 = arith.subf %46, %49 : vector<2x16x16xf32>
    %51 = math.exp %50 : vector<2x16x16xf32>
    %cst_32 = arith.constant dense<0.000000e+00> : vector<2x16xf32>
    %52 = vector.multi_reduction <add>, %51, %cst_32 [2] : vector<2x16x16xf32> to vector<2x16xf32>
    %53 = vector.shape_cast %52 : vector<2x16xf32> to vector<2x16x1xf32>
    %54 = tpu.reciprocal %53 {approx = true} : vector<2x16x1xf32> -> vector<2x16x1xf32>
    %55 = vector.broadcast %54 : vector<2x16x1xf32> to vector<2x16x16xf32>
    %56 = arith.mulf %51, %55 : vector<2x16x16xf32>
    %c0_33 = arith.constant 0 : index
    %c0_34 = arith.constant 0 : index
    %c0_35 = arith.constant 0 : index
    %c0_36 = arith.constant 0 : index
    %57 = vector.load %arg16[%c0_33, %c0_34, %c0_35, %c0_36] : memref<1x2x16x16xf32, #tpu.memory_space<vmem>>, vector<1x2x16x16xf32>
    %58 = vector.shape_cast %57 : vector<1x2x16x16xf32> to vector<2x16x16xf32>
    %59 = vector.shape_cast %56 : vector<2x16x16xf32> to vector<1x2x16x16xf32>
    tpu.vector_store %arg16[%c0_33, %c0_34, %c0_35, %c0_36], %59 {strides = array<i32>} : memref<1x2x16x16xf32, #tpu.memory_space<vmem>>, vector<1x2x16x16xf32>,
    "tpu.trace_start"() <{level = 10 : i32, message = "hqk,khd->qhd"}> : () -> ()
    %cst_37 = arith.constant dense<0.000000e+00> : vector<2x64x16xf32>
    %60 = tpu.matmul %36, %56, %cst_37 {dimension_numbers = #tpu.dot_dimension_numbers<[0], [2], [2], [1], [0, 1, 0, 2, 1, 1], [1], [0]>} : vector<16x2x64xf32>, vector<2x16x16xf32>, vector<2x64x16xf32> -> vector<2x64x16xf32>
    %61 = tpu.transpose %60, [2, 0, 1] : vector<2x64x16xf32> -> vector<16x2x64xf32>
    "tpu.trace_stop"() : () -> ()
    %62 = vector.shape_cast %61 : vector<16x2x64xf32> to vector<16x128xf32>
    %cst_38 = arith.constant dense<0.000000e+00> : vector<16x128xf32>
    %63 = tpu.matmul %62, %13, %cst_38 {dimension_numbers = #tpu.dot_dimension_numbers<[1], [0], [0], [1], [0, 0, 1, 1], [], []>} : vector<16x128xf32>, vector<128x128xf32>, vector<16x128xf32> -> vector<16x128xf32>
    %c0_39 = arith.constant 0 : index
    %c0_40 = arith.constant 0 : index
    %64 = vector.load %arg8[%c0_39, %c0_40] : memref<1x128xf32, #tpu.memory_space<vmem>>, vector<1x128xf32>
    %65 = vector.broadcast %64 : vector<1x128xf32> to vector<16x128xf32>
    %66 = arith.addf %63, %65 : vector<16x128xf32>
    %67 = arith.addf %66, %1 : vector<16x128xf32>
    %cst_41 = arith.constant dense<0.000000e+00> : vector<16xf32>
    %68 = vector.multi_reduction <add>, %67, %cst_41 [1] : vector<16x128xf32> to vector<16xf32>
    %69 = vector.shape_cast %68 : vector<16xf32> to vector<16x1xf32>
    %cst_42 = arith.constant 1.280000e+02 : f32
    %70 = vector.broadcast %cst_42 : f32 to vector<16x1xf32>
    %71 = arith.divf %69, %70 : vector<16x1xf32>
    %72 = vector.broadcast %71 : vector<16x1xf32> to vector<16x128xf32>
    %73 = arith.subf %67, %72 : vector<16x128xf32>
    %74 = arith.mulf %73, %73 : vector<16x128xf32>
    %cst_43 = arith.constant dense<0.000000e+00> : vector<16xf32>
    %75 = vector.multi_reduction <add>, %74, %cst_43 [1] : vector<16x128xf32> to vector<16xf32>
    %76 = vector.shape_cast %75 : vector<16xf32> to vector<16x1xf32>
    %cst_44 = arith.constant 1.280000e+02 : f32
    %77 = vector.broadcast %cst_44 : f32 to vector<16x1xf32>
    %78 = arith.divf %76, %77 : vector<16x1xf32>
    %79 = vector.broadcast %71 : vector<16x1xf32> to vector<16x128xf32>
    %80 = arith.subf %67, %79 : vector<16x128xf32>
    %cst_45 = arith.constant 9.99999974E-6 : f32
    %81 = vector.broadcast %cst_45 : f32 to vector<16x1xf32>
    %82 = arith.addf %78, %81 : vector<16x1xf32>
    %83 = math.rsqrt %82 : vector<16x1xf32>
    %84 = vector.broadcast %83 : vector<16x1xf32> to vector<16x128xf32>
    %85 = arith.mulf %80, %84 : vector<16x128xf32>
    %86 = vector.broadcast %23 : vector<1x128xf32> to vector<16x128xf32>
    %87 = arith.mulf %86, %85 : vector<16x128xf32>
    %88 = vector.broadcast %24 : vector<1x128xf32> to vector<16x128xf32>
    %89 = arith.addf %87, %88 : vector<16x128xf32>
    %90 = vector.broadcast %7 : vector<16x1xf32> to vector<16x128xf32>
    %91 = arith.mulf %89, %90 : vector<16x128xf32>
    %c0_46 = arith.constant 0 : index
    %c0_47 = arith.constant 0 : index
    %92 = vector.load %arg12[%c0_46, %c0_47] : memref<1x256xf32, #tpu.memory_space<vmem>>, vector<1x256xf32>
    %cst_48 = arith.constant 0.000000e+00 : f32
    %93 = vector.broadcast %cst_48 : f32 to vector<4x128xf32>
    %94 = tpu.concatenate %93, %91, %93 in 0 : vector<4x128xf32>, vector<16x128xf32>, vector<4x128xf32> -> vector<24x128xf32>
    %95 = vector.extract_strided_slice %94 {offsets = [0, 0], sizes = [16, 128], strides = [1, 1]} : vector<24x128xf32> to vector<16x128xf32>
    %96 = vector.extract_strided_slice %94 {offsets = [1, 0], sizes = [16, 128], strides = [1, 1]} : vector<24x128xf32> to vector<16x128xf32>
    %97 = vector.extract_strided_slice %94 {offsets = [2, 0], sizes = [16, 128], strides = [1, 1]} : vector<24x128xf32> to vector<16x128xf32>
    %98 = vector.extract_strided_slice %94 {offsets = [3, 0], sizes = [16, 128], strides = [1, 1]} : vector<24x128xf32> to vector<16x128xf32>
    %99 = vector.extract_strided_slice %94 {offsets = [4, 0], sizes = [16, 128], strides = [1, 1]} : vector<24x128xf32> to vector<16x128xf32>
    %100 = vector.extract_strided_slice %94 {offsets = [5, 0], sizes = [16, 128], strides = [1, 1]} : vector<24x128xf32> to vector<16x128xf32>
    %101 = vector.extract_strided_slice %94 {offsets = [6, 0], sizes = [16, 128], strides = [1, 1]} : vector<24x128xf32> to vector<16x128xf32>
    %102 = vector.extract_strided_slice %94 {offsets = [7, 0], sizes = [16, 128], strides = [1, 1]} : vector<24x128xf32> to vector<16x128xf32>
    %103 = vector.extract_strided_slice %94 {offsets = [8, 0], sizes = [16, 128], strides = [1, 1]} : vector<24x128xf32> to vector<16x128xf32>
    %104 = tpu.concatenate %95, %96, %97, %98, %99, %100, %101, %102, %103 in 1 : vector<16x128xf32>, vector<16x128xf32>, vector<16x128xf32>, vector<16x128xf32>, vector<16x128xf32>, vector<16x128xf32>, vector<16x128xf32>, vector<16x128xf32>, vector<16x128xf32> -> vector<16x1152xf32>
    %cst_49 = arith.constant dense<0.000000e+00> : vector<16x256xf32>
    %105 = tpu.matmul %104, %17, %cst_49 {dimension_numbers = #tpu.dot_dimension_numbers<[1], [0], [0], [1], [0, 0, 1, 1], [], []>} : vector<16x1152xf32>, vector<1152x256xf32>, vector<16x256xf32> -> vector<16x256xf32>
    %106 = vector.broadcast %92 : vector<1x256xf32> to vector<16x256xf32>
    %107 = arith.addf %105, %106 : vector<16x256xf32>
    %cst_50 = arith.constant 2.000000e+01 : f32
    %108 = vector.broadcast %cst_50 : f32 to vector<16x256xf32>
    %109 = arith.minimumf %107, %108 : vector<16x256xf32>
    %110 = math.exp %109 : vector<16x256xf32>
    %cst_51 = arith.constant 1.000000e+00 : f32
    %111 = vector.broadcast %cst_51 : f32 to vector<16x256xf32>
    %112 = arith.addf %111, %110 : vector<16x256xf32>
    %113 = arith.mulf %112, %112 : vector<16x256xf32>
    %cst_52 = arith.constant 1.000000e+00 : f32
    %114 = vector.broadcast %cst_52 : f32 to vector<16x256xf32>
    %115 = arith.addf %113, %114 : vector<16x256xf32>
    %116 = tpu.reciprocal %115 {approx = true} : vector<16x256xf32> -> vector<16x256xf32>
    %cst_53 = arith.constant 2.000000e+00 : f32
    %117 = vector.broadcast %cst_53 : f32 to vector<16x256xf32>
    %118 = arith.mulf %117, %116 : vector<16x256xf32>
    %cst_54 = arith.constant 1.000000e+00 : f32
    %119 = vector.broadcast %cst_54 : f32 to vector<16x256xf32>
    %120 = arith.subf %119, %118 : vector<16x256xf32>
    %121 = arith.mulf %107, %120 : vector<16x256xf32>
    %c0_55 = arith.constant 0 : index
    %c0_56 = arith.constant 0 : index
    %122 = vector.load %arg14[%c0_55, %c0_56] : memref<1x128xf32, #tpu.memory_space<vmem>>, vector<1x128xf32>
    %cst_57 = arith.constant dense<0.000000e+00> : vector<16x128xf32>
    %123 = tpu.matmul %121, %19, %cst_57 {dimension_numbers = #tpu.dot_dimension_numbers<[1], [0], [0], [1], [0, 0, 1, 1], [], []>} : vector<16x256xf32>, vector<256x128xf32>, vector<16x128xf32> -> vector<16x128xf32>
    %124 = vector.broadcast %122 : vector<1x128xf32> to vector<16x128xf32>
    %125 = arith.addf %123, %124 : vector<16x128xf32>
    %126 = arith.addf %125, %91 : vector<16x128xf32>
    %cst_58 = arith.constant dense<0.000000e+00> : vector<16xf32>
    %127 = vector.multi_reduction <add>, %126, %cst_58 [1] : vector<16x128xf32> to vector<16xf32>
    %128 = vector.shape_cast %127 : vector<16xf32> to vector<16x1xf32>
    %cst_59 = arith.constant 1.280000e+02 : f32
    %129 = vector.broadcast %cst_59 : f32 to vector<16x1xf32>
    %130 = arith.divf %128, %129 : vector<16x1xf32>
    %131 = vector.broadcast %130 : vector<16x1xf32> to vector<16x128xf32>
    %132 = arith.subf %126, %131 : vector<16x128xf32>
    %133 = arith.mulf %132, %132 : vector<16x128xf32>
    %cst_60 = arith.constant dense<0.000000e+00> : vector<16xf32>
    %134 = vector.multi_reduction <add>, %133, %cst_60 [1] : vector<16x128xf32> to vector<16xf32>
    %135 = vector.shape_cast %134 : vector<16xf32> to vector<16x1xf32>
    %cst_61 = arith.constant 1.280000e+02 : f32
    %136 = vector.broadcast %cst_61 : f32 to vector<16x1xf32>
    %137 = arith.divf %135, %136 : vector<16x1xf32>
    %138 = vector.broadcast %130 : vector<16x1xf32> to vector<16x128xf32>
    %139 = arith.subf %126, %138 : vector<16x128xf32>
    %cst_62 = arith.constant 9.99999974E-6 : f32
    %140 = vector.broadcast %cst_62 : f32 to vector<16x1xf32>
    %141 = arith.addf %137, %140 : vector<16x1xf32>
    %142 = math.rsqrt %141 : vector<16x1xf32>
    %143 = vector.broadcast %142 : vector<16x1xf32> to vector<16x128xf32>
    %144 = arith.mulf %139, %143 : vector<16x128xf32>
    %145 = vector.broadcast %25 : vector<1x128xf32> to vector<16x128xf32>
    %146 = arith.mulf %145, %144 : vector<16x128xf32>
    %147 = vector.broadcast %26 : vector<1x128xf32> to vector<16x128xf32>
    %148 = arith.addf %146, %147 : vector<16x128xf32>
    %149 = vector.broadcast %7 : vector<16x1xf32> to vector<16x128xf32>
    %150 = arith.mulf %148, %149 : vector<16x128xf32>
    %c0_63 = arith.constant 0 : index
    %c0_64 = arith.constant 0 : index
    %c0_65 = arith.constant 0 : index
    %151 = vector.load %arg15[%c0_63, %c0_64, %c0_65] : memref<1x16x128xf32, #tpu.memory_space<vmem>>, vector<1x16x128xf32>
    %152 = vector.shape_cast %151 : vector<1x16x128xf32> to vector<16x128xf32>
    %153 = vector.shape_cast %150 : vector<16x128xf32> to vector<1x16x128xf32>
    tpu.vector_store %arg15[%c0_63, %c0_64, %c0_65], %153 {strides = array<i32>} : memref<1x16x128xf32, #tpu.memory_space<vmem>>, vector<1x16x128xf32>,
    return
  }
  func.func @transform_0(%arg0: i32) -> (i32, i32, i32) {
    %c0_i32 = arith.constant 0 : i32
    %c0_i32_0 = arith.constant 0 : i32
    %c0_i32_1 = arith.constant 0 : i32
    return %arg0, %c0_i32, %c0_i32_0 : i32, i32, i32
  }
  func.func @transform_1(%arg0: i32) -> (i32, i32, i32) {
    %c0_i32 = arith.constant 0 : i32
    %c0_i32_0 = arith.constant 0 : i32
    %c0_i32_1 = arith.constant 0 : i32
    return %arg0, %c0_i32, %c0_i32_0 : i32, i32, i32
  }
  func.func @transform_2(%arg0: i32) -> (i32, i32, i32) {
    %c0_i32 = arith.constant 0 : i32
    %c0_i32_0 = arith.constant 0 : i32
    %c0_i32_1 = arith.constant 0 : i32
    return %arg0, %c0_i32, %c0_i32_0 : i32, i32, i32
  }
  func.func @transform_3(%arg0: i32) -> (i32, i32, i32) {
    %c0_i32 = arith.constant 0 : i32
    %c0_i32_0 = arith.constant 0 : i32
    %c0_i32_1 = arith.constant 0 : i32
    return %arg0, %c0_i32, %c0_i32_0 : i32, i32, i32
  }
  func.func @transform_4(%arg0: i32) -> (i32, i32) {
    %c0_i32 = arith.constant 0 : i32
    %c0_i32_0 = arith.constant 0 : i32
    %c0_i32_1 = arith.constant 0 : i32
    return %c0_i32, %c0_i32_0 : i32, i32
  }
  func.func @transform_5(%arg0: i32) -> (i32, i32) {
    %c0_i32 = arith.constant 0 : i32
    %c0_i32_0 = arith.constant 0 : i32
    %c0_i32_1 = arith.constant 0 : i32
    return %c0_i32, %c0_i32_0 : i32, i32
  }
  func.func @transform_6(%arg0: i32) -> (i32, i32) {
    %c0_i32 = arith.constant 0 : i32
    %c0_i32_0 = arith.constant 0 : i32
    %c0_i32_1 = arith.constant 0 : i32
    return %c0_i32, %c0_i32_0 : i32, i32
  }
  func.func @transform_7(%arg0: i32) -> (i32, i32) {
    %c0_i32 = arith.constant 0 : i32
    %c0_i32_0 = arith.constant 0 : i32
    %c0_i32_1 = arith.constant 0 : i32
    return %c0_i32, %c0_i32_0 : i32, i32
  }
  func.func @transform_8(%arg0: i32) -> (i32, i32) {
    %c0_i32 = arith.constant 0 : i32
    %c0_i32_0 = arith.constant 0 : i32
    %c0_i32_1 = arith.constant 0 : i32
    return %c0_i32, %c0_i32_0 : i32, i32
  }
  func.func @transform_9(%arg0: i32) -> (i32, i32) {
    %c0_i32 = arith.constant 0 : i32
    %c0_i32_0 = arith.constant 0 : i32
    %c0_i32_1 = arith.constant 0 : i32
    return %c0_i32, %c0_i32_0 : i32, i32
  }
  func.func @transform_10(%arg0: i32) -> (i32, i32) {
    %c0_i32 = arith.constant 0 : i32
    %c0_i32_0 = arith.constant 0 : i32
    %c0_i32_1 = arith.constant 0 : i32
    return %c0_i32, %c0_i32_0 : i32, i32
  }
  func.func @transform_11(%arg0: i32) -> (i32, i32) {
    %c0_i32 = arith.constant 0 : i32
    %c0_i32_0 = arith.constant 0 : i32
    %c0_i32_1 = arith.constant 0 : i32
    return %c0_i32, %c0_i32_0 : i32, i32
  }
  func.func @transform_12(%arg0: i32) -> (i32, i32) {
    %c0_i32 = arith.constant 0 : i32
    %c0_i32_0 = arith.constant 0 : i32
    %c0_i32_1 = arith.constant 0 : i32
    return %c0_i32, %c0_i32_0 : i32, i32
  }
  func.func @transform_13(%arg0: i32) -> (i32, i32) {
    %c0_i32 = arith.constant 0 : i32
    %c0_i32_0 = arith.constant 0 : i32
    %c0_i32_1 = arith.constant 0 : i32
    return %c0_i32, %c0_i32_0 : i32, i32
  }
  func.func @transform_14(%arg0: i32) -> (i32, i32, i32) {
    %c0_i32 = arith.constant 0 : i32
    %c0_i32_0 = arith.constant 0 : i32
    %c0_i32_1 = arith.constant 0 : i32
    return %arg0, %c0_i32, %c0_i32_0 : i32, i32, i32
  }
  func.func @transform_15(%arg0: i32) -> (i32, i32, i32, i32) {
    %c0_i32 = arith.constant 0 : i32
    %c0_i32_0 = arith.constant 0 : i32
    %c0_i32_1 = arith.constant 0 : i32
    %c0_i32_2 = arith.constant 0 : i32
    return %arg0, %c0_i32, %c0_i32_0, %c0_i32_1 : i32, i32, i32, i32
  }
}

</mosaic_0001>

<llo_original>
// kernel: tpu_custom_call.1
$region0: #{tpu_custom_call.1}
  #allocation0 [shape = 'u32[]', space=smem, size = 0x4, offset = 0x4, fixed_abs, tag = 'smem constant byte address 0x4 - core index']
  #allocation1 [shape = 'u32[144,128]{1,0:T(1,128)}', space=vmem, size = 0x12000, scoped, tag = 'internal scratch']
  %s0 = inlined_call_operand.vmem [shape: f32[2,16,128], index: 0, kind: input, shape index: {}]
  %s1 = inlined_call_operand.hbm [shape: f32[2,1,128], index: 1, kind: input, shape index: {}]
  %s2 = inlined_call_operand.vmem [shape: f32[2,16,1], index: 2, kind: input, shape index: {}]
  %s3 = inlined_call_operand.hbm [shape: f32[2,16,16], index: 3, kind: input, shape index: {}]
  %s4 = inlined_call_operand.hbm [shape: bf16[128,384], index: 4, kind: input, shape index: {}]
  %s5 = inlined_call_operand.vmem [shape: f32[1,384], index: 5, kind: input, shape index: {}]
  %s6 = inlined_call_operand.hbm [shape: bf16[128,128], index: 6, kind: input, shape index: {}]
  %s7 = inlined_call_operand.vmem [shape: f32[1,128], index: 7, kind: input, shape index: {}]
  %s8 = inlined_call_operand.hbm [shape: bf16[128,512], index: 8, kind: input, shape index: {}]
  %s9 = inlined_call_operand.vmem [shape: f32[1,512], index: 9, kind: input, shape index: {}]
  %s10 = inlined_call_operand.hbm [shape: bf16[1152,256], index: 10, kind: input, shape index: {}]
  %s11 = inlined_call_operand.vmem [shape: f32[1,256], index: 11, kind: input, shape index: {}]
  %s12 = inlined_call_operand.hbm [shape: bf16[256,128], index: 12, kind: input, shape index: {}]
  %s13 = inlined_call_operand.vmem [shape: f32[1,128], index: 13, kind: input, shape index: {}]
  %s14 = inlined_call_operand.hbm [shape: f32[2,16,128], index: 14, kind: output, shape index: {0}]
  %s15 = inlined_call_operand.hbm [shape: f32[2,2,16,16], index: 15, kind: output, shape index: {1}]
  %16 = xla_tuple %s14, %s15
  %s17 = sld [smem:[#allocation0]]
  $region125: #{tpu_custom_call.1} parent=0
    _
  %s19 = ssub.s32 1, %s17
  %s20 = scalar_select 0, %s19, %s17
  $region1: #{tpu_custom_call.1} parent=0
    #allocation2 [shape = 'u8[1024]{0}', space=vmem, size = 0x400, scoped, tag = 'input window, operand 1']
    #allocation3 [shape = 's32[2]{0}', space=sflag, size = 0x8, scoped, tag = 'scoped memory for tpu_custom_call.1']
    #allocation4 [shape = 's32[2]{0}', space=sflag, size = 0x8, scoped, tag = 'scoped memory for tpu_custom_call.1']
    #allocation5 [shape = 'u8[16384]{0}', space=vmem, size = 0x4000, scoped, tag = 'input window, operand 3']
    #allocation6 [shape = 's32[2]{0}', space=sflag, size = 0x8, scoped, tag = 'scoped memory for tpu_custom_call.1']
    #allocation7 [shape = 'u8[98304]{0}', space=vmem, size = 0x18000, scoped, tag = 'input window, operand 4, single buffered']
    #allocation8 [shape = 'u8[32768]{0}', space=vmem, size = 0x8000, scoped, tag = 'input window, operand 6, single buffered']
    #allocation9 [shape = 's32[1]{0}', space=sflag, size = 0x4, scoped, tag = 'scoped memory for tpu_custom_call.1']
    #allocation10 [shape = 'u8[131072]{0}', space=vmem, size = 0x20000, scoped, tag = 'input window, operand 8, single buffered']
    #allocation11 [shape = 'u8[589824]{0}', space=vmem, size = 0x90000, scoped, tag = 'input window, operand 10, single buffered']
    #allocation12 [shape = 's32[1]{0}', space=sflag, size = 0x4, scoped, tag = 'scoped memory for tpu_custom_call.1']
    #allocation13 [shape = 'u8[65536]{0}', space=vmem, size = 0x10000, scoped, tag = 'input window, operand 12, single buffered']
    #allocation14 [shape = 'u8[16384]{0}', space=vmem, size = 0x4000, scoped, tag = 'output window, operand 0']
    #allocation15 [shape = 'u8[32768]{0}', space=vmem, size = 0x8000, scoped, tag = 'output window, operand 1']
    #allocation16 [shape = 's32[2]{0}', space=sflag, size = 0x8, scoped, tag = 'scoped memory for tpu_custom_call.1']
    %21 = vsyncpa [#allocation3], 0
    %s22 = scalar_lea.sflag [#allocation3], 1
    %23 = vsyncpa %s22, 0
    %24 = vsyncpa [#allocation6], 0
    %s25 = scalar_lea.sflag [#allocation6], 1
    %26 = vsyncpa %s25, 0
    %27 = vsyncpa [#allocation9], 0
    %28 = vsyncpa [#allocation12], 0
    %29 = vsyncpa [#allocation4], 0
    %s30 = scalar_lea.sflag [#allocation4], 1
    %31 = vsyncpa %s30, 0
    %32 = vsyncpa [#allocation16], 0
    %s33 = scalar_lea.sflag [#allocation16], 1
    %34 = vsyncpa %s33, 0
    loop: start=0, step=1, limit=4
    $region2: #{tpu_custom_call.1} parent=1 // loop_pre_header
      _
    $region3: #{tpu_custom_call.1} parent=1 // loop_header
      %s36 = sphi 0, %s40
      %p37 = scmp.ge.s32.totalorder %s36, 4
      %s46 = sphi 0, %s48
      %s49 = sphi 0, %s46
      %s50 = sphi 0, %s49
      %s66 = sphi 0, %s50
      %s72 = sphi 0, %s74
      %s75 = sphi 0, %s72
      %s76 = sphi 0, %s75
      %s92 = sphi 0, %s76
      %s98 = sphi 0, %s100
      %s101 = sphi 0, %s98
      %s102 = sphi 0, %s101
      %s118 = sphi 0, %s102
      %s124 = sphi 0, %s126
      %s127 = sphi 0, %s124
      %s128 = sphi 0, %s127
      %s144 = sphi 0, %s128
      %s148 = sphi 0, %s148
      %s150 = sphi 0, %s148
      %s151 = sphi 0, %s150
      %s165 = sphi 0, %s151
      %s169 = sphi 0, %s169
      %s171 = sphi 0, %s169
      %s172 = sphi 0, %s171
      %s186 = sphi 0, %s172
      %s190 = sphi 0, %s190
      %s192 = sphi 0, %s190
      %s193 = sphi 0, %s192
      %s207 = sphi 0, %s193
      %s211 = sphi 0, %s211
      %s213 = sphi 0, %s211
      %s214 = sphi 0, %s213
      %s228 = sphi 0, %s214
      %s232 = sphi 0, %s232
      %s234 = sphi 0, %s232
      %s235 = sphi 0, %s234
      %s249 = sphi 0, %s235
      %s253 = sphi 0, %s253
      %s255 = sphi 0, %s253
      %s256 = sphi 0, %s255
      %s270 = sphi 0, %s256
      %s274 = sphi 0, %s274
      %s276 = sphi 0, %s274
      %s277 = sphi 0, %s276
      %s291 = sphi 0, %s277
      %s295 = sphi 0, %s295
      %s297 = sphi 0, %s295
      %s298 = sphi 0, %s297
      %s312 = sphi 0, %s298
      %s316 = sphi 0, %s316
      %s318 = sphi 0, %s316
      %s319 = sphi 0, %s318
      %s333 = sphi 0, %s319
      %s337 = sphi 0, %s337
      %s339 = sphi 0, %s337
      %s340 = sphi 0, %s339
      %s354 = sphi 0, %s340
      %s360 = sphi 0, %s362
      %s363 = sphi 0, %s360
      %s364 = sphi 0, %s363
      %s380 = sphi 0, %s364
      %s386 = sphi 0, %s388
      %s389 = sphi 0, %s386
      %s390 = sphi 0, %s389
      %s406 = sphi 0, %s390
    $region4: #{tpu_custom_call.1} parent=1 // loop_header_branch
      %39 = sbr.rel (%p37) target = $region8
    $region5: #{tpu_custom_call.1} parent=1 // loop_body
      %s41 = ssub.s32 %s36, 1
      %s42 = ssub.s32 %s36, 2
      %s43 = sadd.s32 %s36, 1
      %s44 = ssub.s32 %s36, %s43
      %p45 = scmp.eq.s32.totalorder %s44, 0
      %s47 = sadd.s32 %s46, 1
      %s48 = scalar_select %p45, %s46, %s47
      %p51 = pneg %p45
      %p52 = scmp.eq.s32.totalorder %s36, 1
      %p53 = por %p51, %p52
      %p54 = scmp.ne.s32.totalorder %s46, %s49
      %p55 = scmp.eq.s32.totalorder %s36, 0
      %p56 = por %p54, %p55
      %p57 = scmp.ne.s32.totalorder %s46, %s49
      %p58 = scmp.eq.s32.totalorder %s41, 1
      %p59 = por %p57, %p58
      %p60 = scmp.ne.s32.totalorder %s49, %s50
      %p61 = scmp.eq.s32.totalorder %s41, 0
      %p62 = por %p60, %p61
      %p63 = scmp.ne.s32.totalorder %s49, %s50
      %p64 = scmp.eq.s32.totalorder %s42, 1
      %p65 = por %p63, %p64
      %p67 = scmp.ne.s32.totalorder %s50, %s66
      %p68 = scmp.eq.s32.totalorder %s42, 0
      %p69 = por %p67, %p68
      %s70 = ssub.s32 %s36, %s43
      %p71 = scmp.eq.s32.totalorder %s70, 0
      %s73 = sadd.s32 %s72, 1
      %s74 = scalar_select %p71, %s72, %s73
      %p77 = pneg %p71
      %p78 = scmp.eq.s32.totalorder %s36, 1
      %p79 = por %p77, %p78
      %p80 = scmp.ne.s32.totalorder %s72, %s75
      %p81 = scmp.eq.s32.totalorder %s36, 0
      %p82 = por %p80, %p81
      %p83 = scmp.ne.s32.totalorder %s72, %s75
      %p84 = scmp.eq.s32.totalorder %s41, 1
      %p85 = por %p83, %p84
      %p86 = scmp.ne.s32.totalorder %s75, %s76
      %p87 = scmp.eq.s32.totalorder %s41, 0
      %p88 = por %p86, %p87
      %p89 = scmp.ne.s32.totalorder %s75, %s76
      %p90 = scmp.eq.s32.totalorder %s42, 1
      %p91 = por %p89, %p90
      %p93 = scmp.ne.s32.totalorder %s76, %s92
      %p94 = scmp.eq.s32.totalorder %s42, 0
      %p95 = por %p93, %p94
      %s96 = ssub.s32 %s36, %s43
      %p97 = scmp.eq.s32.totalorder %s96, 0
      %s99 = sadd.s32 %s98, 1
      %s100 = scalar_select %p97, %s98, %s99
      %p103 = pneg %p97
      %p104 = scmp.eq.s32.totalorder %s36, 1
      %p105 = por %p103, %p104
      %p106 = scmp.ne.s32.totalorder %s98, %s101
      %p107 = scmp.eq.s32.totalorder %s36, 0
      %p108 = por %p106, %p107
      %p109 = scmp.ne.s32.totalorder %s98, %s101
      %p110 = scmp.eq.s32.totalorder %s41, 1
      %p111 = por %p109, %p110
      %p112 = scmp.ne.s32.totalorder %s101, %s102
      %p113 = scmp.eq.s32.totalorder %s41, 0
      %p114 = por %p112, %p113
      %p115 = scmp.ne.s32.totalorder %s101, %s102
      %p116 = scmp.eq.s32.totalorder %s42, 1
      %p117 = por %p115, %p116
      %p119 = scmp.ne.s32.totalorder %s102, %s118
      %p120 = scmp.eq.s32.totalorder %s42, 0
      %p121 = por %p119, %p120
      %s122 = ssub.s32 %s36, %s43
      %p123 = scmp.eq.s32.totalorder %s122, 0
      %s125 = sadd.s32 %s124, 1
      %s126 = scalar_select %p123, %s124, %s125
      %p129 = pneg %p123
      %p130 = scmp.eq.s32.totalorder %s36, 1
      %p131 = por %p129, %p130
      %p132 = scmp.ne.s32.totalorder %s124, %s127
      %p133 = scmp.eq.s32.totalorder %s36, 0
      %p134 = por %p132, %p133
      %p135 = scmp.ne.s32.totalorder %s124, %s127
      %p136 = scmp.eq.s32.totalorder %s41, 1
      %p137 = por %p135, %p136
      %p138 = scmp.ne.s32.totalorder %s127, %s128
      %p139 = scmp.eq.s32.totalorder %s41, 0
      %p140 = por %p138, %p139
      %p141 = scmp.ne.s32.totalorder %s127, %s128
      %p142 = scmp.eq.s32.totalorder %s42, 1
      %p143 = por %p141, %p142
      %p145 = scmp.ne.s32.totalorder %s128, %s144
      %p146 = scmp.eq.s32.totalorder %s42, 0
      %p147 = por %p145, %p146
      %s149 = sadd.s32 %s148, 1
      %p152 = scmp.eq.s32.totalorder %s36, 1
      %p153 = scmp.ne.s32.totalorder %s148, %s150
      %p154 = scmp.eq.s32.totalorder %s36, 0
      %p155 = por %p153, %p154
      %p156 = scmp.ne.s32.totalorder %s148, %s150
      %p157 = scmp.eq.s32.totalorder %s41, 1
      %p158 = por %p156, %p157
      %p159 = scmp.ne.s32.totalorder %s150, %s151
      %p160 = scmp.eq.s32.totalorder %s41, 0
      %p161 = por %p159, %p160
      %p162 = scmp.ne.s32.totalorder %s150, %s151
      %p163 = scmp.eq.s32.totalorder %s42, 1
      %p164 = por %p162, %p163
      %p166 = scmp.ne.s32.totalorder %s151, %s165
      %p167 = scmp.eq.s32.totalorder %s42, 0
      %p168 = por %p166, %p167
      %s170 = sadd.s32 %s169, 1
      %p173 = scmp.eq.s32.totalorder %s36, 1
      %p174 = scmp.ne.s32.totalorder %s169, %s171
      %p175 = scmp.eq.s32.totalorder %s36, 0
      %p176 = por %p174, %p175
      %p177 = scmp.ne.s32.totalorder %s169, %s171
      %p178 = scmp.eq.s32.totalorder %s41, 1
      %p179 = por %p177, %p178
      %p180 = scmp.ne.s32.totalorder %s171, %s172
      %p181 = scmp.eq.s32.totalorder %s41, 0
      %p182 = por %p180, %p181
      %p183 = scmp.ne.s32.totalorder %s171, %s172
      %p184 = scmp.eq.s32.totalorder %s42, 1
      %p185 = por %p183, %p184
      %p187 = scmp.ne.s32.totalorder %s172, %s186
      %p188 = scmp.eq.s32.totalorder %s42, 0
      %p189 = por %p187, %p188
      %s191 = sadd.s32 %s190, 1
      %p194 = scmp.eq.s32.totalorder %s36, 1
      %p195 = scmp.ne.s32.totalorder %s190, %s192
      %p196 = scmp.eq.s32.totalorder %s36, 0
      %p197 = por %p195, %p196
      %p198 = scmp.ne.s32.totalorder %s190, %s192
      %p199 = scmp.eq.s32.totalorder %s41, 1
      %p200 = por %p198, %p199
      %p201 = scmp.ne.s32.totalorder %s192, %s193
      %p202 = scmp.eq.s32.totalorder %s41, 0
      %p203 = por %p201, %p202
      %p204 = scmp.ne.s32.totalorder %s192, %s193
      %p205 = scmp.eq.s32.totalorder %s42, 1
      %p206 = por %p204, %p205
      %p208 = scmp.ne.s32.totalorder %s193, %s207
      %p209 = scmp.eq.s32.totalorder %s42, 0
      %p210 = por %p208, %p209
      %s212 = sadd.s32 %s211, 1
      %p215 = scmp.eq.s32.totalorder %s36, 1
      %p216 = scmp.ne.s32.totalorder %s211, %s213
      %p217 = scmp.eq.s32.totalorder %s36, 0
      %p218 = por %p216, %p217
      %p219 = scmp.ne.s32.totalorder %s211, %s213
      %p220 = scmp.eq.s32.totalorder %s41, 1
      %p221 = por %p219, %p220
      %p222 = scmp.ne.s32.totalorder %s213, %s214
      %p223 = scmp.eq.s32.totalorder %s41, 0
      %p224 = por %p222, %p223
      %p225 = scmp.ne.s32.totalorder %s213, %s214
      %p226 = scmp.eq.s32.totalorder %s42, 1
      %p227 = por %p225, %p226
      %p229 = scmp.ne.s32.totalorder %s214, %s228
      %p230 = scmp.eq.s32.totalorder %s42, 0
      %p231 = por %p229, %p230
      %s233 = sadd.s32 %s232, 1
      %p236 = scmp.eq.s32.totalorder %s36, 1
      %p237 = scmp.ne.s32.totalorder %s232, %s234
      %p238 = scmp.eq.s32.totalorder %s36, 0
      %p239 = por %p237, %p238
      %p240 = scmp.ne.s32.totalorder %s232, %s234
      %p241 = scmp.eq.s32.totalorder %s41, 1
      %p242 = por %p240, %p241
      %p243 = scmp.ne.s32.totalorder %s234, %s235
      %p244 = scmp.eq.s32.totalorder %s41, 0
      %p245 = por %p243, %p244
      %p246 = scmp.ne.s32.totalorder %s234, %s235
      %p247 = scmp.eq.s32.totalorder %s42, 1
      %p248 = por %p246, %p247
      %p250 = scmp.ne.s32.totalorder %s235, %s249
      %p251 = scmp.eq.s32.totalorder %s42, 0
      %p252 = por %p250, %p251
      %s254 = sadd.s32 %s253, 1
      %p257 = scmp.eq.s32.totalorder %s36, 1
      %p258 = scmp.ne.s32.totalorder %s253, %s255
      %p259 = scmp.eq.s32.totalorder %s36, 0
      %p260 = por %p258, %p259
      %p261 = scmp.ne.s32.totalorder %s253, %s255
      %p262 = scmp.eq.s32.totalorder %s41, 1
      %p263 = por %p261, %p262
      %p264 = scmp.ne.s32.totalorder %s255, %s256
      %p265 = scmp.eq.s32.totalorder %s41, 0
      %p266 = por %p264, %p265
      %p267 = scmp.ne.s32.totalorder %s255, %s256
      %p268 = scmp.eq.s32.totalorder %s42, 1
      %p269 = por %p267, %p268
      %p271 = scmp.ne.s32.totalorder %s256, %s270
      %p272 = scmp.eq.s32.totalorder %s42, 0
      %p273 = por %p271, %p272
      %s275 = sadd.s32 %s274, 1
      %p278 = scmp.eq.s32.totalorder %s36, 1
      %p279 = scmp.ne.s32.totalorder %s274, %s276
      %p280 = scmp.eq.s32.totalorder %s36, 0
      %p281 = por %p279, %p280
      %p282 = scmp.ne.s32.totalorder %s274, %s276
      %p283 = scmp.eq.s32.totalorder %s41, 1
      %p284 = por %p282, %p283
      %p285 = scmp.ne.s32.totalorder %s276, %s277
      %p286 = scmp.eq.s32.totalorder %s41, 0
      %p287 = por %p285, %p286
      %p288 = scmp.ne.s32.totalorder %s276, %s277
      %p289 = scmp.eq.s32.totalorder %s42, 1
      %p290 = por %p288, %p289
      %p292 = scmp.ne.s32.totalorder %s277, %s291
      %p293 = scmp.eq.s32.totalorder %s42, 0
      %p294 = por %p292, %p293
      %s296 = sadd.s32 %s295, 1
      %p299 = scmp.eq.s32.totalorder %s36, 1
      %p300 = scmp.ne.s32.totalorder %s295, %s297
      %p301 = scmp.eq.s32.totalorder %s36, 0
      %p302 = por %p300, %p301
      %p303 = scmp.ne.s32.totalorder %s295, %s297
      %p304 = scmp.eq.s32.totalorder %s41, 1
      %p305 = por %p303, %p304
      %p306 = scmp.ne.s32.totalorder %s297, %s298
      %p307 = scmp.eq.s32.totalorder %s41, 0
      %p308 = por %p306, %p307
      %p309 = scmp.ne.s32.totalorder %s297, %s298
      %p310 = scmp.eq.s32.totalorder %s42, 1
      %p311 = por %p309, %p310
      %p313 = scmp.ne.s32.totalorder %s298, %s312
      %p314 = scmp.eq.s32.totalorder %s42, 0
      %p315 = por %p313, %p314
      %s317 = sadd.s32 %s316, 1
      %p320 = scmp.eq.s32.totalorder %s36, 1
      %p321 = scmp.ne.s32.totalorder %s316, %s318
      %p322 = scmp.eq.s32.totalorder %s36, 0
      %p323 = por %p321, %p322
      %p324 = scmp.ne.s32.totalorder %s316, %s318
      %p325 = scmp.eq.s32.totalorder %s41, 1
      %p326 = por %p324, %p325
      %p327 = scmp.ne.s32.totalorder %s318, %s319
      %p328 = scmp.eq.s32.totalorder %s41, 0
      %p329 = por %p327, %p328
      %p330 = scmp.ne.s32.totalorder %s318, %s319
      %p331 = scmp.eq.s32.totalorder %s42, 1
      %p332 = por %p330, %p331
      %p334 = scmp.ne.s32.totalorder %s319, %s333
      %p335 = scmp.eq.s32.totalorder %s42, 0
      %p336 = por %p334, %p335
      %s338 = sadd.s32 %s337, 1
      %p341 = scmp.eq.s32.totalorder %s36, 1
      %p342 = scmp.ne.s32.totalorder %s337, %s339
      %p343 = scmp.eq.s32.totalorder %s36, 0
      %p344 = por %p342, %p343
      %p345 = scmp.ne.s32.totalorder %s337, %s339
      %p346 = scmp.eq.s32.totalorder %s41, 1
      %p347 = por %p345, %p346
      %p348 = scmp.ne.s32.totalorder %s339, %s340
      %p349 = scmp.eq.s32.totalorder %s41, 0
      %p350 = por %p348, %p349
      %p351 = scmp.ne.s32.totalorder %s339, %s340
      %p352 = scmp.eq.s32.totalorder %s42, 1
      %p353 = por %p351, %p352
      %p355 = scmp.ne.s32.totalorder %s340, %s354
      %p356 = scmp.eq.s32.totalorder %s42, 0
      %p357 = por %p355, %p356
      %s358 = ssub.s32 %s36, %s43
      %p359 = scmp.eq.s32.totalorder %s358, 0
      %s361 = sadd.s32 %s360, 1
      %s362 = scalar_select %p359, %s360, %s361
      %p365 = pneg %p359
      %p366 = scmp.eq.s32.totalorder %s36, 1
      %p367 = por %p365, %p366
      %p368 = scmp.ne.s32.totalorder %s360, %s363
      %p369 = scmp.eq.s32.totalorder %s36, 0
      %p370 = por %p368, %p369
      %p371 = scmp.ne.s32.totalorder %s360, %s363
      %p372 = scmp.eq.s32.totalorder %s41, 1
      %p373 = por %p371, %p372
      %p374 = scmp.ne.s32.totalorder %s363, %s364
      %p375 = scmp.eq.s32.totalorder %s41, 0
      %p376 = por %p374, %p375
      %p377 = scmp.ne.s32.totalorder %s363, %s364
      %p378 = scmp.eq.s32.totalorder %s42, 1
      %p379 = por %p377, %p378
      %p381 = scmp.ne.s32.totalorder %s364, %s380
      %p382 = scmp.eq.s32.totalorder %s42, 0
      %p383 = por %p381, %p382
      %s384 = ssub.s32 %s36, %s43
      %p385 = scmp.eq.s32.totalorder %s384, 0
      %s387 = sadd.s32 %s386, 1
      %s388 = scalar_select %p385, %s386, %s387
      %p391 = pneg %p385
      %p392 = scmp.eq.s32.totalorder %s36, 1
      %p393 = por %p391, %p392
      %p394 = scmp.ne.s32.totalorder %s386, %s389
      %p395 = scmp.eq.s32.totalorder %s36, 0
      %p396 = por %p394, %p395
      %p397 = scmp.ne.s32.totalorder %s386, %s389
      %p398 = scmp.eq.s32.totalorder %s41, 1
      %p399 = por %p397, %p398
      %p400 = scmp.ne.s32.totalorder %s389, %s390
      %p401 = scmp.eq.s32.totalorder %s41, 0
      %p402 = por %p400, %p401
      %p403 = scmp.ne.s32.totalorder %s389, %s390
      %p404 = scmp.eq.s32.totalorder %s42, 1
      %p405 = por %p403, %p404
      %p407 = scmp.ne.s32.totalorder %s390, %s406
      %p408 = scmp.eq.s32.totalorder %s42, 0
      %p409 = por %p407, %p408
      %p410 = scmp.le.s32.totalorder 1, %s36
      %p411 = scmp.lt.s32.totalorder %s36, 3
      %p412 = pnand %p410, %p411
      %p413 = pneg %p412
      // Predicated region
      $region9: #{tpu_custom_call.1} parent=5 // pred_check
        _
      $region10: #{tpu_custom_call.1} parent=5 // pred_check_branch
        %415 = sbr.rel (%p412) target = $region12
      $region11: #{tpu_custom_call.1} parent=5 // pred_region
        %s416 = ssub.s32 %s36, 1
        // Predicated region
        $region13: #{tpu_custom_call.1} parent=11 // pred_check
          %p417 = pneg %p161
        $region14: #{tpu_custom_call.1} parent=11 // pred_check_branch
          %419 = sbr.rel (%p417) target = $region16
        $region15: #{tpu_custom_call.1} parent=11 // pred_region
          %s421 = ssub.s32 3072, 3072
          %422 = vsyncadd [#allocation6], %s421
          %s423 = sshll.u32 [#allocation7], 4
          %s424 = int_to_ptr.vmem [resolvable:$true] %s423
          %429 = dma.hbm_to_vmem [thread:$0]  %s4, 3072, %s424, [#allocation6], 192, 192, 12
        $region16: #{tpu_custom_call.1} parent=11 // pred_fallthru
          _
        // Predicated region
        $region17: #{tpu_custom_call.1} parent=11 // pred_check
          %p430 = pneg %p182
        $region18: #{tpu_custom_call.1} parent=11 // pred_check_branch
          %432 = sbr.rel (%p430) target = $region20
        $region19: #{tpu_custom_call.1} parent=11 // pred_region
          _
        $region20: #{tpu_custom_call.1} parent=11 // pred_fallthru
          _
        // Predicated region
        $region21: #{tpu_custom_call.1} parent=11 // pred_check
          %p433 = pneg %p203
        $region22: #{tpu_custom_call.1} parent=11 // pred_check_branch
          %435 = sbr.rel (%p433) target = $region24
        $region23: #{tpu_custom_call.1} parent=11 // pred_region
          %s437 = ssub.s32 1024, 1024
          %438 = vsyncadd [#allocation9], %s437
          %s439 = sshll.u32 [#allocation8], 4
          %s440 = int_to_ptr.vmem [resolvable:$true] %s439
          %445 = dma.hbm_to_vmem [thread:$0]  %s6, 1024, %s440, [#allocation9], 64, 64, 4
        $region24: #{tpu_custom_call.1} parent=11 // pred_fallthru
          _
        // Predicated region
        $region25: #{tpu_custom_call.1} parent=11 // pred_check
          %p446 = pneg %p224
        $region26: #{tpu_custom_call.1} parent=11 // pred_check_branch
          %448 = sbr.rel (%p446) target = $region28
        $region27: #{tpu_custom_call.1} parent=11 // pred_region
          _
        $region28: #{tpu_custom_call.1} parent=11 // pred_fallthru
          _
        // Predicated region
        $region29: #{tpu_custom_call.1} parent=11 // pred_check
          %p449 = pneg %p245
        $region30: #{tpu_custom_call.1} parent=11 // pred_check_branch
          %451 = sbr.rel (%p449) target = $region32
        $region31: #{tpu_custom_call.1} parent=11 // pred_region
          %s453 = ssub.s32 4096, 4096
          %454 = vsyncadd [#allocation9], %s453
          %s455 = sshll.u32 [#allocation10], 4
          %s456 = int_to_ptr.vmem [resolvable:$true] %s455
          %461 = dma.hbm_to_vmem [thread:$0]  %s8, 4096, %s456, [#allocation9], 256, 256, 16
        $region32: #{tpu_custom_call.1} parent=11 // pred_fallthru
          _
        // Predicated region
        $region33: #{tpu_custom_call.1} parent=11 // pred_check
          %p462 = pneg %p266
        $region34: #{tpu_custom_call.1} parent=11 // pred_check_branch
          %464 = sbr.rel (%p462) target = $region36
        $region35: #{tpu_custom_call.1} parent=11 // pred_region
          _
        $region36: #{tpu_custom_call.1} parent=11 // pred_fallthru
          _
        // Predicated region
        $region37: #{tpu_custom_call.1} parent=11 // pred_check
          %p465 = pneg %p287
        $region38: #{tpu_custom_call.1} parent=11 // pred_check_branch
          %467 = sbr.rel (%p465) target = $region40
        $region39: #{tpu_custom_call.1} parent=11 // pred_region
          %s469 = ssub.s32 18432, 18432
          %470 = vsyncadd [#allocation12], %s469
          %s471 = sshll.u32 [#allocation11], 4
          %s472 = int_to_ptr.vmem [resolvable:$true] %s471
          %477 = dma.hbm_to_vmem [thread:$0]  %s10, 18432, %s472, [#allocation12], 128, 128, 8
        $region40: #{tpu_custom_call.1} parent=11 // pred_fallthru
          _
        // Predicated region
        $region41: #{tpu_custom_call.1} parent=11 // pred_check
          %p478 = pneg %p308
        $region42: #{tpu_custom_call.1} parent=11 // pred_check_branch
          %480 = sbr.rel (%p478) target = $region44
        $region43: #{tpu_custom_call.1} parent=11 // pred_region
          _
        $region44: #{tpu_custom_call.1} parent=11 // pred_fallthru
          _
        // Predicated region
        $region45: #{tpu_custom_call.1} parent=11 // pred_check
          %p481 = pneg %p329
        $region46: #{tpu_custom_call.1} parent=11 // pred_check_branch
          %483 = sbr.rel (%p481) target = $region48
        $region47: #{tpu_custom_call.1} parent=11 // pred_region
          %s485 = ssub.s32 2048, 2048
          %486 = vsyncadd [#allocation12], %s485
          %s487 = sshll.u32 [#allocation13], 4
          %s488 = int_to_ptr.vmem [resolvable:$true] %s487
          %493 = dma.hbm_to_vmem [thread:$0]  %s12, 2048, %s488, [#allocation12], 64, 64, 4
        $region48: #{tpu_custom_call.1} parent=11 // pred_fallthru
          _
        // Predicated region
        $region49: #{tpu_custom_call.1} parent=11 // pred_check
          %p494 = pneg %p350
        $region50: #{tpu_custom_call.1} parent=11 // pred_check_branch
          %496 = sbr.rel (%p494) target = $region52
        $region51: #{tpu_custom_call.1} parent=11 // pred_region
          _
        $region52: #{tpu_custom_call.1} parent=11 // pred_fallthru
          _
      $region12: #{tpu_custom_call.1} parent=5 // pred_fallthru
        _
      %p497 = scmp.lt.s32.totalorder %s36, 2
      // Predicated region
      $region53: #{tpu_custom_call.1} parent=5 // pred_check
        %p498 = pneg %p497
      $region54: #{tpu_custom_call.1} parent=5 // pred_check_branch
        %500 = sbr.rel (%p498) target = $region56
      $region55: #{tpu_custom_call.1} parent=5 // pred_region
        // Predicated region
        $region57: #{tpu_custom_call.1} parent=55 // pred_check
          %p501 = pneg %p56
        $region58: #{tpu_custom_call.1} parent=55 // pred_check_branch
          %503 = sbr.rel (%p501) target = $region60
        $region59: #{tpu_custom_call.1} parent=55 // pred_region
          %p504 = scmp.lt.s32.totalorder %s36, 1
          %s505 = scalar_select %p504, %s36, 1
          %s506 = smul.addr %s505, 2
          %s507 = smul.addr %s506, 8
          %s508 = scalar_lea.vmem %s0, %s507
        $region60: #{tpu_custom_call.1} parent=55 // pred_fallthru
          _
        // Predicated region
        $region61: #{tpu_custom_call.1} parent=55 // pred_check
          %p509 = pneg %p82
        $region62: #{tpu_custom_call.1} parent=55 // pred_check_branch
          %511 = sbr.rel (%p509) target = $region64
        $region63: #{tpu_custom_call.1} parent=55 // pred_region
          %s512 = sand.u32 %s72, 1
          %s513 = scalar_lea.sflag [#allocation3], %s512
          %s514 = sand.u32 %s72, 1
          %s515 = scalar_lea.vmem [#allocation2], %s514
          %s517 = ssub.s32 16, 16
          %518 = vsyncadd %s513, %s517
          %s519 = smul.addr %s36, 16
          %s520 = scalar_lea.hbm %s1, %s519
          %s522 = sshll.u32 %s515, 4
          %s523 = int_to_ptr.vmem [resolvable:$true] %s522
          %525 = dma.hbm_to_vmem [thread:$0]  %s520, 16, %s523, %s513
        $region64: #{tpu_custom_call.1} parent=55 // pred_fallthru
          _
        // Predicated region
        $region65: #{tpu_custom_call.1} parent=55 // pred_check
          %p526 = pneg %p108
        $region66: #{tpu_custom_call.1} parent=55 // pred_check_branch
          %528 = sbr.rel (%p526) target = $region68
        $region67: #{tpu_custom_call.1} parent=55 // pred_region
          %p529 = scmp.lt.s32.totalorder %s36, 1
          %s530 = scalar_select %p529, %s36, 1
          %s531 = smul.addr %s530, 2
          %s532 = smul.addr %s531, 8
          %s533 = scalar_lea.vmem %s2, %s532
        $region68: #{tpu_custom_call.1} parent=55 // pred_fallthru
          _
        // Predicated region
        $region69: #{tpu_custom_call.1} parent=55 // pred_check
          %p534 = pneg %p134
        $region70: #{tpu_custom_call.1} parent=55 // pred_check_branch
          %536 = sbr.rel (%p534) target = $region72
        $region71: #{tpu_custom_call.1} parent=55 // pred_region
          %s537 = sand.u32 %s36, 1
          %s538 = scalar_lea.sflag [#allocation6], %s537
          %s539 = sand.u32 %s124, 1
          %s540 = smul.addr %s539, 16
          %s541 = scalar_lea.vmem [#allocation5], %s540
          %s543 = ssub.s32 256, 256
          %544 = vsyncadd %s538, %s543
          %s545 = smul.addr %s36, 2
          %s546 = smul.addr %s545, 128
          %s547 = scalar_lea.hbm %s3, %s546
          %s548 = sshll.u32 %s541, 4
          %s549 = int_to_ptr.vmem [resolvable:$true] %s548
          %554 = dma.hbm_to_vmem [thread:$0]  %s547, 256, %s549, %s538, 128, 128, 8
        $region72: #{tpu_custom_call.1} parent=55 // pred_fallthru
          _
      $region56: #{tpu_custom_call.1} parent=5 // pred_fallthru
        _
      %p555 = scmp.le.s32.totalorder 1, %s36
      %p556 = scmp.lt.s32.totalorder %s36, 3
      %p557 = pnand %p555, %p556
      %p558 = pneg %p557
      // Predicated region
      $region73: #{tpu_custom_call.1} parent=5 // pred_check
        _
      $region74: #{tpu_custom_call.1} parent=5 // pred_check_branch
        %560 = sbr.rel (%p557) target = $region76
      $region75: #{tpu_custom_call.1} parent=5 // pred_region
        %s561 = ssub.s32 %s36, 1
        %s562 = sand.u32 %s75, 1
        %s563 = scalar_lea.sflag [#allocation3], %s562
        %s564 = sand.u32 %s75, 1
        %s565 = scalar_lea.vmem [#allocation2], %s564
        // Predicated region
        $region77: #{tpu_custom_call.1} parent=75 // pred_check
          %p566 = pneg %p88
        $region78: #{tpu_custom_call.1} parent=75 // pred_check_branch
          %568 = sbr.rel (%p566) target = $region80
        $region79: #{tpu_custom_call.1} parent=75 // pred_region
          %569 = dma.done %s563, 16
        $region80: #{tpu_custom_call.1} parent=75 // pred_fallthru
          _
        %s570 = sand.u32 %s41, 1
        %s571 = scalar_lea.sflag [#allocation6], %s570
        %s572 = sand.u32 %s127, 1
        %s573 = smul.addr %s572, 16
        %s574 = scalar_lea.vmem [#allocation5], %s573
        // Predicated region
        $region81: #{tpu_custom_call.1} parent=75 // pred_check
          %p575 = pneg %p140
        $region82: #{tpu_custom_call.1} parent=75 // pred_check_branch
          %577 = sbr.rel (%p575) target = $region84
        $region83: #{tpu_custom_call.1} parent=75 // pred_region
          %578 = dma.done %s571, 256
        $region84: #{tpu_custom_call.1} parent=75 // pred_fallthru
          _
        // Predicated region
        $region85: #{tpu_custom_call.1} parent=75 // pred_check
          %p579 = pneg %p161
        $region86: #{tpu_custom_call.1} parent=75 // pred_check_branch
          %581 = sbr.rel (%p579) target = $region88
        $region87: #{tpu_custom_call.1} parent=75 // pred_region
          %582 = dma.done [#allocation6], 3072
        $region88: #{tpu_custom_call.1} parent=75 // pred_fallthru
          _
        // Predicated region
        $region89: #{tpu_custom_call.1} parent=75 // pred_check
          %p583 = pneg %p203
        $region90: #{tpu_custom_call.1} parent=75 // pred_check_branch
          %585 = sbr.rel (%p583) target = $region92
        $region91: #{tpu_custom_call.1} parent=75 // pred_region
          %586 = dma.done [#allocation9], 1024
        $region92: #{tpu_custom_call.1} parent=75 // pred_fallthru
          _
        // Predicated region
        $region93: #{tpu_custom_call.1} parent=75 // pred_check
          %p587 = pneg %p245
        $region94: #{tpu_custom_call.1} parent=75 // pred_check_branch
          %589 = sbr.rel (%p587) target = $region96
        $region95: #{tpu_custom_call.1} parent=75 // pred_region
          %590 = dma.done [#allocation9], 4096
        $region96: #{tpu_custom_call.1} parent=75 // pred_fallthru
          _
        // Predicated region
        $region97: #{tpu_custom_call.1} parent=75 // pred_check
          %p591 = pneg %p287
        $region98: #{tpu_custom_call.1} parent=75 // pred_check_branch
          %593 = sbr.rel (%p591) target = $region100
        $region99: #{tpu_custom_call.1} parent=75 // pred_region
          %594 = dma.done [#allocation12], 18432
        $region100: #{tpu_custom_call.1} parent=75 // pred_fallthru
          _
        // Predicated region
        $region101: #{tpu_custom_call.1} parent=75 // pred_check
          %p595 = pneg %p329
        $region102: #{tpu_custom_call.1} parent=75 // pred_check_branch
          %597 = sbr.rel (%p595) target = $region104
        $region103: #{tpu_custom_call.1} parent=75 // pred_region
          %598 = dma.done [#allocation12], 2048
        $region104: #{tpu_custom_call.1} parent=75 // pred_fallthru
          _
        %p599 = scmp.lt.s32.totalorder %s41, 1
        %s600 = scalar_select %p599, %s41, 1
        %s601 = smul.addr %s600, 2
        %s602 = smul.addr %s601, 8
        %s603 = scalar_lea.vmem %s0, %s602
        %p604 = pneg %p62
        %p605 = pneg %p59
        %s606 = sand.u32 %s75, 1
        %s607 = scalar_lea.sflag [#allocation3], %s606
        %s608 = sand.u32 %s75, 1
        %s609 = scalar_lea.vmem [#allocation2], %s608
        %p610 = pneg %p88
        %p611 = pneg %p85
        %p612 = scmp.lt.s32.totalorder %s41, 1
        %s613 = scalar_select %p612, %s41, 1
        %s614 = smul.addr %s613, 2
        %s615 = smul.addr %s614, 8
        %s616 = scalar_lea.vmem %s2, %s615
        %p617 = pneg %p114
        %p618 = pneg %p111
        %s619 = sand.u32 %s41, 1
        %s620 = scalar_lea.sflag [#allocation6], %s619
        %s621 = sand.u32 %s127, 1
        %s622 = smul.addr %s621, 16
        %s623 = scalar_lea.vmem [#allocation5], %s622
        %p624 = pneg %p140
        %p625 = pneg %p137
        %p626 = pneg %p161
        %p627 = pneg %p158
        %p628 = pneg %p182
        %p629 = pneg %p179
        %p630 = pneg %p203
        %p631 = pneg %p200
        %p632 = pneg %p224
        %p633 = pneg %p221
        %p634 = pneg %p245
        %p635 = pneg %p242
        %p636 = pneg %p266
        %p637 = pneg %p263
        %p638 = pneg %p287
        %p639 = pneg %p284
        %p640 = pneg %p308
        %p641 = pneg %p305
        %p642 = pneg %p329
        %p643 = pneg %p326
        %p644 = pneg %p350
        %p645 = pneg %p347
        %p646 = pneg %p376
        %p647 = pneg %p373
        %s648 = sand.u32 %s363, 1
        %s649 = scalar_lea.sflag [#allocation4], %s648
        %s650 = sand.u32 %s363, 1
        %s651 = smul.addr %s650, 16
        %s652 = scalar_lea.vmem [#allocation14], %s651
        %p653 = pneg %p402
        %p654 = pneg %p399
        %s655 = sand.u32 %s389, 1
        %s656 = scalar_lea.sflag [#allocation16], %s655
        %s657 = sand.u32 %s389, 1
        %s658 = smul.addr %s657, 32
        %s659 = scalar_lea.vmem [#allocation15], %s658
        %p660 = scmp.lt.s32.totalorder %s41, 1
        %s661 = scalar_select %p660, %s41, 1
        %s662 = smul.addr %s661, 2
        %s663 = smul.addr %s662, 8
        %s664 = scalar_lea.vmem %s0, %s663
        %p665 = scmp.lt.s32.totalorder %s41, 1
        %s666 = scalar_select %p665, %s41, 1
        %s667 = smul.addr %s666, 2
        %s668 = smul.addr %s667, 8
        %s669 = scalar_lea.vmem %s2, %s668
        %v670 = vld [vmem:[%s664] sm:$0xff]
        %v671 = vld [vmem:[%s664 + $0x8] sm:$0xff]
        %v672 = vld [vmem:[%s565] sm:$0x1]
        %v673 = vld [vmem:[%s669] sm:$0xff]
        %v674 = vld [vmem:[%s669 + $0x8] sm:$0xff]
        %v675 = vsub.f32 1.0, %v673
        %v676 = vsub.f32 1.0, %v674
        %v677 = vld [vmem:[%s574] sm:$0xff]
        %v678 = vld [vmem:[%s574 + $0x8] sm:$0xff]
        %v679 = vld [vmem:[#allocation7] sm:$0xff]
        %v680 = vld [vmem:[#allocation7 + $0x8] sm:$0xf]
        %v681 = vld [vmem:[#allocation7 + $0xc] sm:$0xff]
        %v682 = vld [vmem:[#allocation7 + $0x14] sm:$0xf]
        %v683 = vld [vmem:[#allocation7 + $0x18] sm:$0xff]
        %v684 = vld [vmem:[#allocation7 + $0x20] sm:$0xf]
        %v685 = vld [vmem:[#allocation7 + $0x24] sm:$0xff]
        %v686 = vld [vmem:[#allocation7 + $0x2c] sm:$0xf]
        %v687 = vld [vmem:[#allocation7 + $0x30] sm:$0xff]
        %v688 = vld [vmem:[#allocation7 + $0x38] sm:$0xf]
        %v689 = vld [vmem:[#allocation7 + $0x3c] sm:$0xff]
        %v690 = vld [vmem:[#allocation7 + $0x44] sm:$0xf]
        %v691 = vld [vmem:[#allocation7 + $0x48] sm:$0xff]
        %v692 = vld [vmem:[#allocation7 + $0x50] sm:$0xf]
        %v693 = vld [vmem:[#allocation7 + $0x54] sm:$0xff]
        %v694 = vld [vmem:[#allocation7 + $0x5c] sm:$0xf]
        %v695 = vld [vmem:[#allocation7 + $0x60] sm:$0xff]
        %v696 = vld [vmem:[#allocation7 + $0x68] sm:$0xf]
        %v697 = vld [vmem:[#allocation7 + $0x6c] sm:$0xff]
        %v698 = vld [vmem:[#allocation7 + $0x74] sm:$0xf]
        %v699 = vld [vmem:[#allocation7 + $0x78] sm:$0xff]
        %v700 = vld [vmem:[#allocation7 + $0x80] sm:$0xf]
        %v701 = vld [vmem:[#allocation7 + $0x84] sm:$0xff]
        %v702 = vld [vmem:[#allocation7 + $0x8c] sm:$0xf]
        %v703 = vld [vmem:[#allocation7 + $0x90] sm:$0xff]
        %v704 = vld [vmem:[#allocation7 + $0x98] sm:$0xf]
        %v705 = vld [vmem:[#allocation7 + $0x9c] sm:$0xff]
        %v706 = vld [vmem:[#allocation7 + $0xa4] sm:$0xf]
        %v707 = vld [vmem:[#allocation7 + $0xa8] sm:$0xff]
        %v708 = vld [vmem:[#allocation7 + $0xb0] sm:$0xf]
        %v709 = vld [vmem:[#allocation7 + $0xb4] sm:$0xff]
        %v710 = vld [vmem:[#allocation7 + $0xbc] sm:$0xf]
        %v711 = vunpack.c.l.bf16 %v679
        %v712 = vunpack.c.h.bf16 %v679
        %v713 = vunpack.c.l.bf16 %v680
        %v714 = vunpack.c.l.bf16 %v681
        %v715 = vunpack.c.h.bf16 %v681
        %v716 = vunpack.c.l.bf16 %v682
        %v717 = vunpack.c.l.bf16 %v683
        %v718 = vunpack.c.h.bf16 %v683
        %v719 = vunpack.c.l.bf16 %v684
        %v720 = vunpack.c.l.bf16 %v685
        %v721 = vunpack.c.h.bf16 %v685
        %v722 = vunpack.c.l.bf16 %v686
        %v723 = vunpack.c.l.bf16 %v687
        %v724 = vunpack.c.h.bf16 %v687
        %v725 = vunpack.c.l.bf16 %v688
        %v726 = vunpack.c.l.bf16 %v689
        %v727 = vunpack.c.h.bf16 %v689
        %v728 = vunpack.c.l.bf16 %v690
        %v729 = vunpack.c.l.bf16 %v691
        %v730 = vunpack.c.h.bf16 %v691
        %v731 = vunpack.c.l.bf16 %v692
        %v732 = vunpack.c.l.bf16 %v693
        %v733 = vunpack.c.h.bf16 %v693
        %v734 = vunpack.c.l.bf16 %v694
        %v735 = vunpack.c.l.bf16 %v695
        %v736 = vunpack.c.h.bf16 %v695
        %v737 = vunpack.c.l.bf16 %v696
        %v738 = vunpack.c.l.bf16 %v697
        %v739 = vunpack.c.h.bf16 %v697
        %v740 = vunpack.c.l.bf16 %v698
        %v741 = vunpack.c.l.bf16 %v699
        %v742 = vunpack.c.h.bf16 %v699
        %v743 = vunpack.c.l.bf16 %v700
        %v744 = vunpack.c.l.bf16 %v701
        %v745 = vunpack.c.h.bf16 %v701
        %v746 = vunpack.c.l.bf16 %v702
        %v747 = vunpack.c.l.bf16 %v703
        %v748 = vunpack.c.h.bf16 %v703
        %v749 = vunpack.c.l.bf16 %v704
        %v750 = vunpack.c.l.bf16 %v705
        %v751 = vunpack.c.h.bf16 %v705
        %v752 = vunpack.c.l.bf16 %v706
        %v753 = vunpack.c.l.bf16 %v707
        %v754 = vunpack.c.h.bf16 %v707
        %v755 = vunpack.c.l.bf16 %v708
        %v756 = vunpack.c.l.bf16 %v709
        %v757 = vunpack.c.h.bf16 %v709
        %v758 = vunpack.c.l.bf16 %v710
        %v759 = vld [vmem:[#allocation8] sm:$0xf]
        %v760 = vld [vmem:[#allocation8 + $0x4] sm:$0xf]
        %v761 = vld [vmem:[#allocation8 + $0x8] sm:$0xf]
        %v762 = vld [vmem:[#allocation8 + $0xc] sm:$0xf]
        %v763 = vld [vmem:[#allocation8 + $0x10] sm:$0xf]
        %v764 = vld [vmem:[#allocation8 + $0x14] sm:$0xf]
        %v765 = vld [vmem:[#allocation8 + $0x18] sm:$0xf]
        %v766 = vld [vmem:[#allocation8 + $0x1c] sm:$0xf]
        %v767 = vld [vmem:[#allocation8 + $0x20] sm:$0xf]
        %v768 = vld [vmem:[#allocation8 + $0x24] sm:$0xf]
        %v769 = vld [vmem:[#allocation8 + $0x28] sm:$0xf]
        %v770 = vld [vmem:[#allocation8 + $0x2c] sm:$0xf]
        %v771 = vld [vmem:[#allocation8 + $0x30] sm:$0xf]
        %v772 = vld [vmem:[#allocation8 + $0x34] sm:$0xf]
        %v773 = vld [vmem:[#allocation8 + $0x38] sm:$0xf]
        %v774 = vld [vmem:[#allocation8 + $0x3c] sm:$0xf]
        %v775 = vunpack.c.l.bf16 %v759
        %v776 = vunpack.c.l.bf16 %v760
        %v777 = vunpack.c.l.bf16 %v761
        %v778 = vunpack.c.l.bf16 %v762
        %v779 = vunpack.c.l.bf16 %v763
        %v780 = vunpack.c.l.bf16 %v764
        %v781 = vunpack.c.l.bf16 %v765
        %v782 = vunpack.c.l.bf16 %v766
        %v783 = vunpack.c.l.bf16 %v767
        %v784 = vunpack.c.l.bf16 %v768
        %v785 = vunpack.c.l.bf16 %v769
        %v786 = vunpack.c.l.bf16 %v770
        %v787 = vunpack.c.l.bf16 %v771
        %v788 = vunpack.c.l.bf16 %v772
        %v789 = vunpack.c.l.bf16 %v773
        %v790 = vunpack.c.l.bf16 %v774
        %v791 = vld [vmem:[#allocation10] sm:$0xff]
        %v792 = vld [vmem:[#allocation10 + $0x8] sm:$0xff]
        %v793 = vld [vmem:[#allocation10 + $0x10] sm:$0xff]
        %v794 = vld [vmem:[#allocation10 + $0x18] sm:$0xff]
        %v795 = vld [vmem:[#allocation10 + $0x20] sm:$0xff]
        %v796 = vld [vmem:[#allocation10 + $0x28] sm:$0xff]
        %v797 = vld [vmem:[#allocation10 + $0x30] sm:$0xff]
        %v798 = vld [vmem:[#allocation10 + $0x38] sm:$0xff]
        %v799 = vld [vmem:[#allocation10 + $0x40] sm:$0xff]
        %v800 = vld [vmem:[#allocation10 + $0x48] sm:$0xff]
        %v801 = vld [vmem:[#allocation10 + $0x50] sm:$0xff]
        %v802 = vld [vmem:[#allocation10 + $0x58] sm:$0xff]
        %v803 = vld [vmem:[#allocation10 + $0x60] sm:$0xff]
        %v804 = vld [vmem:[#allocation10 + $0x68] sm:$0xff]
        %v805 = vld [vmem:[#allocation10 + $0x70] sm:$0xff]
        %v806 = vld [vmem:[#allocation10 + $0x78] sm:$0xff]
        %v807 = vld [vmem:[#allocation10 + $0x80] sm:$0xff]
        %v808 = vld [vmem:[#allocation10 + $0x88] sm:$0xff]
        %v809 = vld [vmem:[#allocation10 + $0x90] sm:$0xff]
        %v810 = vld [vmem:[#allocation10 + $0x98] sm:$0xff]
        %v811 = vld [vmem:[#allocation10 + $0xa0] sm:$0xff]
        %v812 = vld [vmem:[#allocation10 + $0xa8] sm:$0xff]
        %v813 = vld [vmem:[#allocation10 + $0xb0] sm:$0xff]
        %v814 = vld [vmem:[#allocation10 + $0xb8] sm:$0xff]
        %v815 = vld [vmem:[#allocation10 + $0xc0] sm:$0xff]
        %v816 = vld [vmem:[#allocation10 + $0xc8] sm:$0xff]
        %v817 = vld [vmem:[#allocation10 + $0xd0] sm:$0xff]
        %v818 = vld [vmem:[#allocation10 + $0xd8] sm:$0xff]
        %v819 = vld [vmem:[#allocation10 + $0xe0] sm:$0xff]
        %v820 = vld [vmem:[#allocation10 + $0xe8] sm:$0xff]
        %v821 = vld [vmem:[#allocation10 + $0xf0] sm:$0xff]
        %v822 = vld [vmem:[#allocation10 + $0xf8] sm:$0xff]
        %v823 = vunpack.c.l.bf16 %v791
        %v824 = vunpack.c.h.bf16 %v791
        %v825 = vunpack.c.l.bf16 %v792
        %v826 = vunpack.c.h.bf16 %v792
        %v827 = vunpack.c.l.bf16 %v793
        %v828 = vunpack.c.h.bf16 %v793
        %v829 = vunpack.c.l.bf16 %v794
        %v830 = vunpack.c.h.bf16 %v794
        %v831 = vunpack.c.l.bf16 %v795
        %v832 = vunpack.c.h.bf16 %v795
        %v833 = vunpack.c.l.bf16 %v796
        %v834 = vunpack.c.h.bf16 %v796
        %v835 = vunpack.c.l.bf16 %v797
        %v836 = vunpack.c.h.bf16 %v797
        %v837 = vunpack.c.l.bf16 %v798
        %v838 = vunpack.c.h.bf16 %v798
        %v839 = vunpack.c.l.bf16 %v799
        %v840 = vunpack.c.h.bf16 %v799
        %v841 = vunpack.c.l.bf16 %v800
        %v842 = vunpack.c.h.bf16 %v800
        %v843 = vunpack.c.l.bf16 %v801
        %v844 = vunpack.c.h.bf16 %v801
        %v845 = vunpack.c.l.bf16 %v802
        %v846 = vunpack.c.h.bf16 %v802
        %v847 = vunpack.c.l.bf16 %v803
        %v848 = vunpack.c.h.bf16 %v803
        %v849 = vunpack.c.l.bf16 %v804
        %v850 = vunpack.c.h.bf16 %v804
        %v851 = vunpack.c.l.bf16 %v805
        %v852 = vunpack.c.h.bf16 %v805
        %v853 = vunpack.c.l.bf16 %v806
        %v854 = vunpack.c.h.bf16 %v806
        %v855 = vunpack.c.l.bf16 %v807
        %v856 = vunpack.c.h.bf16 %v807
        %v857 = vunpack.c.l.bf16 %v808
        %v858 = vunpack.c.h.bf16 %v808
        %v859 = vunpack.c.l.bf16 %v809
        %v860 = vunpack.c.h.bf16 %v809
        %v861 = vunpack.c.l.bf16 %v810
        %v862 = vunpack.c.h.bf16 %v810
        %v863 = vunpack.c.l.bf16 %v811
        %v864 = vunpack.c.h.bf16 %v811
        %v865 = vunpack.c.l.bf16 %v812
        %v866 = vunpack.c.h.bf16 %v812
        %v867 = vunpack.c.l.bf16 %v813
        %v868 = vunpack.c.h.bf16 %v813
        %v869 = vunpack.c.l.bf16 %v814
        %v870 = vunpack.c.h.bf16 %v814
        %v871 = vunpack.c.l.bf16 %v815
        %v872 = vunpack.c.h.bf16 %v815
        %v873 = vunpack.c.l.bf16 %v816
        %v874 = vunpack.c.h.bf16 %v816
        %v875 = vunpack.c.l.bf16 %v817
        %v876 = vunpack.c.h.bf16 %v817
        %v877 = vunpack.c.l.bf16 %v818
        %v878 = vunpack.c.h.bf16 %v818
        %v879 = vunpack.c.l.bf16 %v819
        %v880 = vunpack.c.h.bf16 %v819
        %v881 = vunpack.c.l.bf16 %v820
        %v882 = vunpack.c.h.bf16 %v820
        %v883 = vunpack.c.l.bf16 %v821
        %v884 = vunpack.c.h.bf16 %v821
        %v885 = vunpack.c.l.bf16 %v822
        %v886 = vunpack.c.h.bf16 %v822
        %v887 = vld [vmem:[#allocation11] sm:$0xff]
        %v888 = vld [vmem:[#allocation11 + $0x8] sm:$0xff]
        %v889 = vld [vmem:[#allocation11 + $0x10] sm:$0xff]
        %v890 = vld [vmem:[#allocation11 + $0x18] sm:$0xff]
        %v891 = vld [vmem:[#allocation11 + $0x20] sm:$0xff]
        %v892 = vld [vmem:[#allocation11 + $0x28] sm:$0xff]
        %v893 = vld [vmem:[#allocation11 + $0x30] sm:$0xff]
        %v894 = vld [vmem:[#allocation11 + $0x38] sm:$0xff]
        %v895 = vld [vmem:[#allocation11 + $0x40] sm:$0xff]
        %v896 = vld [vmem:[#allocation11 + $0x48] sm:$0xff]
        %v897 = vld [vmem:[#allocation11 + $0x50] sm:$0xff]
        %v898 = vld [vmem:[#allocation11 + $0x58] sm:$0xff]
        %v899 = vld [vmem:[#allocation11 + $0x60] sm:$0xff]
        %v900 = vld [vmem:[#allocation11 + $0x68] sm:$0xff]
        %v901 = vld [vmem:[#allocation11 + $0x70] sm:$0xff]
        %v902 = vld [vmem:[#allocation11 + $0x78] sm:$0xff]
        %v903 = vld [vmem:[#allocation11 + $0x80] sm:$0xff]
        %v904 = vld [vmem:[#allocation11 + $0x88] sm:$0xff]
        %v905 = vld [vmem:[#allocation11 + $0x90] sm:$0xff]
        %v906 = vld [vmem:[#allocation11 + $0x98] sm:$0xff]
        %v907 = vld [vmem:[#allocation11 + $0xa0] sm:$0xff]
        %v908 = vld [vmem:[#allocation11 + $0xa8] sm:$0xff]
        %v909 = vld [vmem:[#allocation11 + $0xb0] sm:$0xff]
        %v910 = vld [vmem:[#allocation11 + $0xb8] sm:$0xff]
        %v911 = vld [vmem:[#allocation11 + $0xc0] sm:$0xff]
        %v912 = vld [vmem:[#allocation11 + $0xc8] sm:$0xff]
        %v913 = vld [vmem:[#allocation11 + $0xd0] sm:$0xff]
        %v914 = vld [vmem:[#allocation11 + $0xd8] sm:$0xff]
        %v915 = vld [vmem:[#allocation11 + $0xe0] sm:$0xff]
        %v916 = vld [vmem:[#allocation11 + $0xe8] sm:$0xff]
        %v917 = vld [vmem:[#allocation11 + $0xf0] sm:$0xff]
        %v918 = vld [vmem:[#allocation11 + $0xf8] sm:$0xff]
        %v919 = vld [vmem:[#allocation11 + $0x100] sm:$0xff]
        %v920 = vld [vmem:[#allocation11 + $0x108] sm:$0xff]
        %v921 = vld [vmem:[#allocation11 + $0x110] sm:$0xff]
        %v922 = vld [vmem:[#allocation11 + $0x118] sm:$0xff]
        %v923 = vld [vmem:[#allocation11 + $0x120] sm:$0xff]
        %v924 = vld [vmem:[#allocation11 + $0x128] sm:$0xff]
        %v925 = vld [vmem:[#allocation11 + $0x130] sm:$0xff]
        %v926 = vld [vmem:[#allocation11 + $0x138] sm:$0xff]
        %v927 = vld [vmem:[#allocation11 + $0x140] sm:$0xff]
        %v928 = vld [vmem:[#allocation11 + $0x148] sm:$0xff]
        %v929 = vld [vmem:[#allocation11 + $0x150] sm:$0xff]
        %v930 = vld [vmem:[#allocation11 + $0x158] sm:$0xff]
        %v931 = vld [vmem:[#allocation11 + $0x160] sm:$0xff]
        %v932 = vld [vmem:[#allocation11 + $0x168] sm:$0xff]
        %v933 = vld [vmem:[#allocation11 + $0x170] sm:$0xff]
        %v934 = vld [vmem:[#allocation11 + $0x178] sm:$0xff]
        %v935 = vld [vmem:[#allocation11 + $0x180] sm:$0xff]
        %v936 = vld [vmem:[#allocation11 + $0x188] sm:$0xff]
        %v937 = vld [vmem:[#allocation11 + $0x190] sm:$0xff]
        %v938 = vld [vmem:[#allocation11 + $0x198] sm:$0xff]
        %v939 = vld [vmem:[#allocation11 + $0x1a0] sm:$0xff]
        %v940 = vld [vmem:[#allocation11 + $0x1a8] sm:$0xff]
        %v941 = vld [vmem:[#allocation11 + $0x1b0] sm:$0xff]
        %v942 = vld [vmem:[#allocation11 + $0x1b8] sm:$0xff]
        %v943 = vld [vmem:[#allocation11 + $0x1c0] sm:$0xff]
        %v944 = vld [vmem:[#allocation11 + $0x1c8] sm:$0xff]
        %v945 = vld [vmem:[#allocation11 + $0x1d0] sm:$0xff]
        %v946 = vld [vmem:[#allocation11 + $0x1d8] sm:$0xff]
        %v947 = vld [vmem:[#allocation11 + $0x1e0] sm:$0xff]
        %v948 = vld [vmem:[#allocation11 + $0x1e8] sm:$0xff]
        %v949 = vld [vmem:[#allocation11 + $0x1f0] sm:$0xff]
        %v950 = vld [vmem:[#allocation11 + $0x1f8] sm:$0xff]
        %v951 = vld [vmem:[#allocation11 + $0x200] sm:$0xff]
        %v952 = vld [vmem:[#allocation11 + $0x208] sm:$0xff]
        %v953 = vld [vmem:[#allocation11 + $0x210] sm:$0xff]
        %v954 = vld [vmem:[#allocation11 + $0x218] sm:$0xff]
        %v955 = vld [vmem:[#allocation11 + $0x220] sm:$0xff]
        %v956 = vld [vmem:[#allocation11 + $0x228] sm:$0xff]
        %v957 = vld [vmem:[#allocation11 + $0x230] sm:$0xff]
        %v958 = vld [vmem:[#allocation11 + $0x238] sm:$0xff]
        %v959 = vld [vmem:[#allocation11 + $0x240] sm:$0xff]
        %v960 = vld [vmem:[#allocation11 + $0x248] sm:$0xff]
        %v961 = vld [vmem:[#allocation11 + $0x250] sm:$0xff]
        %v962 = vld [vmem:[#allocation11 + $0x258] sm:$0xff]
        %v963 = vld [vmem:[#allocation11 + $0x260] sm:$0xff]
        %v964 = vld [vmem:[#allocation11 + $0x268] sm:$0xff]
        %v965 = vld [vmem:[#allocation11 + $0x270] sm:$0xff]
        %v966 = vld [vmem:[#allocation11 + $0x278] sm:$0xff]
        %v967 = vld [vmem:[#allocation11 + $0x280] sm:$0xff]
        %v968 = vld [vmem:[#allocation11 + $0x288] sm:$0xff]
        %v969 = vld [vmem:[#allocation11 + $0x290] sm:$0xff]
        %v970 = vld [vmem:[#allocation11 + $0x298] sm:$0xff]
        %v971 = vld [vmem:[#allocation11 + $0x2a0] sm:$0xff]
        %v972 = vld [vmem:[#allocation11 + $0x2a8] sm:$0xff]
        %v973 = vld [vmem:[#allocation11 + $0x2b0] sm:$0xff]
        %v974 = vld [vmem:[#allocation11 + $0x2b8] sm:$0xff]
        %v975 = vld [vmem:[#allocation11 + $0x2c0] sm:$0xff]
        %v976 = vld [vmem:[#allocation11 + $0x2c8] sm:$0xff]
        %v977 = vld [vmem:[#allocation11 + $0x2d0] sm:$0xff]
        %v978 = vld [vmem:[#allocation11 + $0x2d8] sm:$0xff]
        %v979 = vld [vmem:[#allocation11 + $0x2e0] sm:$0xff]
        %v980 = vld [vmem:[#allocation11 + $0x2e8] sm:$0xff]
        %v981 = vld [vmem:[#allocation11 + $0x2f0] sm:$0xff]
        %v982 = vld [vmem:[#allocation11 + $0x2f8] sm:$0xff]
        %v983 = vld [vmem:[#allocation11 + $0x300] sm:$0xff]
        %v984 = vld [vmem:[#allocation11 + $0x308] sm:$0xff]
        %v985 = vld [vmem:[#allocation11 + $0x310] sm:$0xff]
        %v986 = vld [vmem:[#allocation11 + $0x318] sm:$0xff]
        %v987 = vld [vmem:[#allocation11 + $0x320] sm:$0xff]
        %v988 = vld [vmem:[#allocation11 + $0x328] sm:$0xff]
        %v989 = vld [vmem:[#allocation11 + $0x330] sm:$0xff]
        %v990 = vld [vmem:[#allocation11 + $0x338] sm:$0xff]
        %v991 = vld [vmem:[#allocation11 + $0x340] sm:$0xff]
        %v992 = vld [vmem:[#allocation11 + $0x348] sm:$0xff]
        %v993 = vld [vmem:[#allocation11 + $0x350] sm:$0xff]
        %v994 = vld [vmem:[#allocation11 + $0x358] sm:$0xff]
        %v995 = vld [vmem:[#allocation11 + $0x360] sm:$0xff]
        %v996 = vld [vmem:[#allocation11 + $0x368] sm:$0xff]
        %v997 = vld [vmem:[#allocation11 + $0x370] sm:$0xff]
        %v998 = vld [vmem:[#allocation11 + $0x378] sm:$0xff]
        %v999 = vld [vmem:[#allocation11 + $0x380] sm:$0xff]
        %v1000 = vld [vmem:[#allocation11 + $0x388] sm:$0xff]
        %v1001 = vld [vmem:[#allocation11 + $0x390] sm:$0xff]
        %v1002 = vld [vmem:[#allocation11 + $0x398] sm:$0xff]
        %v1003 = vld [vmem:[#allocation11 + $0x3a0] sm:$0xff]
        %v1004 = vld [vmem:[#allocation11 + $0x3a8] sm:$0xff]
        %v1005 = vld [vmem:[#allocation11 + $0x3b0] sm:$0xff]
        %v1006 = vld [vmem:[#allocation11 + $0x3b8] sm:$0xff]
        %v1007 = vld [vmem:[#allocation11 + $0x3c0] sm:$0xff]
        %v1008 = vld [vmem:[#allocation11 + $0x3c8] sm:$0xff]
        %v1009 = vld [vmem:[#allocation11 + $0x3d0] sm:$0xff]
        %v1010 = vld [vmem:[#allocation11 + $0x3d8] sm:$0xff]
        %v1011 = vld [vmem:[#allocation11 + $0x3e0] sm:$0xff]
        %v1012 = vld [vmem:[#allocation11 + $0x3e8] sm:$0xff]
        %v1013 = vld [vmem:[#allocation11 + $0x3f0] sm:$0xff]
        %v1014 = vld [vmem:[#allocation11 + $0x3f8] sm:$0xff]
        %v1015 = vld [vmem:[#allocation11 + $0x400] sm:$0xff]
        %v1016 = vld [vmem:[#allocation11 + $0x408] sm:$0xff]
        %v1017 = vld [vmem:[#allocation11 + $0x410] sm:$0xff]
        %v1018 = vld [vmem:[#allocation11 + $0x418] sm:$0xff]
        %v1019 = vld [vmem:[#allocation11 + $0x420] sm:$0xff]
        %v1020 = vld [vmem:[#allocation11 + $0x428] sm:$0xff]
        %v1021 = vld [vmem:[#allocation11 + $0x430] sm:$0xff]
        %v1022 = vld [vmem:[#allocation11 + $0x438] sm:$0xff]
        %v1023 = vld [vmem:[#allocation11 + $0x440] sm:$0xff]
        %v1024 = vld [vmem:[#allocation11 + $0x448] sm:$0xff]
        %v1025 = vld [vmem:[#allocation11 + $0x450] sm:$0xff]
        %v1026 = vld [vmem:[#allocation11 + $0x458] sm:$0xff]
        %v1027 = vld [vmem:[#allocation11 + $0x460] sm:$0xff]
        %v1028 = vld [vmem:[#allocation11 + $0x468] sm:$0xff]
        %v1029 = vld [vmem:[#allocation11 + $0x470] sm:$0xff]
        %v1030 = vld [vmem:[#allocation11 + $0x478] sm:$0xff]
        %v1031 = vunpack.c.l.bf16 %v887
        %v1032 = vunpack.c.h.bf16 %v887
        %v1033 = vunpack.c.l.bf16 %v888
        %v1034 = vunpack.c.h.bf16 %v888
        %v1035 = vunpack.c.l.bf16 %v889
        %v1036 = vunpack.c.h.bf16 %v889
        %v1037 = vunpack.c.l.bf16 %v890
        %v1038 = vunpack.c.h.bf16 %v890
        %v1039 = vunpack.c.l.bf16 %v891
        %v1040 = vunpack.c.h.bf16 %v891
        %v1041 = vunpack.c.l.bf16 %v892
        %v1042 = vunpack.c.h.bf16 %v892
        %v1043 = vunpack.c.l.bf16 %v893
        %v1044 = vunpack.c.h.bf16 %v893
        %v1045 = vunpack.c.l.bf16 %v894
        %v1046 = vunpack.c.h.bf16 %v894
        %v1047 = vunpack.c.l.bf16 %v895
        %v1048 = vunpack.c.h.bf16 %v895
        %v1049 = vunpack.c.l.bf16 %v896
        %v1050 = vunpack.c.h.bf16 %v896
        %v1051 = vunpack.c.l.bf16 %v897
        %v1052 = vunpack.c.h.bf16 %v897
        %v1053 = vunpack.c.l.bf16 %v898
        %v1054 = vunpack.c.h.bf16 %v898
        %v1055 = vunpack.c.l.bf16 %v899
        %v1056 = vunpack.c.h.bf16 %v899
        %v1057 = vunpack.c.l.bf16 %v900
        %v1058 = vunpack.c.h.bf16 %v900
        %v1059 = vunpack.c.l.bf16 %v901
        %v1060 = vunpack.c.h.bf16 %v901
        %v1061 = vunpack.c.l.bf16 %v902
        %v1062 = vunpack.c.h.bf16 %v902
        %v1063 = vunpack.c.l.bf16 %v903
        %v1064 = vunpack.c.h.bf16 %v903
        %v1065 = vunpack.c.l.bf16 %v904
        %v1066 = vunpack.c.h.bf16 %v904
        %v1067 = vunpack.c.l.bf16 %v905
        %v1068 = vunpack.c.h.bf16 %v905
        %v1069 = vunpack.c.l.bf16 %v906
        %v1070 = vunpack.c.h.bf16 %v906
        %v1071 = vunpack.c.l.bf16 %v907
        %v1072 = vunpack.c.h.bf16 %v907
        %v1073 = vunpack.c.l.bf16 %v908
        %v1074 = vunpack.c.h.bf16 %v908
        %v1075 = vunpack.c.l.bf16 %v909
        %v1076 = vunpack.c.h.bf16 %v909
        %v1077 = vunpack.c.l.bf16 %v910
        %v1078 = vunpack.c.h.bf16 %v910
        %v1079 = vunpack.c.l.bf16 %v911
        %v1080 = vunpack.c.h.bf16 %v911
        %v1081 = vunpack.c.l.bf16 %v912
        %v1082 = vunpack.c.h.bf16 %v912
        %v1083 = vunpack.c.l.bf16 %v913
        %v1084 = vunpack.c.h.bf16 %v913
        %v1085 = vunpack.c.l.bf16 %v914
        %v1086 = vunpack.c.h.bf16 %v914
        %v1087 = vunpack.c.l.bf16 %v915
        %v1088 = vunpack.c.h.bf16 %v915
        %v1089 = vunpack.c.l.bf16 %v916
        %v1090 = vunpack.c.h.bf16 %v916
        %v1091 = vunpack.c.l.bf16 %v917
        %v1092 = vunpack.c.h.bf16 %v917
        %v1093 = vunpack.c.l.bf16 %v918
        %v1094 = vunpack.c.h.bf16 %v918
        %v1095 = vunpack.c.l.bf16 %v919
        %v1096 = vunpack.c.h.bf16 %v919
        %v1097 = vunpack.c.l.bf16 %v920
        %v1098 = vunpack.c.h.bf16 %v920
        %v1099 = vunpack.c.l.bf16 %v921
        %v1100 = vunpack.c.h.bf16 %v921
        %v1101 = vunpack.c.l.bf16 %v922
        %v1102 = vunpack.c.h.bf16 %v922
        %v1103 = vunpack.c.l.bf16 %v923
        %v1104 = vunpack.c.h.bf16 %v923
        %v1105 = vunpack.c.l.bf16 %v924
        %v1106 = vunpack.c.h.bf16 %v924
        %v1107 = vunpack.c.l.bf16 %v925
        %v1108 = vunpack.c.h.bf16 %v925
        %v1109 = vunpack.c.l.bf16 %v926
        %v1110 = vunpack.c.h.bf16 %v926
        %v1111 = vunpack.c.l.bf16 %v927
        %v1112 = vunpack.c.h.bf16 %v927
        %v1113 = vunpack.c.l.bf16 %v928
        %v1114 = vunpack.c.h.bf16 %v928
        %v1115 = vunpack.c.l.bf16 %v929
        %v1116 = vunpack.c.h.bf16 %v929
        %v1117 = vunpack.c.l.bf16 %v930
        %v1118 = vunpack.c.h.bf16 %v930
        %v1119 = vunpack.c.l.bf16 %v931
        %v1120 = vunpack.c.h.bf16 %v931
        %v1121 = vunpack.c.l.bf16 %v932
        %v1122 = vunpack.c.h.bf16 %v932
        %v1123 = vunpack.c.l.bf16 %v933
        %v1124 = vunpack.c.h.bf16 %v933
        %v1125 = vunpack.c.l.bf16 %v934
        %v1126 = vunpack.c.h.bf16 %v934
        %v1127 = vunpack.c.l.bf16 %v935
        %v1128 = vunpack.c.h.bf16 %v935
        %v1129 = vunpack.c.l.bf16 %v936
        %v1130 = vunpack.c.h.bf16 %v936
        %v1131 = vunpack.c.l.bf16 %v937
        %v1132 = vunpack.c.h.bf16 %v937
        %v1133 = vunpack.c.l.bf16 %v938
        %v1134 = vunpack.c.h.bf16 %v938
        %v1135 = vunpack.c.l.bf16 %v939
        %v1136 = vunpack.c.h.bf16 %v939
        %v1137 = vunpack.c.l.bf16 %v940
        %v1138 = vunpack.c.h.bf16 %v940
        %v1139 = vunpack.c.l.bf16 %v941
        %v1140 = vunpack.c.h.bf16 %v941
        %v1141 = vunpack.c.l.bf16 %v942
        %v1142 = vunpack.c.h.bf16 %v942
        %v1143 = vunpack.c.l.bf16 %v943
        %v1144 = vunpack.c.h.bf16 %v943
        %v1145 = vunpack.c.l.bf16 %v944
        %v1146 = vunpack.c.h.bf16 %v944
        %v1147 = vunpack.c.l.bf16 %v945
        %v1148 = vunpack.c.h.bf16 %v945
        %v1149 = vunpack.c.l.bf16 %v946
        %v1150 = vunpack.c.h.bf16 %v946
        %v1151 = vunpack.c.l.bf16 %v947
        %v1152 = vunpack.c.h.bf16 %v947
        %v1153 = vunpack.c.l.bf16 %v948
        %v1154 = vunpack.c.h.bf16 %v948
        %v1155 = vunpack.c.l.bf16 %v949
        %v1156 = vunpack.c.h.bf16 %v949
        %v1157 = vunpack.c.l.bf16 %v950
        %v1158 = vunpack.c.h.bf16 %v950
        %v1159 = vunpack.c.l.bf16 %v951
        %v1160 = vunpack.c.h.bf16 %v951
        %v1161 = vunpack.c.l.bf16 %v952
        %v1162 = vunpack.c.h.bf16 %v952
        %v1163 = vunpack.c.l.bf16 %v953
        %v1164 = vunpack.c.h.bf16 %v953
        %v1165 = vunpack.c.l.bf16 %v954
        %v1166 = vunpack.c.h.bf16 %v954
        %v1167 = vunpack.c.l.bf16 %v955
        %v1168 = vunpack.c.h.bf16 %v955
        %v1169 = vunpack.c.l.bf16 %v956
        %v1170 = vunpack.c.h.bf16 %v956
        %v1171 = vunpack.c.l.bf16 %v957
        %v1172 = vunpack.c.h.bf16 %v957
        %v1173 = vunpack.c.l.bf16 %v958
        %v1174 = vunpack.c.h.bf16 %v958
        %v1175 = vunpack.c.l.bf16 %v959
        %v1176 = vunpack.c.h.bf16 %v959
        %v1177 = vunpack.c.l.bf16 %v960
        %v1178 = vunpack.c.h.bf16 %v960
        %v1179 = vunpack.c.l.bf16 %v961
        %v1180 = vunpack.c.h.bf16 %v961
        %v1181 = vunpack.c.l.bf16 %v962
        %v1182 = vunpack.c.h.bf16 %v962
        %v1183 = vunpack.c.l.bf16 %v963
        %v1184 = vunpack.c.h.bf16 %v963
        %v1185 = vunpack.c.l.bf16 %v964
        %v1186 = vunpack.c.h.bf16 %v964
        %v1187 = vunpack.c.l.bf16 %v965
        %v1188 = vunpack.c.h.bf16 %v965
        %v1189 = vunpack.c.l.bf16 %v966
        %v1190 = vunpack.c.h.bf16 %v966
        %v1191 = vunpack.c.l.bf16 %v967
        %v1192 = vunpack.c.h.bf16 %v967
        %v1193 = vunpack.c.l.bf16 %v968
        %v1194 = vunpack.c.h.bf16 %v968
        %v1195 = vunpack.c.l.bf16 %v969
        %v1196 = vunpack.c.h.bf16 %v969
        %v1197 = vunpack.c.l.bf16 %v970
        %v1198 = vunpack.c.h.bf16 %v970
        %v1199 = vunpack.c.l.bf16 %v971
        %v1200 = vunpack.c.h.bf16 %v971
        %v1201 = vunpack.c.l.bf16 %v972
        %v1202 = vunpack.c.h.bf16 %v972
        %v1203 = vunpack.c.l.bf16 %v973
        %v1204 = vunpack.c.h.bf16 %v973
        %v1205 = vunpack.c.l.bf16 %v974
        %v1206 = vunpack.c.h.bf16 %v974
        %v1207 = vunpack.c.l.bf16 %v975
        %v1208 = vunpack.c.h.bf16 %v975
        %v1209 = vunpack.c.l.bf16 %v976
        %v1210 = vunpack.c.h.bf16 %v976
        %v1211 = vunpack.c.l.bf16 %v977
        %v1212 = vunpack.c.h.bf16 %v977
        %v1213 = vunpack.c.l.bf16 %v978
        %v1214 = vunpack.c.h.bf16 %v978
        %v1215 = vunpack.c.l.bf16 %v979
        %v1216 = vunpack.c.h.bf16 %v979
        %v1217 = vunpack.c.l.bf16 %v980
        %v1218 = vunpack.c.h.bf16 %v980
        %v1219 = vunpack.c.l.bf16 %v981
        %v1220 = vunpack.c.h.bf16 %v981
        %v1221 = vunpack.c.l.bf16 %v982
        %v1222 = vunpack.c.h.bf16 %v982
        %v1223 = vunpack.c.l.bf16 %v983
        %v1224 = vunpack.c.h.bf16 %v983
        %v1225 = vunpack.c.l.bf16 %v984
        %v1226 = vunpack.c.h.bf16 %v984
        %v1227 = vunpack.c.l.bf16 %v985
        %v1228 = vunpack.c.h.bf16 %v985
        %v1229 = vunpack.c.l.bf16 %v986
        %v1230 = vunpack.c.h.bf16 %v986
        %v1231 = vunpack.c.l.bf16 %v987
        %v1232 = vunpack.c.h.bf16 %v987
        %v1233 = vunpack.c.l.bf16 %v988
        %v1234 = vunpack.c.h.bf16 %v988
        %v1235 = vunpack.c.l.bf16 %v989
        %v1236 = vunpack.c.h.bf16 %v989
        %v1237 = vunpack.c.l.bf16 %v990
        %v1238 = vunpack.c.h.bf16 %v990
        %v1239 = vunpack.c.l.bf16 %v991
        %v1240 = vunpack.c.h.bf16 %v991
        %v1241 = vunpack.c.l.bf16 %v992
        %v1242 = vunpack.c.h.bf16 %v992
        %v1243 = vunpack.c.l.bf16 %v993
        %v1244 = vunpack.c.h.bf16 %v993
        %v1245 = vunpack.c.l.bf16 %v994
        %v1246 = vunpack.c.h.bf16 %v994
        %v1247 = vunpack.c.l.bf16 %v995
        %v1248 = vunpack.c.h.bf16 %v995
        %v1249 = vunpack.c.l.bf16 %v996
        %v1250 = vunpack.c.h.bf16 %v996
        %v1251 = vunpack.c.l.bf16 %v997
        %v1252 = vunpack.c.h.bf16 %v997
        %v1253 = vunpack.c.l.bf16 %v998
        %v1254 = vunpack.c.h.bf16 %v998
        %v1255 = vunpack.c.l.bf16 %v999
        %v1256 = vunpack.c.h.bf16 %v999
        %v1257 = vunpack.c.l.bf16 %v1000
        %v1258 = vunpack.c.h.bf16 %v1000
        %v1259 = vunpack.c.l.bf16 %v1001
        %v1260 = vunpack.c.h.bf16 %v1001
        %v1261 = vunpack.c.l.bf16 %v1002
        %v1262 = vunpack.c.h.bf16 %v1002
        %v1263 = vunpack.c.l.bf16 %v1003
        %v1264 = vunpack.c.h.bf16 %v1003
        %v1265 = vunpack.c.l.bf16 %v1004
        %v1266 = vunpack.c.h.bf16 %v1004
        %v1267 = vunpack.c.l.bf16 %v1005
        %v1268 = vunpack.c.h.bf16 %v1005
        %v1269 = vunpack.c.l.bf16 %v1006
        %v1270 = vunpack.c.h.bf16 %v1006
        %v1271 = vunpack.c.l.bf16 %v1007
        %v1272 = vunpack.c.h.bf16 %v1007
        %v1273 = vunpack.c.l.bf16 %v1008
        %v1274 = vunpack.c.h.bf16 %v1008
        %v1275 = vunpack.c.l.bf16 %v1009
        %v1276 = vunpack.c.h.bf16 %v1009
        %v1277 = vunpack.c.l.bf16 %v1010
        %v1278 = vunpack.c.h.bf16 %v1010
        %v1279 = vunpack.c.l.bf16 %v1011
        %v1280 = vunpack.c.h.bf16 %v1011
        %v1281 = vunpack.c.l.bf16 %v1012
        %v1282 = vunpack.c.h.bf16 %v1012
        %v1283 = vunpack.c.l.bf16 %v1013
        %v1284 = vunpack.c.h.bf16 %v1013
        %v1285 = vunpack.c.l.bf16 %v1014
        %v1286 = vunpack.c.h.bf16 %v1014
        %v1287 = vunpack.c.l.bf16 %v1015
        %v1288 = vunpack.c.h.bf16 %v1015
        %v1289 = vunpack.c.l.bf16 %v1016
        %v1290 = vunpack.c.h.bf16 %v1016
        %v1291 = vunpack.c.l.bf16 %v1017
        %v1292 = vunpack.c.h.bf16 %v1017
        %v1293 = vunpack.c.l.bf16 %v1018
        %v1294 = vunpack.c.h.bf16 %v1018
        %v1295 = vunpack.c.l.bf16 %v1019
        %v1296 = vunpack.c.h.bf16 %v1019
        %v1297 = vunpack.c.l.bf16 %v1020
        %v1298 = vunpack.c.h.bf16 %v1020
        %v1299 = vunpack.c.l.bf16 %v1021
        %v1300 = vunpack.c.h.bf16 %v1021
        %v1301 = vunpack.c.l.bf16 %v1022
        %v1302 = vunpack.c.h.bf16 %v1022
        %v1303 = vunpack.c.l.bf16 %v1023
        %v1304 = vunpack.c.h.bf16 %v1023
        %v1305 = vunpack.c.l.bf16 %v1024
        %v1306 = vunpack.c.h.bf16 %v1024
        %v1307 = vunpack.c.l.bf16 %v1025
        %v1308 = vunpack.c.h.bf16 %v1025
        %v1309 = vunpack.c.l.bf16 %v1026
        %v1310 = vunpack.c.h.bf16 %v1026
        %v1311 = vunpack.c.l.bf16 %v1027
        %v1312 = vunpack.c.h.bf16 %v1027
        %v1313 = vunpack.c.l.bf16 %v1028
        %v1314 = vunpack.c.h.bf16 %v1028
        %v1315 = vunpack.c.l.bf16 %v1029
        %v1316 = vunpack.c.h.bf16 %v1029
        %v1317 = vunpack.c.l.bf16 %v1030
        %v1318 = vunpack.c.h.bf16 %v1030
        %v1319 = vld [vmem:[#allocation13] sm:$0xf]
        %v1320 = vld [vmem:[#allocation13 + $0x4] sm:$0xf]
        %v1321 = vld [vmem:[#allocation13 + $0x8] sm:$0xf]
        %v1322 = vld [vmem:[#allocation13 + $0xc] sm:$0xf]
        %v1323 = vld [vmem:[#allocation13 + $0x10] sm:$0xf]
        %v1324 = vld [vmem:[#allocation13 + $0x14] sm:$0xf]
        %v1325 = vld [vmem:[#allocation13 + $0x18] sm:$0xf]
        %v1326 = vld [vmem:[#allocation13 + $0x1c] sm:$0xf]
        %v1327 = vld [vmem:[#allocation13 + $0x20] sm:$0xf]
        %v1328 = vld [vmem:[#allocation13 + $0x24] sm:$0xf]
        %v1329 = vld [vmem:[#allocation13 + $0x28] sm:$0xf]
        %v1330 = vld [vmem:[#allocation13 + $0x2c] sm:$0xf]
        %v1331 = vld [vmem:[#allocation13 + $0x30] sm:$0xf]
        %v1332 = vld [vmem:[#allocation13 + $0x34] sm:$0xf]
        %v1333 = vld [vmem:[#allocation13 + $0x38] sm:$0xf]
        %v1334 = vld [vmem:[#allocation13 + $0x3c] sm:$0xf]
        %v1335 = vld [vmem:[#allocation13 + $0x40] sm:$0xf]
        %v1336 = vld [vmem:[#allocation13 + $0x44] sm:$0xf]
        %v1337 = vld [vmem:[#allocation13 + $0x48] sm:$0xf]
        %v1338 = vld [vmem:[#allocation13 + $0x4c] sm:$0xf]
        %v1339 = vld [vmem:[#allocation13 + $0x50] sm:$0xf]
        %v1340 = vld [vmem:[#allocation13 + $0x54] sm:$0xf]
        %v1341 = vld [vmem:[#allocation13 + $0x58] sm:$0xf]
        %v1342 = vld [vmem:[#allocation13 + $0x5c] sm:$0xf]
        %v1343 = vld [vmem:[#allocation13 + $0x60] sm:$0xf]
        %v1344 = vld [vmem:[#allocation13 + $0x64] sm:$0xf]
        %v1345 = vld [vmem:[#allocation13 + $0x68] sm:$0xf]
        %v1346 = vld [vmem:[#allocation13 + $0x6c] sm:$0xf]
        %v1347 = vld [vmem:[#allocation13 + $0x70] sm:$0xf]
        %v1348 = vld [vmem:[#allocation13 + $0x74] sm:$0xf]
        %v1349 = vld [vmem:[#allocation13 + $0x78] sm:$0xf]
        %v1350 = vld [vmem:[#allocation13 + $0x7c] sm:$0xf]
        %v1351 = vunpack.c.l.bf16 %v1319
        %v1352 = vunpack.c.l.bf16 %v1320
        %v1353 = vunpack.c.l.bf16 %v1321
        %v1354 = vunpack.c.l.bf16 %v1322
        %v1355 = vunpack.c.l.bf16 %v1323
        %v1356 = vunpack.c.l.bf16 %v1324
        %v1357 = vunpack.c.l.bf16 %v1325
        %v1358 = vunpack.c.l.bf16 %v1326
        %v1359 = vunpack.c.l.bf16 %v1327
        %v1360 = vunpack.c.l.bf16 %v1328
        %v1361 = vunpack.c.l.bf16 %v1329
        %v1362 = vunpack.c.l.bf16 %v1330
        %v1363 = vunpack.c.l.bf16 %v1331
        %v1364 = vunpack.c.l.bf16 %v1332
        %v1365 = vunpack.c.l.bf16 %v1333
        %v1366 = vunpack.c.l.bf16 %v1334
        %v1367 = vunpack.c.l.bf16 %v1335
        %v1368 = vunpack.c.l.bf16 %v1336
        %v1369 = vunpack.c.l.bf16 %v1337
        %v1370 = vunpack.c.l.bf16 %v1338
        %v1371 = vunpack.c.l.bf16 %v1339
        %v1372 = vunpack.c.l.bf16 %v1340
        %v1373 = vunpack.c.l.bf16 %v1341
        %v1374 = vunpack.c.l.bf16 %v1342
        %v1375 = vunpack.c.l.bf16 %v1343
        %v1376 = vunpack.c.l.bf16 %v1344
        %v1377 = vunpack.c.l.bf16 %v1345
        %v1378 = vunpack.c.l.bf16 %v1346
        %v1379 = vunpack.c.l.bf16 %v1347
        %v1380 = vunpack.c.l.bf16 %v1348
        %v1381 = vunpack.c.l.bf16 %v1349
        %v1382 = vunpack.c.l.bf16 %v1350
        %v1383 = vld [vmem:[%s9] sm:$0xf]
        %v1385 = vlaneseq
        %v1386 = vshrl.u32 %v1385, 7
        %v1387 = vsub.s32 0, %v1386
        %v1388 = vrot.slane %v1383, %v1387
        %v1389 = vlaneseq
        %v1390 = vshrl.u32 %v1389, 7
        %v1391 = vsub.s32 1, %v1390
        %v1392 = vrot.slane %v1383, %v1391
        %v1393 = vlaneseq
        %v1394 = vshrl.u32 %v1393, 7
        %v1395 = vsub.s32 2, %v1394
        %v1396 = vrot.slane %v1383, %v1395
        %v1397 = vlaneseq
        %v1398 = vshrl.u32 %v1397, 7
        %v1399 = vsub.s32 3, %v1398
        %v1400 = vrot.slane %v1383, %v1399
        %1405 = vmatprep.subr.mxu0 %v884
        %1406 = vmatpush1.msra.mxu0 %v883
        %1407 = vmatprep.subr.mxu0 %v880
        %1408 = vmatpush1.msra.mxu0 %v879
        %1409 = vmatprep.subr.mxu0 %v876
        %1410 = vmatpush1.msra.mxu0 %v875
        %1411 = vmatprep.subr.mxu0 %v872
        %1412 = vmatpush1.msra.mxu0 %v871
        %1413 = vmatprep.subr.mxu0 %v868
        %1414 = vmatpush1.msra.mxu0 %v867
        %1415 = vmatprep.subr.mxu0 %v864
        %1416 = vmatpush1.msra.mxu0 %v863
        %1417 = vmatprep.subr.mxu0 %v860
        %1418 = vmatpush1.msra.mxu0 %v859
        %1419 = vmatprep.subr.mxu0 %v856
        %1420 = vmatpush1.msra.mxu0 %v855
        %1421 = vmatprep.subr.mxu0 %v852
        %1422 = vmatpush1.msra.mxu0 %v851
        %1423 = vmatprep.subr.mxu0 %v848
        %1424 = vmatpush1.msra.mxu0 %v847
        %1425 = vmatprep.subr.mxu0 %v844
        %1426 = vmatpush1.msra.mxu0 %v843
        %1427 = vmatprep.subr.mxu0 %v840
        %1428 = vmatpush1.msra.mxu0 %v839
        %1429 = vmatprep.subr.mxu0 %v836
        %1430 = vmatpush1.msra.mxu0 %v835
        %1431 = vmatprep.subr.mxu0 %v832
        %1432 = vmatpush1.msra.mxu0 %v831
        %1433 = vmatprep.subr.mxu0 %v828
        %1434 = vmatpush1.msra.mxu0 %v827
        %1435 = vmatprep.subr.mxu0 %v824
        %1436 = vmatpush1.msra.mxu0 %v823
        %1437 = vmatprep.subr.mxu0 0.0
        %1438 = vmatpush2.msra.mxu0 0.0
        %1439 = vmatprep.subr.mxu0 0.0
        %1440 = vmatpush2.msra.mxu0 0.0
        %1441 = vmatprep.subr.mxu0 0.0
        %1442 = vmatpush2.msra.mxu0 0.0
        %1443 = vmatprep.subr.mxu0 0.0
        %1444 = vmatpush2.msra.mxu0 0.0
        %1445 = vmatprep.subr.mxu0 0.0
        %1446 = vmatpush2.msra.mxu0 0.0
        %1447 = vmatprep.subr.mxu0 0.0
        %1448 = vmatpush2.msra.mxu0 0.0
        %1449 = vmatprep.subr.mxu0 0.0
        %1450 = vmatpush2.msra.mxu0 0.0
        %1451 = vmatprep.subr.mxu0 0.0
        %1452 = vmatpush2.msra.mxu0 0.0
        %1453 = vmatprep.subr.mxu0 0.0
        %1454 = vmatpush2.msra.mxu0 0.0
        %1455 = vmatprep.subr.mxu0 0.0
        %1456 = vmatpush2.msra.mxu0 0.0
        %1457 = vmatprep.subr.mxu0 0.0
        %1458 = vmatpush2.msra.mxu0 0.0
        %1459 = vmatprep.subr.mxu0 0.0
        %1460 = vmatpush2.msra.mxu0 0.0
        %1461 = vmatprep.subr.mxu0 0.0
        %1462 = vmatpush2.msra.mxu0 0.0
        %1463 = vmatprep.subr.mxu0 0.0
        %1464 = vmatpush2.msra.mxu0 0.0
        %1465 = vmatprep.subr.mxu0 0.0
        %1466 = vmatpush2.msra.mxu0 0.0
        %1467 = vmatprep.subr.mxu0 0.0
        %1468 = vmatpush2.msra.mxu0 0.0
        %1469 = vmatprep.mubr.f32.mxu0 0.0
        %1470 = vmatmul.mubr.f32.gmra.mxu0 %v672
        %v1471 = vpop.f32.mrf.mxu0
        %v1472 = vadd.f32 %v1388, %v1471
        %v1473 = vpop.f32.mrf.mxu0
        %v1474 = vadd.f32 %v1392, %v1473
        %1475 = vdwg.mxu0
        %1476 = vmatprep.subr.mxu0 %v886
        %1477 = vmatpush1.msra.mxu0 %v885
        %1478 = vmatprep.subr.mxu0 %v882
        %1479 = vmatpush1.msra.mxu0 %v881
        %1480 = vmatprep.subr.mxu0 %v878
        %1481 = vmatpush1.msra.mxu0 %v877
        %1482 = vmatprep.subr.mxu0 %v874
        %1483 = vmatpush1.msra.mxu0 %v873
        %1484 = vmatprep.subr.mxu0 %v870
        %1485 = vmatpush1.msra.mxu0 %v869
        %1486 = vmatprep.subr.mxu0 %v866
        %1487 = vmatpush1.msra.mxu0 %v865
        %1488 = vmatprep.subr.mxu0 %v862
        %1489 = vmatpush1.msra.mxu0 %v861
        %1490 = vmatprep.subr.mxu0 %v858
        %1491 = vmatpush1.msra.mxu0 %v857
        %1492 = vmatprep.subr.mxu0 %v854
        %1493 = vmatpush1.msra.mxu0 %v853
        %1494 = vmatprep.subr.mxu0 %v850
        %1495 = vmatpush1.msra.mxu0 %v849
        %1496 = vmatprep.subr.mxu0 %v846
        %1497 = vmatpush1.msra.mxu0 %v845
        %1498 = vmatprep.subr.mxu0 %v842
        %1499 = vmatpush1.msra.mxu0 %v841
        %1500 = vmatprep.subr.mxu0 %v838
        %1501 = vmatpush1.msra.mxu0 %v837
        %1502 = vmatprep.subr.mxu0 %v834
        %1503 = vmatpush1.msra.mxu0 %v833
        %1504 = vmatprep.subr.mxu0 %v830
        %1505 = vmatpush1.msra.mxu0 %v829
        %1506 = vmatprep.subr.mxu0 %v826
        %1507 = vmatpush1.msra.mxu0 %v825
        %1508 = vmatprep.subr.mxu0 0.0
        %1509 = vmatpush2.msra.mxu0 0.0
        %1510 = vmatprep.subr.mxu0 0.0
        %1511 = vmatpush2.msra.mxu0 0.0
        %1512 = vmatprep.subr.mxu0 0.0
        %1513 = vmatpush2.msra.mxu0 0.0
        %1514 = vmatprep.subr.mxu0 0.0
        %1515 = vmatpush2.msra.mxu0 0.0
        %1516 = vmatprep.subr.mxu0 0.0
        %1517 = vmatpush2.msra.mxu0 0.0
        %1518 = vmatprep.subr.mxu0 0.0
        %1519 = vmatpush2.msra.mxu0 0.0
        %1520 = vmatprep.subr.mxu0 0.0
        %1521 = vmatpush2.msra.mxu0 0.0
        %1522 = vmatprep.subr.mxu0 0.0
        %1523 = vmatpush2.msra.mxu0 0.0
        %1524 = vmatprep.subr.mxu0 0.0
        %1525 = vmatpush2.msra.mxu0 0.0
        %1526 = vmatprep.subr.mxu0 0.0
        %1527 = vmatpush2.msra.mxu0 0.0
        %1528 = vmatprep.subr.mxu0 0.0
        %1529 = vmatpush2.msra.mxu0 0.0
        %1530 = vmatprep.subr.mxu0 0.0
        %1531 = vmatpush2.msra.mxu0 0.0
        %1532 = vmatprep.subr.mxu0 0.0
        %1533 = vmatpush2.msra.mxu0 0.0
        %1534 = vmatprep.subr.mxu0 0.0
        %1535 = vmatpush2.msra.mxu0 0.0
        %1536 = vmatprep.subr.mxu0 0.0
        %1537 = vmatpush2.msra.mxu0 0.0
        %1538 = vmatprep.subr.mxu0 0.0
        %1539 = vmatpush2.msra.mxu0 0.0
        %1540 = vmatprep.mubr.f32.mxu0 0.0
        %1541 = vmatmul.mubr.f32.gmra.mxu0 %v672
        %v1542 = vpop.f32.mrf.mxu0
        %v1543 = vadd.f32 %v1396, %v1542
        %v1544 = vpop.f32.mrf.mxu0
        %v1545 = vadd.f32 %v1400, %v1544
        %1546 = vdwg.mxu0
        %v1547 = vld [vmem:[%s5] sm:$0x7]
        %v1549 = vlaneseq
        %v1550 = vshrl.u32 %v1549, 7
        %v1551 = vsub.s32 0, %v1550
        %v1552 = vrot.slane %v1547, %v1551
        %v1553 = vlaneseq
        %v1554 = vshrl.u32 %v1553, 7
        %v1555 = vsub.s32 1, %v1554
        %v1556 = vrot.slane %v1547, %v1555
        %v1557 = vlaneseq
        %v1558 = vshrl.u32 %v1557, 7
        %v1559 = vsub.s32 2, %v1558
        %v1560 = vrot.slane %v1547, %v1559
        %1564 = vmatprep.subr.mxu0 %v757
        %1565 = vmatpush1.msra.mxu0 %v756
        %1566 = vmatprep.subr.mxu0 %v754
        %1567 = vmatpush1.msra.mxu0 %v753
        %1568 = vmatprep.subr.mxu0 %v751
        %1569 = vmatpush1.msra.mxu0 %v750
        %1570 = vmatprep.subr.mxu0 %v748
        %1571 = vmatpush1.msra.mxu0 %v747
        %1572 = vmatprep.subr.mxu0 %v745
        %1573 = vmatpush1.msra.mxu0 %v744
        %1574 = vmatprep.subr.mxu0 %v742
        %1575 = vmatpush1.msra.mxu0 %v741
        %1576 = vmatprep.subr.mxu0 %v739
        %1577 = vmatpush1.msra.mxu0 %v738
        %1578 = vmatprep.subr.mxu0 %v736
        %1579 = vmatpush1.msra.mxu0 %v735
        %1580 = vmatprep.subr.mxu0 %v733
        %1581 = vmatpush1.msra.mxu0 %v732
        %1582 = vmatprep.subr.mxu0 %v730
        %1583 = vmatpush1.msra.mxu0 %v729
        %1584 = vmatprep.subr.mxu0 %v727
        %1585 = vmatpush1.msra.mxu0 %v726
        %1586 = vmatprep.subr.mxu0 %v724
        %1587 = vmatpush1.msra.mxu0 %v723
        %1588 = vmatprep.subr.mxu0 %v721
        %1589 = vmatpush1.msra.mxu0 %v720
        %1590 = vmatprep.subr.mxu0 %v718
        %1591 = vmatpush1.msra.mxu0 %v717
        %1592 = vmatprep.subr.mxu0 %v715
        %1593 = vmatpush1.msra.mxu0 %v714
        %1594 = vmatprep.subr.mxu0 %v712
        %1595 = vmatpush1.msra.mxu0 %v711
        %1596 = vmatprep.subr.mxu0 0.0
        %1597 = vmatpush2.msra.mxu0 0.0
        %1598 = vmatprep.subr.mxu0 0.0
        %1599 = vmatpush2.msra.mxu0 0.0
        %1600 = vmatprep.subr.mxu0 0.0
        %1601 = vmatpush2.msra.mxu0 0.0
        %1602 = vmatprep.subr.mxu0 0.0
        %1603 = vmatpush2.msra.mxu0 0.0
        %1604 = vmatprep.subr.mxu0 0.0
        %1605 = vmatpush2.msra.mxu0 0.0
        %1606 = vmatprep.subr.mxu0 0.0
        %1607 = vmatpush2.msra.mxu0 0.0
        %1608 = vmatprep.subr.mxu0 0.0
        %1609 = vmatpush2.msra.mxu0 0.0
        %1610 = vmatprep.subr.mxu0 0.0
        %1611 = vmatpush2.msra.mxu0 0.0
        %1612 = vmatprep.subr.mxu0 0.0
        %1613 = vmatpush2.msra.mxu0 0.0
        %1614 = vmatprep.subr.mxu0 0.0
        %1615 = vmatpush2.msra.mxu0 0.0
        %1616 = vmatprep.subr.mxu0 0.0
        %1617 = vmatpush2.msra.mxu0 0.0
        %1618 = vmatprep.subr.mxu0 0.0
        %1619 = vmatpush2.msra.mxu0 0.0
        %1620 = vmatprep.subr.mxu0 0.0
        %1621 = vmatpush2.msra.mxu0 0.0
        %1622 = vmatprep.subr.mxu0 0.0
        %1623 = vmatpush2.msra.mxu0 0.0
        %1624 = vmatprep.subr.mxu0 0.0
        %1625 = vmatpush2.msra.mxu0 0.0
        %1626 = vmatprep.subr.mxu0 0.0
        %1627 = vmatpush2.msra.mxu0 0.0
        %1628 = vmatprep.mubr.f32.mxu0 0.0
        %1629 = vmatmul.mubr.f32.gmra.mxu0 %v670
        %v1630 = vpop.f32.mrf.mxu0
        %v1631 = vadd.f32 %v1552, %v1630
        %v1632 = vpop.f32.mrf.mxu0
        %v1633 = vadd.f32 %v1556, %v1632
        %1634 = vmatprep.mubr.f32.mxu0 0.0
        %1635 = vmatmul.mubr.f32.gmra.mxu0 %v671
        %v1636 = vpop.f32.mrf.mxu0
        %v1637 = vadd.f32 %v1552, %v1636
        %v1638 = vpop.f32.mrf.mxu0
        %v1639 = vadd.f32 %v1556, %v1638
        %1640 = vdwg.mxu0
        %1641 = vmatprep.subr.mxu0 0.0
        %1642 = vmatpush1.msra.mxu0 %v758
        %1643 = vmatprep.subr.mxu0 0.0
        %1644 = vmatpush1.msra.mxu0 %v755
        %1645 = vmatprep.subr.mxu0 0.0
        %1646 = vmatpush1.msra.mxu0 %v752
        %1647 = vmatprep.subr.mxu0 0.0
        %1648 = vmatpush1.msra.mxu0 %v749
        %1649 = vmatprep.subr.mxu0 0.0
        %1650 = vmatpush1.msra.mxu0 %v746
        %1651 = vmatprep.subr.mxu0 0.0
        %1652 = vmatpush1.msra.mxu0 %v743
        %1653 = vmatprep.subr.mxu0 0.0
        %1654 = vmatpush1.msra.mxu0 %v740
        %1655 = vmatprep.subr.mxu0 0.0
        %1656 = vmatpush1.msra.mxu0 %v737
        %1657 = vmatprep.subr.mxu0 0.0
        %1658 = vmatpush1.msra.mxu0 %v734
        %1659 = vmatprep.subr.mxu0 0.0
        %1660 = vmatpush1.msra.mxu0 %v731
        %1661 = vmatprep.subr.mxu0 0.0
        %1662 = vmatpush1.msra.mxu0 %v728
        %1663 = vmatprep.subr.mxu0 0.0
        %1664 = vmatpush1.msra.mxu0 %v725
        %1665 = vmatprep.subr.mxu0 0.0
        %1666 = vmatpush1.msra.mxu0 %v722
        %1667 = vmatprep.subr.mxu0 0.0
        %1668 = vmatpush1.msra.mxu0 %v719
        %1669 = vmatprep.subr.mxu0 0.0
        %1670 = vmatpush1.msra.mxu0 %v716
        %1671 = vmatprep.subr.mxu0 0.0
        %1672 = vmatpush1.msra.mxu0 %v713
        %1673 = vmatprep.subr.mxu0 0.0
        %1674 = vmatpush2.msra.mxu0 0.0
        %1675 = vmatprep.subr.mxu0 0.0
        %1676 = vmatpush2.msra.mxu0 0.0
        %1677 = vmatprep.subr.mxu0 0.0
        %1678 = vmatpush2.msra.mxu0 0.0
        %1679 = vmatprep.subr.mxu0 0.0
        %1680 = vmatpush2.msra.mxu0 0.0
        %1681 = vmatprep.subr.mxu0 0.0
        %1682 = vmatpush2.msra.mxu0 0.0
        %1683 = vmatprep.subr.mxu0 0.0
        %1684 = vmatpush2.msra.mxu0 0.0
        %1685 = vmatprep.subr.mxu0 0.0
        %1686 = vmatpush2.msra.mxu0 0.0
        %1687 = vmatprep.subr.mxu0 0.0
        %1688 = vmatpush2.msra.mxu0 0.0
        %1689 = vmatprep.subr.mxu0 0.0
        %1690 = vmatpush2.msra.mxu0 0.0
        %1691 = vmatprep.subr.mxu0 0.0
        %1692 = vmatpush2.msra.mxu0 0.0
        %1693 = vmatprep.subr.mxu0 0.0
        %1694 = vmatpush2.msra.mxu0 0.0
        %1695 = vmatprep.subr.mxu0 0.0
        %1696 = vmatpush2.msra.mxu0 0.0
        %1697 = vmatprep.subr.mxu0 0.0
        %1698 = vmatpush2.msra.mxu0 0.0
        %1699 = vmatprep.subr.mxu0 0.0
        %1700 = vmatpush2.msra.mxu0 0.0
        %1701 = vmatprep.subr.mxu0 0.0
        %1702 = vmatpush2.msra.mxu0 0.0
        %1703 = vmatprep.subr.mxu0 0.0
        %1704 = vmatpush2.msra.mxu0 0.0
        %1705 = vmatprep.mubr.f32.mxu0 0.0
        %1706 = vmatmul.mubr.f32.gmra.mxu0 %v670
        %v1707 = vpop.f32.mrf.mxu0
        %v1708 = vadd.f32 %v1560, %v1707
        %v1709 = vpop.f32.mrf.mxu0
        %1710 = vmatprep.mubr.f32.mxu0 0.0
        %1711 = vmatmul.mubr.f32.gmra.mxu0 %v671
        %v1712 = vpop.f32.mrf.mxu0
        %v1713 = vadd.f32 %v1560, %v1712
        %v1714 = vpop.f32.mrf.mxu0
        %1715 = vdwg.mxu0
        %1718 = vrot.lane.b32.xlu0 %v1631, 64
        %v1719 = vpop.permute.xlu0 %1718
        %1720 = vrot.lane.b32.xlu0 %v1637, 64
        %v1721 = vpop.permute.xlu0 %1720
        %1724 = vrot.lane.b32.xlu0 %v1633, 64
        %v1725 = vpop.permute.xlu0 %1724
        %1726 = vrot.lane.b32.xlu0 %v1639, 64
        %v1727 = vpop.permute.xlu0 %1726
        %1732 = vrot.lane.b32.xlu0 %v1708, 64
        %v1733 = vpop.permute.xlu0 %1732
        %1734 = vrot.lane.b32.xlu0 %v1713, 64
        %v1735 = vpop.permute.xlu0 %1734
        %1738 = vxpose.xlu0.b32.start [1/16] %v1633, 128
        %1739 = vxpose.xlu0.b32.cont [2/16] %v1639, 128
        %1740 = vxpose.xlu0.b32.cont [3/16] 0.0, 128
        %1741 = vxpose.xlu0.b32.cont [4/16] 0.0, 128
        %1742 = vxpose.xlu0.b32.cont [5/16] 0.0, 128
        %1743 = vxpose.xlu0.b32.cont [6/16] 0.0, 128
        %1744 = vxpose.xlu0.b32.cont [7/16] 0.0, 128
        %1745 = vxpose.xlu0.b32.cont [8/16] 0.0, 128
        %1746 = vxpose.xlu0.b32.cont [9/16] 0.0, 128
        %1747 = vxpose.xlu0.b32.cont [10/16] 0.0, 128
        %1748 = vxpose.xlu0.b32.cont [11/16] 0.0, 128
        %1749 = vxpose.xlu0.b32.cont [12/16] 0.0, 128
        %1750 = vxpose.xlu0.b32.cont [13/16] 0.0, 128
        %1751 = vxpose.xlu0.b32.cont [14/16] 0.0, 128
        %1752 = vxpose.xlu0.b32.cont [15/16] 0.0, 128
        %1753 = vxpose.xlu0.b32.end [16/16] 0.0, 128
        %v1754 = vpop.trf.xlu0
        %v1755 = vpop.trf.xlu0
        %v1756 = vpop.trf.xlu0
        %v1757 = vpop.trf.xlu0
        %v1758 = vpop.trf.xlu0
        %v1759 = vpop.trf.xlu0
        %v1760 = vpop.trf.xlu0
        %v1761 = vpop.trf.xlu0
        %v1762 = vpop.trf.xlu0
        %v1763 = vpop.trf.xlu0
        %v1764 = vpop.trf.xlu0
        %v1765 = vpop.trf.xlu0
        %v1766 = vpop.trf.xlu0
        %v1767 = vpop.trf.xlu0
        %v1768 = vpop.trf.xlu0
        %v1769 = vpop.trf.xlu0
        %1770 = vxpose.xlu0.b32.start [1/16] %v1725, 128
        %1771 = vxpose.xlu0.b32.cont [2/16] %v1727, 128
        %1772 = vxpose.xlu0.b32.cont [3/16] 0.0, 128
        %1773 = vxpose.xlu0.b32.cont [4/16] 0.0, 128
        %1774 = vxpose.xlu0.b32.cont [5/16] 0.0, 128
        %1775 = vxpose.xlu0.b32.cont [6/16] 0.0, 128
        %1776 = vxpose.xlu0.b32.cont [7/16] 0.0, 128
        %1777 = vxpose.xlu0.b32.cont [8/16] 0.0, 128
        %1778 = vxpose.xlu0.b32.cont [9/16] 0.0, 128
        %1779 = vxpose.xlu0.b32.cont [10/16] 0.0, 128
        %1780 = vxpose.xlu0.b32.cont [11/16] 0.0, 128
        %1781 = vxpose.xlu0.b32.cont [12/16] 0.0, 128
        %1782 = vxpose.xlu0.b32.cont [13/16] 0.0, 128
        %1783 = vxpose.xlu0.b32.cont [14/16] 0.0, 128
        %1784 = vxpose.xlu0.b32.cont [15/16] 0.0, 128
        %1785 = vxpose.xlu0.b32.end [16/16] 0.0, 128
        %v1786 = vpop.trf.xlu0
        %v1787 = vpop.trf.xlu0
        %v1788 = vpop.trf.xlu0
        %v1789 = vpop.trf.xlu0
        %v1790 = vpop.trf.xlu0
        %v1791 = vpop.trf.xlu0
        %v1792 = vpop.trf.xlu0
        %v1793 = vpop.trf.xlu0
        %v1794 = vpop.trf.xlu0
        %v1795 = vpop.trf.xlu0
        %v1796 = vpop.trf.xlu0
        %v1797 = vpop.trf.xlu0
        %v1798 = vpop.trf.xlu0
        %v1799 = vpop.trf.xlu0
        %v1800 = vpop.trf.xlu0
        %v1801 = vpop.trf.xlu0
        %vm1802 = vcmask 523264
        %v1803 = vsel %vm1802, %v1631, 0
        %v1805 = vsel %vm1802, %v1637, 0
        %1807 = vmatprep.subr.mxu0 0.0
        %1808 = vmatpush1.msra.mxu0 0.0
        %1809 = vmatprep.subr.mxu0 0.0
        %1810 = vmatpush1.msra.mxu0 0.0
        %1811 = vmatprep.subr.mxu0 0.0
        %1812 = vmatpush1.msra.mxu0 0.0
        %1813 = vmatprep.subr.mxu0 0.0
        %1814 = vmatpush1.msra.mxu0 0.0
        %1815 = vmatprep.subr.mxu0 0.0
        %1816 = vmatpush1.msra.mxu0 0.0
        %1817 = vmatprep.subr.mxu0 0.0
        %1818 = vmatpush1.msra.mxu0 0.0
        %1819 = vmatprep.subr.mxu0 0.0
        %1820 = vmatpush1.msra.mxu0 0.0
        %1821 = vmatprep.subr.mxu0 0.0
        %1822 = vmatpush1.msra.mxu0 0.0
        %1823 = vmatprep.subr.mxu0 0.0
        %1824 = vmatpush1.msra.mxu0 %v1761
        %1825 = vmatprep.subr.mxu0 0.0
        %1826 = vmatpush1.msra.mxu0 %v1760
        %1827 = vmatprep.subr.mxu0 0.0
        %1828 = vmatpush1.msra.mxu0 %v1759
        %1829 = vmatprep.subr.mxu0 0.0
        %1830 = vmatpush1.msra.mxu0 %v1758
        %1831 = vmatprep.subr.mxu0 0.0
        %1832 = vmatpush1.msra.mxu0 %v1757
        %1833 = vmatprep.subr.mxu0 0.0
        %1834 = vmatpush1.msra.mxu0 %v1756
        %1835 = vmatprep.subr.mxu0 0.0
        %1836 = vmatpush1.msra.mxu0 %v1755
        %1837 = vmatprep.subr.mxu0 0.0
        %1838 = vmatpush1.msra.mxu0 %v1754
        %1839 = vmatprep.subr.mxu0 0.0
        %1840 = vmatpush2.msra.mxu0 0.0
        %1841 = vmatprep.subr.mxu0 0.0
        %1842 = vmatpush2.msra.mxu0 0.0
        %1843 = vmatprep.subr.mxu0 0.0
        %1844 = vmatpush2.msra.mxu0 0.0
        %1845 = vmatprep.subr.mxu0 0.0
        %1846 = vmatpush2.msra.mxu0 0.0
        %1847 = vmatprep.subr.mxu0 0.0
        %1848 = vmatpush2.msra.mxu0 0.0
        %1849 = vmatprep.subr.mxu0 0.0
        %1850 = vmatpush2.msra.mxu0 0.0
        %1851 = vmatprep.subr.mxu0 0.0
        %1852 = vmatpush2.msra.mxu0 0.0
        %1853 = vmatprep.subr.mxu0 0.0
        %1854 = vmatpush2.msra.mxu0 0.0
        %1855 = vmatprep.subr.mxu0 0.0
        %1856 = vmatpush2.msra.mxu0 0.0
        %1857 = vmatprep.subr.mxu0 0.0
        %1858 = vmatpush2.msra.mxu0 0.0
        %1859 = vmatprep.subr.mxu0 0.0
        %1860 = vmatpush2.msra.mxu0 0.0
        %1861 = vmatprep.subr.mxu0 0.0
        %1862 = vmatpush2.msra.mxu0 0.0
        %1863 = vmatprep.subr.mxu0 0.0
        %1864 = vmatpush2.msra.mxu0 0.0
        %1865 = vmatprep.subr.mxu0 0.0
        %1866 = vmatpush2.msra.mxu0 0.0
        %1867 = vmatprep.subr.mxu0 0.0
        %1868 = vmatpush2.msra.mxu0 0.0
        %1869 = vmatprep.subr.mxu0 0.0
        %1870 = vmatpush2.msra.mxu0 0.0
        %1871 = vmatprep.mubr.f32.mxu0 0.0
        %1872 = vmatmul.mubr.f32.gmra.mxu0 %v1803
        %v1873 = vpop.f32.mrf.mxu0
        %v1874 = vadd.f32 0.0, %v1873
        %v1875 = vpop.f32.mrf.mxu0
        %1876 = vmatprep.mubr.f32.mxu0 0.0
        %1877 = vmatmul.mubr.f32.gmra.mxu0 %v1805
        %v1878 = vpop.f32.mrf.mxu0
        %v1879 = vadd.f32 0.0, %v1878
        %v1880 = vpop.f32.mrf.mxu0
        %1881 = vdwg.mxu0
        %v1882 = vsel %vm1802, %v1719, 0
        %v1884 = vsel %vm1802, %v1721, 0
        %1886 = vmatprep.subr.mxu0 0.0
        %1887 = vmatpush1.msra.mxu0 0.0
        %1888 = vmatprep.subr.mxu0 0.0
        %1889 = vmatpush1.msra.mxu0 0.0
        %1890 = vmatprep.subr.mxu0 0.0
        %1891 = vmatpush1.msra.mxu0 0.0
        %1892 = vmatprep.subr.mxu0 0.0
        %1893 = vmatpush1.msra.mxu0 0.0
        %1894 = vmatprep.subr.mxu0 0.0
        %1895 = vmatpush1.msra.mxu0 0.0
        %1896 = vmatprep.subr.mxu0 0.0
        %1897 = vmatpush1.msra.mxu0 0.0
        %1898 = vmatprep.subr.mxu0 0.0
        %1899 = vmatpush1.msra.mxu0 0.0
        %1900 = vmatprep.subr.mxu0 0.0
        %1901 = vmatpush1.msra.mxu0 0.0
        %1902 = vmatprep.subr.mxu0 0.0
        %1903 = vmatpush1.msra.mxu0 %v1793
        %1904 = vmatprep.subr.mxu0 0.0
        %1905 = vmatpush1.msra.mxu0 %v1792
        %1906 = vmatprep.subr.mxu0 0.0
        %1907 = vmatpush1.msra.mxu0 %v1791
        %1908 = vmatprep.subr.mxu0 0.0
        %1909 = vmatpush1.msra.mxu0 %v1790
        %1910 = vmatprep.subr.mxu0 0.0
        %1911 = vmatpush1.msra.mxu0 %v1789
        %1912 = vmatprep.subr.mxu0 0.0
        %1913 = vmatpush1.msra.mxu0 %v1788
        %1914 = vmatprep.subr.mxu0 0.0
        %1915 = vmatpush1.msra.mxu0 %v1787
        %1916 = vmatprep.subr.mxu0 0.0
        %1917 = vmatpush1.msra.mxu0 %v1786
        %1918 = vmatprep.subr.mxu0 0.0
        %1919 = vmatpush2.msra.mxu0 0.0
        %1920 = vmatprep.subr.mxu0 0.0
        %1921 = vmatpush2.msra.mxu0 0.0
        %1922 = vmatprep.subr.mxu0 0.0
        %1923 = vmatpush2.msra.mxu0 0.0
        %1924 = vmatprep.subr.mxu0 0.0
        %1925 = vmatpush2.msra.mxu0 0.0
        %1926 = vmatprep.subr.mxu0 0.0
        %1927 = vmatpush2.msra.mxu0 0.0
        %1928 = vmatprep.subr.mxu0 0.0
        %1929 = vmatpush2.msra.mxu0 0.0
        %1930 = vmatprep.subr.mxu0 0.0
        %1931 = vmatpush2.msra.mxu0 0.0
        %1932 = vmatprep.subr.mxu0 0.0
        %1933 = vmatpush2.msra.mxu0 0.0
        %1934 = vmatprep.subr.mxu0 0.0
        %1935 = vmatpush2.msra.mxu0 0.0
        %1936 = vmatprep.subr.mxu0 0.0
        %1937 = vmatpush2.msra.mxu0 0.0
        %1938 = vmatprep.subr.mxu0 0.0
        %1939 = vmatpush2.msra.mxu0 0.0
        %1940 = vmatprep.subr.mxu0 0.0
        %1941 = vmatpush2.msra.mxu0 0.0
        %1942 = vmatprep.subr.mxu0 0.0
        %1943 = vmatpush2.msra.mxu0 0.0
        %1944 = vmatprep.subr.mxu0 0.0
        %1945 = vmatpush2.msra.mxu0 0.0
        %1946 = vmatprep.subr.mxu0 0.0
        %1947 = vmatpush2.msra.mxu0 0.0
        %1948 = vmatprep.subr.mxu0 0.0
        %1949 = vmatpush2.msra.mxu0 0.0
        %1950 = vmatprep.mubr.f32.mxu0 0.0
        %1951 = vmatmul.mubr.f32.gmra.mxu0 %v1882
        %v1952 = vpop.f32.mrf.mxu0
        %v1953 = vadd.f32 0.0, %v1952
        %v1954 = vpop.f32.mrf.mxu0
        %1955 = vmatprep.mubr.f32.mxu0 0.0
        %1956 = vmatmul.mubr.f32.gmra.mxu0 %v1884
        %v1957 = vpop.f32.mrf.mxu0
        %v1958 = vadd.f32 0.0, %v1957
        %v1959 = vpop.f32.mrf.mxu0
        %1960 = vdwg.mxu0
        %v1961 = vmul.f32 %v1874, 0.125
        %v1962 = vmul.f32 %v1879, 0.125
        %v1963 = vmul.f32 %v1953, 0.125
        %v1964 = vmul.f32 %v1958, 0.125
        %vm1965 = vcmp.gt.f32.partialorder %v677, 0.5
        %vm1966 = vcmp.gt.f32.partialorder %v678, 0.5
        %v1967 = vsel %vm1965, 1, 0
        %v1968 = vsel %vm1966, 1, 0
        %vm1969 = vcmp.eq.s32.totalorder %v1967, 1
        %vm1970 = vcmp.eq.s32.totalorder %v1968, 1
        %v1971 = vsel %vm1969, -1e+09, %v1961
        %v1972 = vsel %vm1970, -1e+09, %v1962
        %v1973 = vsel %vm1969, -1e+09, %v1963
        %v1974 = vsel %vm1970, -1e+09, %v1964
        %vm1975 = vcmask 130048
        %v1976 = vsel %vm1975, %v1971, -inf
        %1977 = vmax.xlane.f32.xlu0 %v1976
        %v1978 = vpop.xlane.xlu0 %1977
        %v1979 = vsel %vm1975, %v1972, -inf
        %1980 = vmax.xlane.f32.xlu0 %v1979
        %v1981 = vpop.xlane.xlu0 %1980
        %v1982 = vsel %vm1975, %v1973, -inf
        %1983 = vmax.xlane.f32.xlu0 %v1982
        %v1984 = vpop.xlane.xlu0 %1983
        %v1985 = vsel %vm1975, %v1974, -inf
        %1986 = vmax.xlane.f32.xlu0 %v1985
        %v1987 = vpop.xlane.xlu0 %1986
        %v1988 = vsub.f32 %v1971, %v1978
        %v1989 = vsub.f32 %v1972, %v1981
        %v1990 = vsub.f32 %v1973, %v1984
        %v1991 = vsub.f32 %v1974, %v1987
        %v1992 = vmul.f32 %v1988, 1.442695
        %v1993 = vpow.pop %v1992
        %v1994 = vmul.f32 %v1989, 1.442695
        %v1995 = vpow.pop %v1994
        %v1996 = vmul.f32 %v1990, 1.442695
        %v1997 = vpow.pop %v1996
        %v1998 = vmul.f32 %v1991, 1.442695
        %v1999 = vpow.pop %v1998
        %v2000 = vsel %vm1975, %v1993, 0.0
        %2001 = vadd.xlane.f32.xlu0 %v2000
        %v2002 = vpop.xlane.xlu0 %2001
        %v2003 = vsel %vm1975, %v1995, 0.0
        %2004 = vadd.xlane.f32.xlu0 %v2003
        %v2005 = vpop.xlane.xlu0 %2004
        %v2006 = vsel %vm1975, %v1997, 0.0
        %2007 = vadd.xlane.f32.xlu0 %v2006
        %v2008 = vpop.xlane.xlu0 %2007
        %v2009 = vsel %vm1975, %v1999, 0.0
        %2010 = vadd.xlane.f32.xlu0 %v2009
        %v2011 = vpop.xlane.xlu0 %2010
        %v2012 = vrcp.pop %v2002
        %v2013 = vrcp.pop %v2005
        %v2014 = vrcp.pop %v2008
        %v2015 = vrcp.pop %v2011
        %v2016 = vmul.f32 %v1993, %v2012
        %v2017 = vmul.f32 %v1995, %v2013
        %v2018 = vmul.f32 %v1997, %v2014
        %v2019 = vmul.f32 %v1999, %v2015
        %2020 = vst.msk [vmem:[%s659] sm:$0xff] %vm1975, %v2016
        %2021 = vst.msk [vmem:[%s659 + $0x8] sm:$0xff] %vm1975, %v2017
        %2022 = vst.msk [vmem:[%s659 + $0x10] sm:$0xff] %vm1975, %v2018
        %2023 = vst.msk [vmem:[%s659 + $0x18] sm:$0xff] %vm1975, %v2019
        %2024 = vxpose.xlu0.b32.start [1/16] %v1708, 128
        %2025 = vxpose.xlu0.b32.cont [2/16] %v1713, 128
        %2026 = vxpose.xlu0.b32.cont [3/16] 0.0, 128
        %2027 = vxpose.xlu0.b32.cont [4/16] 0.0, 128
        %2028 = vxpose.xlu0.b32.cont [5/16] 0.0, 128
        %2029 = vxpose.xlu0.b32.cont [6/16] 0.0, 128
        %2030 = vxpose.xlu0.b32.cont [7/16] 0.0, 128
        %2031 = vxpose.xlu0.b32.cont [8/16] 0.0, 128
        %2032 = vxpose.xlu0.b32.cont [9/16] 0.0, 128
        %2033 = vxpose.xlu0.b32.cont [10/16] 0.0, 128
        %2034 = vxpose.xlu0.b32.cont [11/16] 0.0, 128
        %2035 = vxpose.xlu0.b32.cont [12/16] 0.0, 128
        %2036 = vxpose.xlu0.b32.cont [13/16] 0.0, 128
        %2037 = vxpose.xlu0.b32.cont [14/16] 0.0, 128
        %2038 = vxpose.xlu0.b32.cont [15/16] 0.0, 128
        %2039 = vxpose.xlu0.b32.end [16/16] 0.0, 128
        %v2040 = vpop.trf.xlu0
        %v2041 = vpop.trf.xlu0
        %v2042 = vpop.trf.xlu0
        %v2043 = vpop.trf.xlu0
        %v2044 = vpop.trf.xlu0
        %v2045 = vpop.trf.xlu0
        %v2046 = vpop.trf.xlu0
        %v2047 = vpop.trf.xlu0
        %v2048 = vpop.trf.xlu0
        %v2049 = vpop.trf.xlu0
        %v2050 = vpop.trf.xlu0
        %v2051 = vpop.trf.xlu0
        %v2052 = vpop.trf.xlu0
        %v2053 = vpop.trf.xlu0
        %v2054 = vpop.trf.xlu0
        %v2055 = vpop.trf.xlu0
        %2056 = vxpose.xlu0.b32.start [1/16] %v1733, 128
        %2057 = vxpose.xlu0.b32.cont [2/16] %v1735, 128
        %2058 = vxpose.xlu0.b32.cont [3/16] 0.0, 128
        %2059 = vxpose.xlu0.b32.cont [4/16] 0.0, 128
        %2060 = vxpose.xlu0.b32.cont [5/16] 0.0, 128
        %2061 = vxpose.xlu0.b32.cont [6/16] 0.0, 128
        %2062 = vxpose.xlu0.b32.cont [7/16] 0.0, 128
        %2063 = vxpose.xlu0.b32.cont [8/16] 0.0, 128
        %2064 = vxpose.xlu0.b32.cont [9/16] 0.0, 128
        %2065 = vxpose.xlu0.b32.cont [10/16] 0.0, 128
        %2066 = vxpose.xlu0.b32.cont [11/16] 0.0, 128
        %2067 = vxpose.xlu0.b32.cont [12/16] 0.0, 128
        %2068 = vxpose.xlu0.b32.cont [13/16] 0.0, 128
        %2069 = vxpose.xlu0.b32.cont [14/16] 0.0, 128
        %2070 = vxpose.xlu0.b32.cont [15/16] 0.0, 128
        %2071 = vxpose.xlu0.b32.end [16/16] 0.0, 128
        %v2072 = vpop.trf.xlu0
        %v2073 = vpop.trf.xlu0
        %v2074 = vpop.trf.xlu0
        %v2075 = vpop.trf.xlu0
        %v2076 = vpop.trf.xlu0
        %v2077 = vpop.trf.xlu0
        %v2078 = vpop.trf.xlu0
        %v2079 = vpop.trf.xlu0
        %v2080 = vpop.trf.xlu0
        %v2081 = vpop.trf.xlu0
        %v2082 = vpop.trf.xlu0
        %v2083 = vpop.trf.xlu0
        %v2084 = vpop.trf.xlu0
        %v2085 = vpop.trf.xlu0
        %v2086 = vpop.trf.xlu0
        %v2087 = vpop.trf.xlu0
        %v2089 = vsel %vm1975, %v2040, 0
        %v2092 = vsel %vm1975, %v2041, 0
        %v2095 = vsel %vm1975, %v2042, 0
        %v2098 = vsel %vm1975, %v2043, 0
        %v2101 = vsel %vm1975, %v2044, 0
        %v2104 = vsel %vm1975, %v2045, 0
        %v2107 = vsel %vm1975, %v2046, 0
        %v2110 = vsel %vm1975, %v2047, 0
        %v2113 = vsel %vm1975, %v2016, 0
        %v2116 = vsel %vm1975, %v2017, 0
        %2118 = vmatprep.subr.mxu0 0.0
        %2119 = vmatpush1.xpose.msra.mxu0 0.0
        %2120 = vmatprep.subr.mxu0 0.0
        %2121 = vmatpush1.xpose.msra.mxu0 0.0
        %2122 = vmatprep.subr.mxu0 0.0
        %2123 = vmatpush1.xpose.msra.mxu0 0.0
        %2124 = vmatprep.subr.mxu0 0.0
        %2125 = vmatpush1.xpose.msra.mxu0 0.0
        %2126 = vmatprep.subr.mxu0 0.0
        %2127 = vmatpush1.xpose.msra.mxu0 0.0
        %2128 = vmatprep.subr.mxu0 0.0
        %2129 = vmatpush1.xpose.msra.mxu0 0.0
        %2130 = vmatprep.subr.mxu0 0.0
        %2131 = vmatpush1.xpose.msra.mxu0 0.0
        %2132 = vmatprep.subr.mxu0 0.0
        %2133 = vmatpush1.xpose.msra.mxu0 0.0
        %2134 = vmatprep.subr.mxu0 0.0
        %2135 = vmatpush1.xpose.msra.mxu0 0.0
        %2136 = vmatprep.subr.mxu0 0.0
        %2137 = vmatpush1.xpose.msra.mxu0 0.0
        %2138 = vmatprep.subr.mxu0 0.0
        %2139 = vmatpush1.xpose.msra.mxu0 0.0
        %2140 = vmatprep.subr.mxu0 0.0
        %2141 = vmatpush1.xpose.msra.mxu0 0.0
        %2142 = vmatprep.subr.mxu0 0.0
        %2143 = vmatpush1.xpose.msra.mxu0 0.0
        %2144 = vmatprep.subr.mxu0 0.0
        %2145 = vmatpush1.xpose.msra.mxu0 0.0
        %2146 = vmatprep.subr.mxu0 0.0
        %2147 = vmatpush1.xpose.msra.mxu0 %v2116
        %2148 = vmatprep.subr.mxu0 0.0
        %2149 = vmatpush1.xpose.msra.mxu0 %v2113
        %2150 = vmatprep.subr.mxu0 0.0
        %2151 = vmatpush2.xpose.msra.mxu0 0.0
        %2152 = vmatprep.subr.mxu0 0.0
        %2153 = vmatpush2.xpose.msra.mxu0 0.0
        %2154 = vmatprep.subr.mxu0 0.0
        %2155 = vmatpush2.xpose.msra.mxu0 0.0
        %2156 = vmatprep.subr.mxu0 0.0
        %2157 = vmatpush2.xpose.msra.mxu0 0.0
        %2158 = vmatprep.subr.mxu0 0.0
        %2159 = vmatpush2.xpose.msra.mxu0 0.0
        %2160 = vmatprep.subr.mxu0 0.0
        %2161 = vmatpush2.xpose.msra.mxu0 0.0
        %2162 = vmatprep.subr.mxu0 0.0
        %2163 = vmatpush2.xpose.msra.mxu0 0.0
        %2164 = vmatprep.subr.mxu0 0.0
        %2165 = vmatpush2.xpose.msra.mxu0 0.0
        %2166 = vmatprep.subr.mxu0 0.0
        %2167 = vmatpush2.xpose.msra.mxu0 0.0
        %2168 = vmatprep.subr.mxu0 0.0
        %2169 = vmatpush2.xpose.msra.mxu0 0.0
        %2170 = vmatprep.subr.mxu0 0.0
        %2171 = vmatpush2.xpose.msra.mxu0 0.0
        %2172 = vmatprep.subr.mxu0 0.0
        %2173 = vmatpush2.xpose.msra.mxu0 0.0
        %2174 = vmatprep.subr.mxu0 0.0
        %2175 = vmatpush2.xpose.msra.mxu0 0.0
        %2176 = vmatprep.subr.mxu0 0.0
        %2177 = vmatpush2.xpose.msra.mxu0 0.0
        %2178 = vmatprep.subr.mxu0 0.0
        %2179 = vmatpush2.xpose.msra.mxu0 0.0
        %2180 = vmatprep.subr.mxu0 0.0
        %2181 = vmatpush2.xpose.msra.mxu0 0.0
        %2182 = vmatprep.mubr.f32.mxu0 0.0
        %2183 = vmatmul.mubr.f32.gmra.mxu0 %v2089
        %v2184 = vpop.f32.mrf.mxu0
        %v2185 = vadd.f32 0.0, %v2184
        %v2186 = vpop.f32.mrf.mxu0
        %2187 = vmatprep.mubr.f32.mxu0 0.0
        %2188 = vmatmul.mubr.f32.gmra.mxu0 %v2092
        %v2189 = vpop.f32.mrf.mxu0
        %v2190 = vadd.f32 0.0, %v2189
        %v2191 = vpop.f32.mrf.mxu0
        %2192 = vmatprep.mubr.f32.mxu0 0.0
        %2193 = vmatmul.mubr.f32.gmra.mxu0 %v2095
        %v2194 = vpop.f32.mrf.mxu0
        %v2195 = vadd.f32 0.0, %v2194
        %v2196 = vpop.f32.mrf.mxu0
        %2197 = vmatprep.mubr.f32.mxu0 0.0
        %2198 = vmatmul.mubr.f32.gmra.mxu0 %v2098
        %v2199 = vpop.f32.mrf.mxu0
        %v2200 = vadd.f32 0.0, %v2199
        %v2201 = vpop.f32.mrf.mxu0
        %2202 = vmatprep.mubr.f32.mxu0 0.0
        %2203 = vmatmul.mubr.f32.gmra.mxu0 %v2101
        %v2204 = vpop.f32.mrf.mxu0
        %v2205 = vadd.f32 0.0, %v2204
        %v2206 = vpop.f32.mrf.mxu0
        %2207 = vmatprep.mubr.f32.mxu0 0.0
        %2208 = vmatmul.mubr.f32.gmra.mxu0 %v2104
        %v2209 = vpop.f32.mrf.mxu0
        %v2210 = vadd.f32 0.0, %v2209
        %v2211 = vpop.f32.mrf.mxu0
        %2212 = vmatprep.mubr.f32.mxu0 0.0
        %2213 = vmatmul.mubr.f32.gmra.mxu0 %v2107
        %v2214 = vpop.f32.mrf.mxu0
        %v2215 = vadd.f32 0.0, %v2214
        %v2216 = vpop.f32.mrf.mxu0
        %2217 = vmatprep.mubr.f32.mxu0 0.0
        %2218 = vmatmul.mubr.f32.gmra.mxu0 %v2110
        %v2219 = vpop.f32.mrf.mxu0
        %v2220 = vadd.f32 0.0, %v2219
        %v2221 = vpop.f32.mrf.mxu0
        %2222 = vdwg.mxu0
        %v2224 = vsel %vm1975, %v2072, 0
        %v2227 = vsel %vm1975, %v2073, 0
        %v2230 = vsel %vm1975, %v2074, 0
        %v2233 = vsel %vm1975, %v2075, 0
        %v2236 = vsel %vm1975, %v2076, 0
        %v2239 = vsel %vm1975, %v2077, 0
        %v2242 = vsel %vm1975, %v2078, 0
        %v2245 = vsel %vm1975, %v2079, 0
        %v2248 = vsel %vm1975, %v2018, 0
        %v2251 = vsel %vm1975, %v2019, 0
        %2253 = vmatprep.subr.mxu0 0.0
        %2254 = vmatpush1.xpose.msra.mxu0 0.0
        %2255 = vmatprep.subr.mxu0 0.0
        %2256 = vmatpush1.xpose.msra.mxu0 0.0
        %2257 = vmatprep.subr.mxu0 0.0
        %2258 = vmatpush1.xpose.msra.mxu0 0.0
        %2259 = vmatprep.subr.mxu0 0.0
        %2260 = vmatpush1.xpose.msra.mxu0 0.0
        %2261 = vmatprep.subr.mxu0 0.0
        %2262 = vmatpush1.xpose.msra.mxu0 0.0
        %2263 = vmatprep.subr.mxu0 0.0
        %2264 = vmatpush1.xpose.msra.mxu0 0.0
        %2265 = vmatprep.subr.mxu0 0.0
        %2266 = vmatpush1.xpose.msra.mxu0 0.0
        %2267 = vmatprep.subr.mxu0 0.0
        %2268 = vmatpush1.xpose.msra.mxu0 0.0
        %2269 = vmatprep.subr.mxu0 0.0
        %2270 = vmatpush1.xpose.msra.mxu0 0.0
        %2271 = vmatprep.subr.mxu0 0.0
        %2272 = vmatpush1.xpose.msra.mxu0 0.0
        %2273 = vmatprep.subr.mxu0 0.0
        %2274 = vmatpush1.xpose.msra.mxu0 0.0
        %2275 = vmatprep.subr.mxu0 0.0
        %2276 = vmatpush1.xpose.msra.mxu0 0.0
        %2277 = vmatprep.subr.mxu0 0.0
        %2278 = vmatpush1.xpose.msra.mxu0 0.0
        %2279 = vmatprep.subr.mxu0 0.0
        %2280 = vmatpush1.xpose.msra.mxu0 0.0
        %2281 = vmatprep.subr.mxu0 0.0
        %2282 = vmatpush1.xpose.msra.mxu0 %v2251
        %2283 = vmatprep.subr.mxu0 0.0
        %2284 = vmatpush1.xpose.msra.mxu0 %v2248
        %2285 = vmatprep.subr.mxu0 0.0
        %2286 = vmatpush2.xpose.msra.mxu0 0.0
        %2287 = vmatprep.subr.mxu0 0.0
        %2288 = vmatpush2.xpose.msra.mxu0 0.0
        %2289 = vmatprep.subr.mxu0 0.0
        %2290 = vmatpush2.xpose.msra.mxu0 0.0
        %2291 = vmatprep.subr.mxu0 0.0
        %2292 = vmatpush2.xpose.msra.mxu0 0.0
        %2293 = vmatprep.subr.mxu0 0.0
        %2294 = vmatpush2.xpose.msra.mxu0 0.0
        %2295 = vmatprep.subr.mxu0 0.0
        %2296 = vmatpush2.xpose.msra.mxu0 0.0
        %2297 = vmatprep.subr.mxu0 0.0
        %2298 = vmatpush2.xpose.msra.mxu0 0.0
        %2299 = vmatprep.subr.mxu0 0.0
        %2300 = vmatpush2.xpose.msra.mxu0 0.0
        %2301 = vmatprep.subr.mxu0 0.0
        %2302 = vmatpush2.xpose.msra.mxu0 0.0
        %2303 = vmatprep.subr.mxu0 0.0
        %2304 = vmatpush2.xpose.msra.mxu0 0.0
        %2305 = vmatprep.subr.mxu0 0.0
        %2306 = vmatpush2.xpose.msra.mxu0 0.0
        %2307 = vmatprep.subr.mxu0 0.0
        %2308 = vmatpush2.xpose.msra.mxu0 0.0
        %2309 = vmatprep.subr.mxu0 0.0
        %2310 = vmatpush2.xpose.msra.mxu0 0.0
        %2311 = vmatprep.subr.mxu0 0.0
        %2312 = vmatpush2.xpose.msra.mxu0 0.0
        %2313 = vmatprep.subr.mxu0 0.0
        %2314 = vmatpush2.xpose.msra.mxu0 0.0
        %2315 = vmatprep.subr.mxu0 0.0
        %2316 = vmatpush2.xpose.msra.mxu0 0.0
        %2317 = vmatprep.mubr.f32.mxu0 0.0
        %2318 = vmatmul.mubr.f32.gmra.mxu0 %v2224
        %v2319 = vpop.f32.mrf.mxu0
        %v2320 = vadd.f32 0.0, %v2319
        %v2321 = vpop.f32.mrf.mxu0
        %2322 = vmatprep.mubr.f32.mxu0 0.0
        %2323 = vmatmul.mubr.f32.gmra.mxu0 %v2227
        %v2324 = vpop.f32.mrf.mxu0
        %v2325 = vadd.f32 0.0, %v2324
        %v2326 = vpop.f32.mrf.mxu0
        %2327 = vmatprep.mubr.f32.mxu0 0.0
        %2328 = vmatmul.mubr.f32.gmra.mxu0 %v2230
        %v2329 = vpop.f32.mrf.mxu0
        %v2330 = vadd.f32 0.0, %v2329
        %v2331 = vpop.f32.mrf.mxu0
        %2332 = vmatprep.mubr.f32.mxu0 0.0
        %2333 = vmatmul.mubr.f32.gmra.mxu0 %v2233
        %v2334 = vpop.f32.mrf.mxu0
        %v2335 = vadd.f32 0.0, %v2334
        %v2336 = vpop.f32.mrf.mxu0
        %2337 = vmatprep.mubr.f32.mxu0 0.0
        %2338 = vmatmul.mubr.f32.gmra.mxu0 %v2236
        %v2339 = vpop.f32.mrf.mxu0
        %v2340 = vadd.f32 0.0, %v2339
        %v2341 = vpop.f32.mrf.mxu0
        %2342 = vmatprep.mubr.f32.mxu0 0.0
        %2343 = vmatmul.mubr.f32.gmra.mxu0 %v2239
        %v2344 = vpop.f32.mrf.mxu0
        %v2345 = vadd.f32 0.0, %v2344
        %v2346 = vpop.f32.mrf.mxu0
        %2347 = vmatprep.mubr.f32.mxu0 0.0
        %2348 = vmatmul.mubr.f32.gmra.mxu0 %v2242
        %v2349 = vpop.f32.mrf.mxu0
        %v2350 = vadd.f32 0.0, %v2349
        %v2351 = vpop.f32.mrf.mxu0
        %2352 = vmatprep.mubr.f32.mxu0 0.0
        %2353 = vmatmul.mubr.f32.gmra.mxu0 %v2245
        %v2354 = vpop.f32.mrf.mxu0
        %v2355 = vadd.f32 0.0, %v2354
        %v2356 = vpop.f32.mrf.mxu0
        %2357 = vdwg.mxu0
        %2358 = vxpose.xlu0.b32.start [1/16] %v2185, 128
        %2359 = vxpose.xlu0.b32.cont [2/16] %v2190, 128
        %2360 = vxpose.xlu0.b32.cont [3/16] %v2195, 128
        %2361 = vxpose.xlu0.b32.cont [4/16] %v2200, 128
        %2362 = vxpose.xlu0.b32.cont [5/16] %v2205, 128
        %2363 = vxpose.xlu0.b32.cont [6/16] %v2210, 128
        %2364 = vxpose.xlu0.b32.cont [7/16] %v2215, 128
        %2365 = vxpose.xlu0.b32.cont [8/16] %v2220, 128
        %2366 = vxpose.xlu0.b32.cont [9/16] 0.0, 128
        %2367 = vxpose.xlu0.b32.cont [10/16] 0.0, 128
        %2368 = vxpose.xlu0.b32.cont [11/16] 0.0, 128
        %2369 = vxpose.xlu0.b32.cont [12/16] 0.0, 128
        %2370 = vxpose.xlu0.b32.cont [13/16] 0.0, 128
        %2371 = vxpose.xlu0.b32.cont [14/16] 0.0, 128
        %2372 = vxpose.xlu0.b32.cont [15/16] 0.0, 128
        %2373 = vxpose.xlu0.b32.end [16/16] 0.0, 128
        %v2374 = vpop.trf.xlu0
        %v2375 = vpop.trf.xlu0
        %v2376 = vpop.trf.xlu0
        %v2377 = vpop.trf.xlu0
        %v2378 = vpop.trf.xlu0
        %v2379 = vpop.trf.xlu0
        %v2380 = vpop.trf.xlu0
        %v2381 = vpop.trf.xlu0
        %v2382 = vpop.trf.xlu0
        %v2383 = vpop.trf.xlu0
        %v2384 = vpop.trf.xlu0
        %v2385 = vpop.trf.xlu0
        %v2386 = vpop.trf.xlu0
        %v2387 = vpop.trf.xlu0
        %v2388 = vpop.trf.xlu0
        %v2389 = vpop.trf.xlu0
        %2390 = vxpose.xlu0.b32.start [1/16] %v2320, 128
        %2391 = vxpose.xlu0.b32.cont [2/16] %v2325, 128
        %2392 = vxpose.xlu0.b32.cont [3/16] %v2330, 128
        %2393 = vxpose.xlu0.b32.cont [4/16] %v2335, 128
        %2394 = vxpose.xlu0.b32.cont [5/16] %v2340, 128
        %2395 = vxpose.xlu0.b32.cont [6/16] %v2345, 128
        %2396 = vxpose.xlu0.b32.cont [7/16] %v2350, 128
        %2397 = vxpose.xlu0.b32.cont [8/16] %v2355, 128
        %2398 = vxpose.xlu0.b32.cont [9/16] 0.0, 128
        %2399 = vxpose.xlu0.b32.cont [10/16] 0.0, 128
        %2400 = vxpose.xlu0.b32.cont [11/16] 0.0, 128
        %2401 = vxpose.xlu0.b32.cont [12/16] 0.0, 128
        %2402 = vxpose.xlu0.b32.cont [13/16] 0.0, 128
        %2403 = vxpose.xlu0.b32.cont [14/16] 0.0, 128
        %2404 = vxpose.xlu0.b32.cont [15/16] 0.0, 128
        %2405 = vxpose.xlu0.b32.end [16/16] 0.0, 128
        %v2406 = vpop.trf.xlu0
        %v2407 = vpop.trf.xlu0
        %v2408 = vpop.trf.xlu0
        %v2409 = vpop.trf.xlu0
        %v2410 = vpop.trf.xlu0
        %v2411 = vpop.trf.xlu0
        %v2412 = vpop.trf.xlu0
        %v2413 = vpop.trf.xlu0
        %v2414 = vpop.trf.xlu0
        %v2415 = vpop.trf.xlu0
        %v2416 = vpop.trf.xlu0
        %v2417 = vpop.trf.xlu0
        %v2418 = vpop.trf.xlu0
        %v2419 = vpop.trf.xlu0
        %v2420 = vpop.trf.xlu0
        %v2421 = vpop.trf.xlu0
        %v2422 = vcombine.high %v2374, 0.0
        %v2424 = vunpack.c.l.s4 1983009808
        %v2425 = vunpack.c.0.s8 %v2424
        %v2426 = vlaneseq
        %v2427 = vshrl.u32 %v2426, 7
        %v2428 = vsub.s32 %v2425, %v2427
        %v2429 = vrot.slane %v2374, %v2428
        %v2431 = vunpack.c.l.s4 1983009808
        %v2432 = vunpack.c.0.s8 %v2431
        %v2433 = vlaneseq
        %v2434 = vshrl.u32 %v2433, 7
        %v2435 = vsub.s32 %v2432, %v2434
        %v2436 = vrot.slane %v2422, %v2435
        %v2437 = vcombine.high %v2406, 0.0
        %v2439 = vunpack.c.l.s4 1983009808
        %v2440 = vunpack.c.0.s8 %v2439
        %v2441 = vlaneseq
        %v2442 = vshrl.u32 %v2441, 7
        %v2443 = vsub.s32 %v2440, %v2442
        %v2444 = vrot.slane %v2406, %v2443
        %v2446 = vunpack.c.l.s4 1983009808
        %v2447 = vunpack.c.0.s8 %v2446
        %v2448 = vlaneseq
        %v2449 = vshrl.u32 %v2448, 7
        %v2450 = vsub.s32 %v2447, %v2449
        %v2451 = vrot.slane %v2437, %v2450
        %v2452 = vcombine.low %v2429, %v2444
        %v2453 = vcombine.high %v2429, %v2444
        %v2455 = vunpack.c.l.s4 1934713408
        %v2456 = vunpack.c.0.s8 %v2455
        %v2457 = vlaneseq
        %v2458 = vshrl.u32 %v2457, 7
        %v2459 = vsub.s32 %v2456, %v2458
        %v2460 = vrot.slane %v2452, %v2459
        %v2462 = vunpack.c.l.s4 1934713408
        %v2463 = vunpack.c.0.s8 %v2462
        %v2464 = vlaneseq
        %v2465 = vshrl.u32 %v2464, 7
        %v2466 = vsub.s32 %v2463, %v2465
        %v2467 = vrot.slane %v2453, %v2466
        %v2468 = vcombine.low %v2436, %v2451
        %v2469 = vcombine.high %v2436, %v2451
        %v2471 = vunpack.c.l.s4 1934713408
        %v2472 = vunpack.c.0.s8 %v2471
        %v2473 = vlaneseq
        %v2474 = vshrl.u32 %v2473, 7
        %v2475 = vsub.s32 %v2472, %v2474
        %v2476 = vrot.slane %v2468, %v2475
        %v2478 = vunpack.c.l.s4 1934713408
        %v2479 = vunpack.c.0.s8 %v2478
        %v2480 = vlaneseq
        %v2481 = vshrl.u32 %v2480, 7
        %v2482 = vsub.s32 %v2479, %v2481
        %v2483 = vrot.slane %v2469, %v2482
        %v2484 = vcombine.high %v2460, 0.0
        %v2485 = vcombine.high %v2467, 0.0
        %v2486 = vcombine.high %v2476, 0.0
        %v2487 = vcombine.high %v2483, 0.0
        %v2488 = vcombine.high %v2375, 0.0
        %v2490 = vunpack.c.l.s4 1983009808
        %v2491 = vunpack.c.0.s8 %v2490
        %v2492 = vlaneseq
        %v2493 = vshrl.u32 %v2492, 7
        %v2494 = vsub.s32 %v2491, %v2493
        %v2495 = vrot.slane %v2375, %v2494
        %v2497 = vunpack.c.l.s4 1983009808
        %v2498 = vunpack.c.0.s8 %v2497
        %v2499 = vlaneseq
        %v2500 = vshrl.u32 %v2499, 7
        %v2501 = vsub.s32 %v2498, %v2500
        %v2502 = vrot.slane %v2488, %v2501
        %v2503 = vcombine.high %v2407, 0.0
        %v2505 = vunpack.c.l.s4 1983009808
        %v2506 = vunpack.c.0.s8 %v2505
        %v2507 = vlaneseq
        %v2508 = vshrl.u32 %v2507, 7
        %v2509 = vsub.s32 %v2506, %v2508
        %v2510 = vrot.slane %v2407, %v2509
        %v2512 = vunpack.c.l.s4 1983009808
        %v2513 = vunpack.c.0.s8 %v2512
        %v2514 = vlaneseq
        %v2515 = vshrl.u32 %v2514, 7
        %v2516 = vsub.s32 %v2513, %v2515
        %v2517 = vrot.slane %v2503, %v2516
        %v2518 = vcombine.low %v2495, %v2510
        %v2519 = vcombine.high %v2495, %v2510
        %v2521 = vunpack.c.l.s4 1934713408
        %v2522 = vunpack.c.0.s8 %v2521
        %v2523 = vlaneseq
        %v2524 = vshrl.u32 %v2523, 7
        %v2525 = vsub.s32 %v2522, %v2524
        %v2526 = vrot.slane %v2518, %v2525
        %v2528 = vunpack.c.l.s4 1934713408
        %v2529 = vunpack.c.0.s8 %v2528
        %v2530 = vlaneseq
        %v2531 = vshrl.u32 %v2530, 7
        %v2532 = vsub.s32 %v2529, %v2531
        %v2533 = vrot.slane %v2519, %v2532
        %v2534 = vcombine.low %v2502, %v2517
        %v2535 = vcombine.high %v2502, %v2517
        %v2537 = vunpack.c.l.s4 1934713408
        %v2538 = vunpack.c.0.s8 %v2537
        %v2539 = vlaneseq
        %v2540 = vshrl.u32 %v2539, 7
        %v2541 = vsub.s32 %v2538, %v2540
        %v2542 = vrot.slane %v2534, %v2541
        %v2544 = vunpack.c.l.s4 1934713408
        %v2545 = vunpack.c.0.s8 %v2544
        %v2546 = vlaneseq
        %v2547 = vshrl.u32 %v2546, 7
        %v2548 = vsub.s32 %v2545, %v2547
        %v2549 = vrot.slane %v2535, %v2548
        %v2550 = vcombine.high %v2526, 0.0
        %v2551 = vcombine.high %v2533, 0.0
        %v2552 = vcombine.high %v2542, 0.0
        %v2553 = vcombine.high %v2549, 0.0
        %v2554 = vcombine.low %v2460, %v2467
        %v2556 = vunpack.c.l.s4 1983009808
        %v2557 = vunpack.c.0.s8 %v2556
        %v2558 = vlaneseq
        %v2559 = vshrl.u32 %v2558, 7
        %v2560 = vsub.s32 %v2557, %v2559
        %v2561 = vrot.slane %v2554, %v2560
        %v2562 = vcombine.low %v2484, %v2485
        %v2564 = vunpack.c.l.s4 1983009808
        %v2565 = vunpack.c.0.s8 %v2564
        %v2566 = vlaneseq
        %v2567 = vshrl.u32 %v2566, 7
        %v2568 = vsub.s32 %v2565, %v2567
        %v2569 = vrot.slane %v2562, %v2568
        %v2570 = vcombine.low %v2476, %v2483
        %v2572 = vunpack.c.l.s4 1983009808
        %v2573 = vunpack.c.0.s8 %v2572
        %v2574 = vlaneseq
        %v2575 = vshrl.u32 %v2574, 7
        %v2576 = vsub.s32 %v2573, %v2575
        %v2577 = vrot.slane %v2570, %v2576
        %v2578 = vcombine.low %v2486, %v2487
        %v2580 = vunpack.c.l.s4 1983009808
        %v2581 = vunpack.c.0.s8 %v2580
        %v2582 = vlaneseq
        %v2583 = vshrl.u32 %v2582, 7
        %v2584 = vsub.s32 %v2581, %v2583
        %v2585 = vrot.slane %v2578, %v2584
        %v2586 = vcombine.low %v2561, %v2569
        %v2588 = vunpack.c.l.s4 1934713408
        %v2589 = vunpack.c.0.s8 %v2588
        %v2590 = vlaneseq
        %v2591 = vshrl.u32 %v2590, 7
        %v2592 = vsub.s32 %v2589, %v2591
        %v2593 = vrot.slane %v2586, %v2592
        %v2594 = vcombine.low %v2577, %v2585
        %v2596 = vunpack.c.l.s4 1934713408
        %v2597 = vunpack.c.0.s8 %v2596
        %v2598 = vlaneseq
        %v2599 = vshrl.u32 %v2598, 7
        %v2600 = vsub.s32 %v2597, %v2599
        %v2601 = vrot.slane %v2594, %v2600
        %v2602 = vcombine.low %v2593, %v2601
        %v2603 = vcombine.high %v2593, %v2601
        %v2604 = vcombine.low %v2526, %v2533
        %v2606 = vunpack.c.l.s4 1983009808
        %v2607 = vunpack.c.0.s8 %v2606
        %v2608 = vlaneseq
        %v2609 = vshrl.u32 %v2608, 7
        %v2610 = vsub.s32 %v2607, %v2609
        %v2611 = vrot.slane %v2604, %v2610
        %v2612 = vcombine.low %v2550, %v2551
        %v2614 = vunpack.c.l.s4 1983009808
        %v2615 = vunpack.c.0.s8 %v2614
        %v2616 = vlaneseq
        %v2617 = vshrl.u32 %v2616, 7
        %v2618 = vsub.s32 %v2615, %v2617
        %v2619 = vrot.slane %v2612, %v2618
        %v2620 = vcombine.low %v2542, %v2549
        %v2622 = vunpack.c.l.s4 1983009808
        %v2623 = vunpack.c.0.s8 %v2622
        %v2624 = vlaneseq
        %v2625 = vshrl.u32 %v2624, 7
        %v2626 = vsub.s32 %v2623, %v2625
        %v2627 = vrot.slane %v2620, %v2626
        %v2628 = vcombine.low %v2552, %v2553
        %v2630 = vunpack.c.l.s4 1983009808
        %v2631 = vunpack.c.0.s8 %v2630
        %v2632 = vlaneseq
        %v2633 = vshrl.u32 %v2632, 7
        %v2634 = vsub.s32 %v2631, %v2633
        %v2635 = vrot.slane %v2628, %v2634
        %v2636 = vcombine.low %v2611, %v2619
        %v2638 = vunpack.c.l.s4 1934713408
        %v2639 = vunpack.c.0.s8 %v2638
        %v2640 = vlaneseq
        %v2641 = vshrl.u32 %v2640, 7
        %v2642 = vsub.s32 %v2639, %v2641
        %v2643 = vrot.slane %v2636, %v2642
        %v2644 = vcombine.low %v2627, %v2635
        %v2646 = vunpack.c.l.s4 1934713408
        %v2647 = vunpack.c.0.s8 %v2646
        %v2648 = vlaneseq
        %v2649 = vshrl.u32 %v2648, 7
        %v2650 = vsub.s32 %v2647, %v2649
        %v2651 = vrot.slane %v2644, %v2650
        %v2652 = vcombine.low %v2643, %v2651
        %v2653 = vcombine.high %v2643, %v2651
        %2656 = vrot.lane.b32.xlu0 %v2603, 64
        %v2657 = vpop.permute.xlu0 %2656
        %2658 = vrot.lane.b32.xlu0 %v2653, 64
        %v2659 = vpop.permute.xlu0 %2658
        %v2662 = vsel %vm1802, %v2602, %v2657
        %v2663 = vsel %vm1802, %v2652, %v2659
        %v2664 = vld [vmem:[%s7] sm:$0x1]
        %v2666 = vlaneseq
        %v2667 = vshrl.u32 %v2666, 7
        %v2668 = vsub.s32 0, %v2667
        %v2669 = vrot.slane %v2664, %v2668
        %2671 = vmatprep.subr.mxu0 0.0
        %2672 = vmatpush1.msra.mxu0 %v790
        %2673 = vmatprep.subr.mxu0 0.0
        %2674 = vmatpush1.msra.mxu0 %v789
        %2675 = vmatprep.subr.mxu0 0.0
        %2676 = vmatpush1.msra.mxu0 %v788
        %2677 = vmatprep.subr.mxu0 0.0
        %2678 = vmatpush1.msra.mxu0 %v787
        %2679 = vmatprep.subr.mxu0 0.0
        %2680 = vmatpush1.msra.mxu0 %v786
        %2681 = vmatprep.subr.mxu0 0.0
        %2682 = vmatpush1.msra.mxu0 %v785
        %2683 = vmatprep.subr.mxu0 0.0
        %2684 = vmatpush1.msra.mxu0 %v784
        %2685 = vmatprep.subr.mxu0 0.0
        %2686 = vmatpush1.msra.mxu0 %v783
        %2687 = vmatprep.subr.mxu0 0.0
        %2688 = vmatpush1.msra.mxu0 %v782
        %2689 = vmatprep.subr.mxu0 0.0
        %2690 = vmatpush1.msra.mxu0 %v781
        %2691 = vmatprep.subr.mxu0 0.0
        %2692 = vmatpush1.msra.mxu0 %v780
        %2693 = vmatprep.subr.mxu0 0.0
        %2694 = vmatpush1.msra.mxu0 %v779
        %2695 = vmatprep.subr.mxu0 0.0
        %2696 = vmatpush1.msra.mxu0 %v778
        %2697 = vmatprep.subr.mxu0 0.0
        %2698 = vmatpush1.msra.mxu0 %v777
        %2699 = vmatprep.subr.mxu0 0.0
        %2700 = vmatpush1.msra.mxu0 %v776
        %2701 = vmatprep.subr.mxu0 0.0
        %2702 = vmatpush1.msra.mxu0 %v775
        %2703 = vmatprep.subr.mxu0 0.0
        %2704 = vmatpush2.msra.mxu0 0.0
        %2705 = vmatprep.subr.mxu0 0.0
        %2706 = vmatpush2.msra.mxu0 0.0
        %2707 = vmatprep.subr.mxu0 0.0
        %2708 = vmatpush2.msra.mxu0 0.0
        %2709 = vmatprep.subr.mxu0 0.0
        %2710 = vmatpush2.msra.mxu0 0.0
        %2711 = vmatprep.subr.mxu0 0.0
        %2712 = vmatpush2.msra.mxu0 0.0
        %2713 = vmatprep.subr.mxu0 0.0
        %2714 = vmatpush2.msra.mxu0 0.0
        %2715 = vmatprep.subr.mxu0 0.0
        %2716 = vmatpush2.msra.mxu0 0.0
        %2717 = vmatprep.subr.mxu0 0.0
        %2718 = vmatpush2.msra.mxu0 0.0
        %2719 = vmatprep.subr.mxu0 0.0
        %2720 = vmatpush2.msra.mxu0 0.0
        %2721 = vmatprep.subr.mxu0 0.0
        %2722 = vmatpush2.msra.mxu0 0.0
        %2723 = vmatprep.subr.mxu0 0.0
        %2724 = vmatpush2.msra.mxu0 0.0
        %2725 = vmatprep.subr.mxu0 0.0
        %2726 = vmatpush2.msra.mxu0 0.0
        %2727 = vmatprep.subr.mxu0 0.0
        %2728 = vmatpush2.msra.mxu0 0.0
        %2729 = vmatprep.subr.mxu0 0.0
        %2730 = vmatpush2.msra.mxu0 0.0
        %2731 = vmatprep.subr.mxu0 0.0
        %2732 = vmatpush2.msra.mxu0 0.0
        %2733 = vmatprep.subr.mxu0 0.0
        %2734 = vmatpush2.msra.mxu0 0.0
        %2735 = vmatprep.mubr.f32.mxu0 0.0
        %2736 = vmatmul.mubr.f32.gmra.mxu0 %v2662
        %v2737 = vpop.f32.mrf.mxu0
        %v2738 = vadd.f32 %v2669, %v2737
        %v2739 = vpop.f32.mrf.mxu0
        %2740 = vmatprep.mubr.f32.mxu0 0.0
        %2741 = vmatmul.mubr.f32.gmra.mxu0 %v2663
        %v2742 = vpop.f32.mrf.mxu0
        %v2743 = vadd.f32 %v2669, %v2742
        %v2744 = vpop.f32.mrf.mxu0
        %2745 = vdwg.mxu0
        %v2746 = vadd.f32 %v2738, %v670
        %v2747 = vadd.f32 %v2743, %v671
        %2748 = vadd.xlane.f32.xlu0 %v2746
        %v2749 = vpop.xlane.xlu0 %2748
        %2750 = vadd.xlane.f32.xlu0 %v2747
        %v2751 = vpop.xlane.xlu0 %2750
        %v2752 = vrcp.pop 128.0
        %v2753 = vmul.f32 %v2749, %v2752
        %v2754 = vmul.f32 %v2751, %v2752
        %v2755 = vsub.f32 %v2746, %v2753
        %v2756 = vsub.f32 %v2747, %v2754
        %v2757 = vmul.f32 %v2755, %v2755
        %v2758 = vmul.f32 %v2756, %v2756
        %2759 = vadd.xlane.f32.xlu0 %v2757
        %v2760 = vpop.xlane.xlu0 %2759
        %2761 = vadd.xlane.f32.xlu0 %v2758
        %v2762 = vpop.xlane.xlu0 %2761
        %v2763 = vmul.f32 %v2760, %v2752
        %v2764 = vmul.f32 %v2762, %v2752
        %v2765 = vadd.f32 %v2763, 1e-05
        %v2766 = vadd.f32 %v2764, 1e-05
        %v2767 = vrsqrt.pop %v2765
        %v2768 = vrsqrt.pop %v2766
        %v2769 = vmul.f32 %v2755, %v2767
        %v2770 = vmul.f32 %v2756, %v2768
        %v2771 = vlaneseq
        %v2772 = vshrl.u32 %v2771, 7
        %v2773 = vsub.s32 0, %v2772
        %v2774 = vrot.slane %v1472, %v2773
        %v2775 = vmul.f32 %v2774, %v2769
        %v2776 = vmul.f32 %v2774, %v2770
        %v2777 = vlaneseq
        %v2778 = vshrl.u32 %v2777, 7
        %v2779 = vsub.s32 0, %v2778
        %v2780 = vrot.slane %v1474, %v2779
        %v2781 = vadd.f32 %v2775, %v2780
        %v2782 = vadd.f32 %v2776, %v2780
        %2784 = vset.pattern.permute.xlu0 0
        %2785 = vperm.xlu0 %2784, %v675
        %v2786 = vpop.permute.xlu0 %2785
        %2789 = vset.pattern.permute.xlu0 0
        %2790 = vperm.xlu0 %2789, %v676
        %v2791 = vpop.permute.xlu0 %2790
        %v2793 = vmul.f32 %v2781, %v2786
        %v2794 = vmul.f32 %v2782, %v2791
        %v2795 = vld [vmem:[%s11] sm:$0x3]
        %vm2798 = vcmask 1043456
        %v2799 = vrot.slane %v2793, 4
        %v2800 = vrot.slane %v2794, 4
        %v2801 = vsel %vm2798, %v2799, %v2800
        %v2805 = vsel %vm2798, 0.0, %v2799
        %v2806 = vsel %vm2798, %v2800, 0.0
        %vm2809 = vcmask 1046528
        %v2810 = vrot.slane %v2805, 1
        %v2811 = vrot.slane %v2801, 1
        %v2812 = vsel %vm2809, %v2810, %v2811
        %v2813 = vrot.slane %v2806, 1
        %v2814 = vsel %vm2809, %v2811, %v2813
        %vm2817 = vcmask 1045504
        %v2818 = vrot.slane %v2805, 2
        %v2819 = vrot.slane %v2801, 2
        %v2820 = vsel %vm2817, %v2818, %v2819
        %v2821 = vrot.slane %v2806, 2
        %v2822 = vsel %vm2817, %v2819, %v2821
        %vm2825 = vcmask 1044480
        %v2826 = vrot.slane %v2805, 3
        %v2827 = vrot.slane %v2801, 3
        %v2828 = vsel %vm2825, %v2826, %v2827
        %v2829 = vrot.slane %v2806, 3
        %v2830 = vsel %vm2825, %v2827, %v2829
        %v2833 = vrot.slane %v2805, 4
        %v2834 = vrot.slane %v2801, 4
        %v2835 = vsel %vm2798, %v2833, %v2834
        %v2836 = vrot.slane %v2806, 4
        %v2837 = vsel %vm2798, %v2834, %v2836
        %vm2840 = vcmask 1042432
        %v2841 = vrot.slane %v2805, 5
        %v2842 = vrot.slane %v2801, 5
        %v2843 = vsel %vm2840, %v2841, %v2842
        %v2844 = vrot.slane %v2806, 5
        %v2845 = vsel %vm2840, %v2842, %v2844
        %vm2848 = vcmask 1041408
        %v2849 = vrot.slane %v2805, 6
        %v2850 = vrot.slane %v2801, 6
        %v2851 = vsel %vm2848, %v2849, %v2850
        %v2852 = vrot.slane %v2806, 6
        %v2853 = vsel %vm2848, %v2850, %v2852
        %vm2856 = vcmask 1040384
        %v2857 = vrot.slane %v2805, 7
        %v2858 = vrot.slane %v2801, 7
        %v2859 = vsel %vm2856, %v2857, %v2858
        %v2860 = vrot.slane %v2806, 7
        %v2861 = vsel %vm2856, %v2858, %v2860
        %v2865 = vlaneseq
        %v2866 = vshrl.u32 %v2865, 7
        %v2867 = vsub.s32 0, %v2866
        %v2868 = vrot.slane %v2795, %v2867
        %v2869 = vlaneseq
        %v2870 = vshrl.u32 %v2869, 7
        %v2871 = vsub.s32 1, %v2870
        %v2872 = vrot.slane %v2795, %v2871
        %2875 = vmatprep.subr.mxu0 %v1062
        %2876 = vmatpush1.msra.mxu0 %v1061
        %2877 = vmatprep.subr.mxu0 %v1060
        %2878 = vmatpush1.msra.mxu0 %v1059
        %2879 = vmatprep.subr.mxu0 %v1058
        %2880 = vmatpush1.msra.mxu0 %v1057
        %2881 = vmatprep.subr.mxu0 %v1056
        %2882 = vmatpush1.msra.mxu0 %v1055
        %2883 = vmatprep.subr.mxu0 %v1054
        %2884 = vmatpush1.msra.mxu0 %v1053
        %2885 = vmatprep.subr.mxu0 %v1052
        %2886 = vmatpush1.msra.mxu0 %v1051
        %2887 = vmatprep.subr.mxu0 %v1050
        %2888 = vmatpush1.msra.mxu0 %v1049
        %2889 = vmatprep.subr.mxu0 %v1048
        %2890 = vmatpush1.msra.mxu0 %v1047
        %2891 = vmatprep.subr.mxu0 %v1046
        %2892 = vmatpush1.msra.mxu0 %v1045
        %2893 = vmatprep.subr.mxu0 %v1044
        %2894 = vmatpush1.msra.mxu0 %v1043
        %2895 = vmatprep.subr.mxu0 %v1042
        %2896 = vmatpush1.msra.mxu0 %v1041
        %2897 = vmatprep.subr.mxu0 %v1040
        %2898 = vmatpush1.msra.mxu0 %v1039
        %2899 = vmatprep.subr.mxu0 %v1038
        %2900 = vmatpush1.msra.mxu0 %v1037
        %2901 = vmatprep.subr.mxu0 %v1036
        %2902 = vmatpush1.msra.mxu0 %v1035
        %2903 = vmatprep.subr.mxu0 %v1034
        %2904 = vmatpush1.msra.mxu0 %v1033
        %2905 = vmatprep.subr.mxu0 %v1032
        %2906 = vmatpush1.msra.mxu0 %v1031
        %2907 = vmatprep.subr.mxu0 %v1094
        %2908 = vmatpush2.msra.mxu0 %v1093
        %2909 = vmatprep.subr.mxu0 %v1092
        %2910 = vmatpush2.msra.mxu0 %v1091
        %2911 = vmatprep.subr.mxu0 %v1090
        %2912 = vmatpush2.msra.mxu0 %v1089
        %2913 = vmatprep.subr.mxu0 %v1088
        %2914 = vmatpush2.msra.mxu0 %v1087
        %2915 = vmatprep.subr.mxu0 %v1086
        %2916 = vmatpush2.msra.mxu0 %v1085
        %2917 = vmatprep.subr.mxu0 %v1084
        %2918 = vmatpush2.msra.mxu0 %v1083
        %2919 = vmatprep.subr.mxu0 %v1082
        %2920 = vmatpush2.msra.mxu0 %v1081
        %2921 = vmatprep.subr.mxu0 %v1080
        %2922 = vmatpush2.msra.mxu0 %v1079
        %2923 = vmatprep.subr.mxu0 %v1078
        %2924 = vmatpush2.msra.mxu0 %v1077
        %2925 = vmatprep.subr.mxu0 %v1076
        %2926 = vmatpush2.msra.mxu0 %v1075
        %2927 = vmatprep.subr.mxu0 %v1074
        %2928 = vmatpush2.msra.mxu0 %v1073
        %2929 = vmatprep.subr.mxu0 %v1072
        %2930 = vmatpush2.msra.mxu0 %v1071
        %2931 = vmatprep.subr.mxu0 %v1070
        %2932 = vmatpush2.msra.mxu0 %v1069
        %2933 = vmatprep.subr.mxu0 %v1068
        %2934 = vmatpush2.msra.mxu0 %v1067
        %2935 = vmatprep.subr.mxu0 %v1066
        %2936 = vmatpush2.msra.mxu0 %v1065
        %2937 = vmatprep.subr.mxu0 %v1064
        %2938 = vmatpush2.msra.mxu0 %v1063
        %2939 = vmatprep.mubr.f32.mxu0 %v2812
        %2940 = vmatmul.mubr.f32.gmra.mxu0 %v2805
        %v2941 = vpop.f32.mrf.mxu0
        %v2942 = vadd.f32 %v2868, %v2941
        %v2943 = vpop.f32.mrf.mxu0
        %v2944 = vadd.f32 %v2872, %v2943
        %2945 = vmatprep.mubr.f32.mxu0 %v2814
        %2946 = vmatmul.mubr.f32.gmra.mxu0 %v2801
        %v2947 = vpop.f32.mrf.mxu0
        %v2948 = vadd.f32 %v2868, %v2947
        %v2949 = vpop.f32.mrf.mxu0
        %v2950 = vadd.f32 %v2872, %v2949
        %2951 = vdwg.mxu0
        %2952 = vmatprep.subr.mxu0 %v1126
        %2953 = vmatpush1.msra.mxu0 %v1125
        %2954 = vmatprep.subr.mxu0 %v1124
        %2955 = vmatpush1.msra.mxu0 %v1123
        %2956 = vmatprep.subr.mxu0 %v1122
        %2957 = vmatpush1.msra.mxu0 %v1121
        %2958 = vmatprep.subr.mxu0 %v1120
        %2959 = vmatpush1.msra.mxu0 %v1119
        %2960 = vmatprep.subr.mxu0 %v1118
        %2961 = vmatpush1.msra.mxu0 %v1117
        %2962 = vmatprep.subr.mxu0 %v1116
        %2963 = vmatpush1.msra.mxu0 %v1115
        %2964 = vmatprep.subr.mxu0 %v1114
        %2965 = vmatpush1.msra.mxu0 %v1113
        %2966 = vmatprep.subr.mxu0 %v1112
        %2967 = vmatpush1.msra.mxu0 %v1111
        %2968 = vmatprep.subr.mxu0 %v1110
        %2969 = vmatpush1.msra.mxu0 %v1109
        %2970 = vmatprep.subr.mxu0 %v1108
        %2971 = vmatpush1.msra.mxu0 %v1107
        %2972 = vmatprep.subr.mxu0 %v1106
        %2973 = vmatpush1.msra.mxu0 %v1105
        %2974 = vmatprep.subr.mxu0 %v1104
        %2975 = vmatpush1.msra.mxu0 %v1103
        %2976 = vmatprep.subr.mxu0 %v1102
        %2977 = vmatpush1.msra.mxu0 %v1101
        %2978 = vmatprep.subr.mxu0 %v1100
        %2979 = vmatpush1.msra.mxu0 %v1099
        %2980 = vmatprep.subr.mxu0 %v1098
        %2981 = vmatpush1.msra.mxu0 %v1097
        %2982 = vmatprep.subr.mxu0 %v1096
        %2983 = vmatpush1.msra.mxu0 %v1095
        %2984 = vmatprep.subr.mxu0 %v1158
        %2985 = vmatpush2.msra.mxu0 %v1157
        %2986 = vmatprep.subr.mxu0 %v1156
        %2987 = vmatpush2.msra.mxu0 %v1155
        %2988 = vmatprep.subr.mxu0 %v1154
        %2989 = vmatpush2.msra.mxu0 %v1153
        %2990 = vmatprep.subr.mxu0 %v1152
        %2991 = vmatpush2.msra.mxu0 %v1151
        %2992 = vmatprep.subr.mxu0 %v1150
        %2993 = vmatpush2.msra.mxu0 %v1149
        %2994 = vmatprep.subr.mxu0 %v1148
        %2995 = vmatpush2.msra.mxu0 %v1147
        %2996 = vmatprep.subr.mxu0 %v1146
        %2997 = vmatpush2.msra.mxu0 %v1145
        %2998 = vmatprep.subr.mxu0 %v1144
        %2999 = vmatpush2.msra.mxu0 %v1143
        %3000 = vmatprep.subr.mxu0 %v1142
        %3001 = vmatpush2.msra.mxu0 %v1141
        %3002 = vmatprep.subr.mxu0 %v1140
        %3003 = vmatpush2.msra.mxu0 %v1139
        %3004 = vmatprep.subr.mxu0 %v1138
        %3005 = vmatpush2.msra.mxu0 %v1137
        %3006 = vmatprep.subr.mxu0 %v1136
        %3007 = vmatpush2.msra.mxu0 %v1135
        %3008 = vmatprep.subr.mxu0 %v1134
        %3009 = vmatpush2.msra.mxu0 %v1133
        %3010 = vmatprep.subr.mxu0 %v1132
        %3011 = vmatpush2.msra.mxu0 %v1131
        %3012 = vmatprep.subr.mxu0 %v1130
        %3013 = vmatpush2.msra.mxu0 %v1129
        %3014 = vmatprep.subr.mxu0 %v1128
        %3015 = vmatpush2.msra.mxu0 %v1127
        %3016 = vmatprep.mubr.f32.mxu0 %v2828
        %3017 = vmatmul.mubr.f32.gmra.mxu0 %v2820
        %v3018 = vpop.f32.mrf.mxu0
        %v3019 = vadd.f32 %v2942, %v3018
        %v3020 = vpop.f32.mrf.mxu0
        %v3021 = vadd.f32 %v2944, %v3020
        %3022 = vmatprep.mubr.f32.mxu0 %v2830
        %3023 = vmatmul.mubr.f32.gmra.mxu0 %v2822
        %v3024 = vpop.f32.mrf.mxu0
        %v3025 = vadd.f32 %v2948, %v3024
        %v3026 = vpop.f32.mrf.mxu0
        %v3027 = vadd.f32 %v2950, %v3026
        %3028 = vdwg.mxu0
        %3029 = vmatprep.subr.mxu0 %v1190
        %3030 = vmatpush1.msra.mxu0 %v1189
        %3031 = vmatprep.subr.mxu0 %v1188
        %3032 = vmatpush1.msra.mxu0 %v1187
        %3033 = vmatprep.subr.mxu0 %v1186
        %3034 = vmatpush1.msra.mxu0 %v1185
        %3035 = vmatprep.subr.mxu0 %v1184
        %3036 = vmatpush1.msra.mxu0 %v1183
        %3037 = vmatprep.subr.mxu0 %v1182
        %3038 = vmatpush1.msra.mxu0 %v1181
        %3039 = vmatprep.subr.mxu0 %v1180
        %3040 = vmatpush1.msra.mxu0 %v1179
        %3041 = vmatprep.subr.mxu0 %v1178
        %3042 = vmatpush1.msra.mxu0 %v1177
        %3043 = vmatprep.subr.mxu0 %v1176
        %3044 = vmatpush1.msra.mxu0 %v1175
        %3045 = vmatprep.subr.mxu0 %v1174
        %3046 = vmatpush1.msra.mxu0 %v1173
        %3047 = vmatprep.subr.mxu0 %v1172
        %3048 = vmatpush1.msra.mxu0 %v1171
        %3049 = vmatprep.subr.mxu0 %v1170
        %3050 = vmatpush1.msra.mxu0 %v1169
        %3051 = vmatprep.subr.mxu0 %v1168
        %3052 = vmatpush1.msra.mxu0 %v1167
        %3053 = vmatprep.subr.mxu0 %v1166
        %3054 = vmatpush1.msra.mxu0 %v1165
        %3055 = vmatprep.subr.mxu0 %v1164
        %3056 = vmatpush1.msra.mxu0 %v1163
        %3057 = vmatprep.subr.mxu0 %v1162
        %3058 = vmatpush1.msra.mxu0 %v1161
        %3059 = vmatprep.subr.mxu0 %v1160
        %3060 = vmatpush1.msra.mxu0 %v1159
        %3061 = vmatprep.subr.mxu0 %v1222
        %3062 = vmatpush2.msra.mxu0 %v1221
        %3063 = vmatprep.subr.mxu0 %v1220
        %3064 = vmatpush2.msra.mxu0 %v1219
        %3065 = vmatprep.subr.mxu0 %v1218
        %3066 = vmatpush2.msra.mxu0 %v1217
        %3067 = vmatprep.subr.mxu0 %v1216
        %3068 = vmatpush2.msra.mxu0 %v1215
        %3069 = vmatprep.subr.mxu0 %v1214
        %3070 = vmatpush2.msra.mxu0 %v1213
        %3071 = vmatprep.subr.mxu0 %v1212
        %3072 = vmatpush2.msra.mxu0 %v1211
        %3073 = vmatprep.subr.mxu0 %v1210
        %3074 = vmatpush2.msra.mxu0 %v1209
        %3075 = vmatprep.subr.mxu0 %v1208
        %3076 = vmatpush2.msra.mxu0 %v1207
        %3077 = vmatprep.subr.mxu0 %v1206
        %3078 = vmatpush2.msra.mxu0 %v1205
        %3079 = vmatprep.subr.mxu0 %v1204
        %3080 = vmatpush2.msra.mxu0 %v1203
        %3081 = vmatprep.subr.mxu0 %v1202
        %3082 = vmatpush2.msra.mxu0 %v1201
        %3083 = vmatprep.subr.mxu0 %v1200
        %3084 = vmatpush2.msra.mxu0 %v1199
        %3085 = vmatprep.subr.mxu0 %v1198
        %3086 = vmatpush2.msra.mxu0 %v1197
        %3087 = vmatprep.subr.mxu0 %v1196
        %3088 = vmatpush2.msra.mxu0 %v1195
        %3089 = vmatprep.subr.mxu0 %v1194
        %3090 = vmatpush2.msra.mxu0 %v1193
        %3091 = vmatprep.subr.mxu0 %v1192
        %3092 = vmatpush2.msra.mxu0 %v1191
        %3093 = vmatprep.mubr.f32.mxu0 %v2843
        %3094 = vmatmul.mubr.f32.gmra.mxu0 %v2835
        %v3095 = vpop.f32.mrf.mxu0
        %v3096 = vadd.f32 %v3019, %v3095
        %v3097 = vpop.f32.mrf.mxu0
        %v3098 = vadd.f32 %v3021, %v3097
        %3099 = vmatprep.mubr.f32.mxu0 %v2845
        %3100 = vmatmul.mubr.f32.gmra.mxu0 %v2837
        %v3101 = vpop.f32.mrf.mxu0
        %v3102 = vadd.f32 %v3025, %v3101
        %v3103 = vpop.f32.mrf.mxu0
        %v3104 = vadd.f32 %v3027, %v3103
        %3105 = vdwg.mxu0
        %3106 = vmatprep.subr.mxu0 %v1254
        %3107 = vmatpush1.msra.mxu0 %v1253
        %3108 = vmatprep.subr.mxu0 %v1252
        %3109 = vmatpush1.msra.mxu0 %v1251
        %3110 = vmatprep.subr.mxu0 %v1250
        %3111 = vmatpush1.msra.mxu0 %v1249
        %3112 = vmatprep.subr.mxu0 %v1248
        %3113 = vmatpush1.msra.mxu0 %v1247
        %3114 = vmatprep.subr.mxu0 %v1246
        %3115 = vmatpush1.msra.mxu0 %v1245
        %3116 = vmatprep.subr.mxu0 %v1244
        %3117 = vmatpush1.msra.mxu0 %v1243
        %3118 = vmatprep.subr.mxu0 %v1242
        %3119 = vmatpush1.msra.mxu0 %v1241
        %3120 = vmatprep.subr.mxu0 %v1240
        %3121 = vmatpush1.msra.mxu0 %v1239
        %3122 = vmatprep.subr.mxu0 %v1238
        %3123 = vmatpush1.msra.mxu0 %v1237
        %3124 = vmatprep.subr.mxu0 %v1236
        %3125 = vmatpush1.msra.mxu0 %v1235
        %3126 = vmatprep.subr.mxu0 %v1234
        %3127 = vmatpush1.msra.mxu0 %v1233
        %3128 = vmatprep.subr.mxu0 %v1232
        %3129 = vmatpush1.msra.mxu0 %v1231
        %3130 = vmatprep.subr.mxu0 %v1230
        %3131 = vmatpush1.msra.mxu0 %v1229
        %3132 = vmatprep.subr.mxu0 %v1228
        %3133 = vmatpush1.msra.mxu0 %v1227
        %3134 = vmatprep.subr.mxu0 %v1226
        %3135 = vmatpush1.msra.mxu0 %v1225
        %3136 = vmatprep.subr.mxu0 %v1224
        %3137 = vmatpush1.msra.mxu0 %v1223
        %3138 = vmatprep.subr.mxu0 %v1286
        %3139 = vmatpush2.msra.mxu0 %v1285
        %3140 = vmatprep.subr.mxu0 %v1284
        %3141 = vmatpush2.msra.mxu0 %v1283
        %3142 = vmatprep.subr.mxu0 %v1282
        %3143 = vmatpush2.msra.mxu0 %v1281
        %3144 = vmatprep.subr.mxu0 %v1280
        %3145 = vmatpush2.msra.mxu0 %v1279
        %3146 = vmatprep.subr.mxu0 %v1278
        %3147 = vmatpush2.msra.mxu0 %v1277
        %3148 = vmatprep.subr.mxu0 %v1276
        %3149 = vmatpush2.msra.mxu0 %v1275
        %3150 = vmatprep.subr.mxu0 %v1274
        %3151 = vmatpush2.msra.mxu0 %v1273
        %3152 = vmatprep.subr.mxu0 %v1272
        %3153 = vmatpush2.msra.mxu0 %v1271
        %3154 = vmatprep.subr.mxu0 %v1270
        %3155 = vmatpush2.msra.mxu0 %v1269
        %3156 = vmatprep.subr.mxu0 %v1268
        %3157 = vmatpush2.msra.mxu0 %v1267
        %3158 = vmatprep.subr.mxu0 %v1266
        %3159 = vmatpush2.msra.mxu0 %v1265
        %3160 = vmatprep.subr.mxu0 %v1264
        %3161 = vmatpush2.msra.mxu0 %v1263
        %3162 = vmatprep.subr.mxu0 %v1262
        %3163 = vmatpush2.msra.mxu0 %v1261
        %3164 = vmatprep.subr.mxu0 %v1260
        %3165 = vmatpush2.msra.mxu0 %v1259
        %3166 = vmatprep.subr.mxu0 %v1258
        %3167 = vmatpush2.msra.mxu0 %v1257
        %3168 = vmatprep.subr.mxu0 %v1256
        %3169 = vmatpush2.msra.mxu0 %v1255
        %3170 = vmatprep.mubr.f32.mxu0 %v2859
        %3171 = vmatmul.mubr.f32.gmra.mxu0 %v2851
        %v3172 = vpop.f32.mrf.mxu0
        %v3173 = vadd.f32 %v3096, %v3172
        %v3174 = vpop.f32.mrf.mxu0
        %v3175 = vadd.f32 %v3098, %v3174
        %3176 = vmatprep.mubr.f32.mxu0 %v2861
        %3177 = vmatmul.mubr.f32.gmra.mxu0 %v2853
        %v3178 = vpop.f32.mrf.mxu0
        %v3179 = vadd.f32 %v3102, %v3178
        %v3180 = vpop.f32.mrf.mxu0
        %v3181 = vadd.f32 %v3104, %v3180
        %3182 = vdwg.mxu0
        %3183 = vmatprep.subr.mxu0 %v1318
        %3184 = vmatpush1.msra.mxu0 %v1317
        %3185 = vmatprep.subr.mxu0 %v1316
        %3186 = vmatpush1.msra.mxu0 %v1315
        %3187 = vmatprep.subr.mxu0 %v1314
        %3188 = vmatpush1.msra.mxu0 %v1313
        %3189 = vmatprep.subr.mxu0 %v1312
        %3190 = vmatpush1.msra.mxu0 %v1311
        %3191 = vmatprep.subr.mxu0 %v1310
        %3192 = vmatpush1.msra.mxu0 %v1309
        %3193 = vmatprep.subr.mxu0 %v1308
        %3194 = vmatpush1.msra.mxu0 %v1307
        %3195 = vmatprep.subr.mxu0 %v1306
        %3196 = vmatpush1.msra.mxu0 %v1305
        %3197 = vmatprep.subr.mxu0 %v1304
        %3198 = vmatpush1.msra.mxu0 %v1303
        %3199 = vmatprep.subr.mxu0 %v1302
        %3200 = vmatpush1.msra.mxu0 %v1301
        %3201 = vmatprep.subr.mxu0 %v1300
        %3202 = vmatpush1.msra.mxu0 %v1299
        %3203 = vmatprep.subr.mxu0 %v1298
        %3204 = vmatpush1.msra.mxu0 %v1297
        %3205 = vmatprep.subr.mxu0 %v1296
        %3206 = vmatpush1.msra.mxu0 %v1295
        %3207 = vmatprep.subr.mxu0 %v1294
        %3208 = vmatpush1.msra.mxu0 %v1293
        %3209 = vmatprep.subr.mxu0 %v1292
        %3210 = vmatpush1.msra.mxu0 %v1291
        %3211 = vmatprep.subr.mxu0 %v1290
        %3212 = vmatpush1.msra.mxu0 %v1289
        %3213 = vmatprep.subr.mxu0 %v1288
        %3214 = vmatpush1.msra.mxu0 %v1287
        %3215 = vmatprep.subr.mxu0 0.0
        %3216 = vmatpush2.msra.mxu0 0.0
        %3217 = vmatprep.subr.mxu0 0.0
        %3218 = vmatpush2.msra.mxu0 0.0
        %3219 = vmatprep.subr.mxu0 0.0
        %3220 = vmatpush2.msra.mxu0 0.0
        %3221 = vmatprep.subr.mxu0 0.0
        %3222 = vmatpush2.msra.mxu0 0.0
        %3223 = vmatprep.subr.mxu0 0.0
        %3224 = vmatpush2.msra.mxu0 0.0
        %3225 = vmatprep.subr.mxu0 0.0
        %3226 = vmatpush2.msra.mxu0 0.0
        %3227 = vmatprep.subr.mxu0 0.0
        %3228 = vmatpush2.msra.mxu0 0.0
        %3229 = vmatprep.subr.mxu0 0.0
        %3230 = vmatpush2.msra.mxu0 0.0
        %3231 = vmatprep.subr.mxu0 0.0
        %3232 = vmatpush2.msra.mxu0 0.0
        %3233 = vmatprep.subr.mxu0 0.0
        %3234 = vmatpush2.msra.mxu0 0.0
        %3235 = vmatprep.subr.mxu0 0.0
        %3236 = vmatpush2.msra.mxu0 0.0
        %3237 = vmatprep.subr.mxu0 0.0
        %3238 = vmatpush2.msra.mxu0 0.0
        %3239 = vmatprep.subr.mxu0 0.0
        %3240 = vmatpush2.msra.mxu0 0.0
        %3241 = vmatprep.subr.mxu0 0.0
        %3242 = vmatpush2.msra.mxu0 0.0
        %3243 = vmatprep.subr.mxu0 0.0
        %3244 = vmatpush2.msra.mxu0 0.0
        %3245 = vmatprep.subr.mxu0 0.0
        %3246 = vmatpush2.msra.mxu0 0.0
        %3247 = vmatprep.mubr.f32.mxu0 0.0
        %3248 = vmatmul.mubr.f32.gmra.mxu0 %v2801
        %v3249 = vpop.f32.mrf.mxu0
        %v3250 = vadd.f32 %v3173, %v3249
        %v3251 = vpop.f32.mrf.mxu0
        %v3252 = vadd.f32 %v3175, %v3251
        %3253 = vmatprep.mubr.f32.mxu0 0.0
        %3254 = vmatmul.mubr.f32.gmra.mxu0 %v2806
        %v3255 = vpop.f32.mrf.mxu0
        %v3256 = vadd.f32 %v3179, %v3255
        %v3257 = vpop.f32.mrf.mxu0
        %v3258 = vadd.f32 %v3181, %v3257
        %3259 = vdwg.mxu0
        %v3260 = vmin.f32 %v3250, 20.0
        %v3261 = vmin.f32 %v3252, 20.0
        %v3262 = vmin.f32 %v3256, 20.0
        %v3263 = vmin.f32 %v3258, 20.0
        %v3264 = vmul.f32 %v3260, 1.442695
        %v3265 = vpow.pop %v3264
        %v3266 = vmul.f32 %v3261, 1.442695
        %v3267 = vpow.pop %v3266
        %v3268 = vmul.f32 %v3262, 1.442695
        %v3269 = vpow.pop %v3268
        %v3270 = vmul.f32 %v3263, 1.442695
        %v3271 = vpow.pop %v3270
        %v3272 = vadd.f32 %v3265, 1.0
        %v3273 = vadd.f32 %v3267, 1.0
        %v3274 = vadd.f32 %v3269, 1.0
        %v3275 = vadd.f32 %v3271, 1.0
        %v3276 = vmul.f32 %v3272, %v3272
        %v3277 = vmul.f32 %v3273, %v3273
        %v3278 = vmul.f32 %v3274, %v3274
        %v3279 = vmul.f32 %v3275, %v3275
        %v3280 = vadd.f32 %v3276, 1.0
        %v3281 = vadd.f32 %v3277, 1.0
        %v3282 = vadd.f32 %v3278, 1.0
        %v3283 = vadd.f32 %v3279, 1.0
        %v3284 = vrcp.pop %v3280
        %v3285 = vrcp.pop %v3281
        %v3286 = vrcp.pop %v3282
        %v3287 = vrcp.pop %v3283
        %v3288 = vmul.f32 %v3284, 2.0
        %v3289 = vmul.f32 %v3285, 2.0
        %v3290 = vmul.f32 %v3286, 2.0
        %v3291 = vmul.f32 %v3287, 2.0
        %v3292 = vsub.f32 1.0, %v3288
        %v3293 = vsub.f32 1.0, %v3289
        %v3294 = vsub.f32 1.0, %v3290
        %v3295 = vsub.f32 1.0, %v3291
        %v3296 = vmul.f32 %v3250, %v3292
        %v3297 = vmul.f32 %v3252, %v3293
        %v3298 = vmul.f32 %v3256, %v3294
        %v3299 = vmul.f32 %v3258, %v3295
        %v3300 = vld [vmem:[%s13] sm:$0x1]
        %v3302 = vlaneseq
        %v3303 = vshrl.u32 %v3302, 7
        %v3304 = vsub.s32 0, %v3303
        %v3305 = vrot.slane %v3300, %v3304
        %3307 = vmatprep.subr.mxu0 0.0
        %3308 = vmatpush1.msra.mxu0 %v1366
        %3309 = vmatprep.subr.mxu0 0.0
        %3310 = vmatpush1.msra.mxu0 %v1365
        %3311 = vmatprep.subr.mxu0 0.0
        %3312 = vmatpush1.msra.mxu0 %v1364
        %3313 = vmatprep.subr.mxu0 0.0
        %3314 = vmatpush1.msra.mxu0 %v1363
        %3315 = vmatprep.subr.mxu0 0.0
        %3316 = vmatpush1.msra.mxu0 %v1362
        %3317 = vmatprep.subr.mxu0 0.0
        %3318 = vmatpush1.msra.mxu0 %v1361
        %3319 = vmatprep.subr.mxu0 0.0
        %3320 = vmatpush1.msra.mxu0 %v1360
        %3321 = vmatprep.subr.mxu0 0.0
        %3322 = vmatpush1.msra.mxu0 %v1359
        %3323 = vmatprep.subr.mxu0 0.0
        %3324 = vmatpush1.msra.mxu0 %v1358
        %3325 = vmatprep.subr.mxu0 0.0
        %3326 = vmatpush1.msra.mxu0 %v1357
        %3327 = vmatprep.subr.mxu0 0.0
        %3328 = vmatpush1.msra.mxu0 %v1356
        %3329 = vmatprep.subr.mxu0 0.0
        %3330 = vmatpush1.msra.mxu0 %v1355
        %3331 = vmatprep.subr.mxu0 0.0
        %3332 = vmatpush1.msra.mxu0 %v1354
        %3333 = vmatprep.subr.mxu0 0.0
        %3334 = vmatpush1.msra.mxu0 %v1353
        %3335 = vmatprep.subr.mxu0 0.0
        %3336 = vmatpush1.msra.mxu0 %v1352
        %3337 = vmatprep.subr.mxu0 0.0
        %3338 = vmatpush1.msra.mxu0 %v1351
        %3339 = vmatprep.subr.mxu0 0.0
        %3340 = vmatpush2.msra.mxu0 %v1382
        %3341 = vmatprep.subr.mxu0 0.0
        %3342 = vmatpush2.msra.mxu0 %v1381
        %3343 = vmatprep.subr.mxu0 0.0
        %3344 = vmatpush2.msra.mxu0 %v1380
        %3345 = vmatprep.subr.mxu0 0.0
        %3346 = vmatpush2.msra.mxu0 %v1379
        %3347 = vmatprep.subr.mxu0 0.0
        %3348 = vmatpush2.msra.mxu0 %v1378
        %3349 = vmatprep.subr.mxu0 0.0
        %3350 = vmatpush2.msra.mxu0 %v1377
        %3351 = vmatprep.subr.mxu0 0.0
        %3352 = vmatpush2.msra.mxu0 %v1376
        %3353 = vmatprep.subr.mxu0 0.0
        %3354 = vmatpush2.msra.mxu0 %v1375
        %3355 = vmatprep.subr.mxu0 0.0
        %3356 = vmatpush2.msra.mxu0 %v1374
        %3357 = vmatprep.subr.mxu0 0.0
        %3358 = vmatpush2.msra.mxu0 %v1373
        %3359 = vmatprep.subr.mxu0 0.0
        %3360 = vmatpush2.msra.mxu0 %v1372
        %3361 = vmatprep.subr.mxu0 0.0
        %3362 = vmatpush2.msra.mxu0 %v1371
        %3363 = vmatprep.subr.mxu0 0.0
        %3364 = vmatpush2.msra.mxu0 %v1370
        %3365 = vmatprep.subr.mxu0 0.0
        %3366 = vmatpush2.msra.mxu0 %v1369
        %3367 = vmatprep.subr.mxu0 0.0
        %3368 = vmatpush2.msra.mxu0 %v1368
        %3369 = vmatprep.subr.mxu0 0.0
        %3370 = vmatpush2.msra.mxu0 %v1367
        %3371 = vmatprep.mubr.f32.mxu0 %v3297
        %3372 = vmatmul.mubr.f32.gmra.mxu0 %v3296
        %v3373 = vpop.f32.mrf.mxu0
        %v3374 = vadd.f32 %v3305, %v3373
        %v3375 = vpop.f32.mrf.mxu0
        %3376 = vmatprep.mubr.f32.mxu0 %v3299
        %3377 = vmatmul.mubr.f32.gmra.mxu0 %v3298
        %v3378 = vpop.f32.mrf.mxu0
        %v3379 = vadd.f32 %v3305, %v3378
        %v3380 = vpop.f32.mrf.mxu0
        %3381 = vdwg.mxu0
        %v3382 = vadd.f32 %v3374, %v2793
        %v3383 = vadd.f32 %v3379, %v2794
        %3384 = vadd.xlane.f32.xlu0 %v3382
        %v3385 = vpop.xlane.xlu0 %3384
        %3386 = vadd.xlane.f32.xlu0 %v3383
        %v3387 = vpop.xlane.xlu0 %3386
        %v3388 = vmul.f32 %v3385, %v2752
        %v3389 = vmul.f32 %v3387, %v2752
        %v3390 = vsub.f32 %v3382, %v3388
        %v3391 = vsub.f32 %v3383, %v3389
        %v3392 = vmul.f32 %v3390, %v3390
        %v3393 = vmul.f32 %v3391, %v3391
        %3394 = vadd.xlane.f32.xlu0 %v3392
        %v3395 = vpop.xlane.xlu0 %3394
        %3396 = vadd.xlane.f32.xlu0 %v3393
        %v3397 = vpop.xlane.xlu0 %3396
        %v3398 = vmul.f32 %v3395, %v2752
        %v3399 = vmul.f32 %v3397, %v2752
        %v3400 = vadd.f32 %v3398, 1e-05
        %v3401 = vadd.f32 %v3399, 1e-05
        %v3402 = vrsqrt.pop %v3400
        %v3403 = vrsqrt.pop %v3401
        %v3404 = vmul.f32 %v3390, %v3402
        %v3405 = vmul.f32 %v3391, %v3403
        %v3406 = vlaneseq
        %v3407 = vshrl.u32 %v3406, 7
        %v3408 = vsub.s32 0, %v3407
        %v3409 = vrot.slane %v1543, %v3408
        %v3410 = vmul.f32 %v3409, %v3404
        %v3411 = vmul.f32 %v3409, %v3405
        %v3412 = vlaneseq
        %v3413 = vshrl.u32 %v3412, 7
        %v3414 = vsub.s32 0, %v3413
        %v3415 = vrot.slane %v1545, %v3414
        %v3416 = vadd.f32 %v3410, %v3415
        %v3417 = vadd.f32 %v3411, %v3415
        %v3418 = vmul.f32 %v3416, %v2786
        %v3419 = vmul.f32 %v3417, %v2791
        %3420 = vst [vmem:[%s652] sm:$0xff] %v3418
        %3421 = vst [vmem:[%s652 + $0x8] sm:$0xff] %v3419
        %s3422 = sand.u32 %s363, 1
        %s3423 = scalar_lea.sflag [#allocation4], %s3422
        %s3424 = sand.u32 %s363, 1
        %s3425 = smul.addr %s3424, 16
        %s3426 = scalar_lea.vmem [#allocation14], %s3425
        %s3427 = sand.u32 %s389, 1
        %s3428 = scalar_lea.sflag [#allocation16], %s3427
        %s3429 = sand.u32 %s389, 1
        %s3430 = smul.addr %s3429, 32
        %s3431 = scalar_lea.vmem [#allocation15], %s3430
        // Predicated region
        $region105: #{tpu_custom_call.1} parent=75 // pred_check
          %p3432 = pneg %p373
        $region106: #{tpu_custom_call.1} parent=75 // pred_check_branch
          %3434 = sbr.rel (%p3432) target = $region108
        $region107: #{tpu_custom_call.1} parent=75 // pred_region
          %s3436 = ssub.s32 256, 256
          %3437 = vsyncadd %s3423, %s3436
          %s3438 = smul.addr %s41, 2
          %s3439 = smul.addr %s3438, 128
          %s3440 = scalar_lea.hbm %s14, %s3439
          %s3441 = sshll.u32 %s3426, 4
          %s3442 = int_to_ptr.vmem [resolvable:$true] %s3441
          %3447 = dma.vmem_to_hbm [thread:$0]  %s3442, 256, %s3440, %s3423, 128, 128, 8
        $region108: #{tpu_custom_call.1} parent=75 // pred_fallthru
          _
        // Predicated region
        $region109: #{tpu_custom_call.1} parent=75 // pred_check
          %p3448 = pneg %p399
        $region110: #{tpu_custom_call.1} parent=75 // pred_check_branch
          %3450 = sbr.rel (%p3448) target = $region112
        $region111: #{tpu_custom_call.1} parent=75 // pred_region
          %s3452 = ssub.s32 512, 512
          %3453 = vsyncadd %s3428, %s3452
          %s3454 = smul.addr %s41, 4
          %s3455 = smul.addr %s3454, 128
          %s3456 = scalar_lea.hbm %s15, %s3455
          %s3457 = sshll.u32 %s3431, 4
          %s3458 = int_to_ptr.vmem [resolvable:$true] %s3457
          %3463 = dma.vmem_to_hbm [thread:$0]  %s3458, 512, %s3456, %s3428, 128, 128, 8
        $region112: #{tpu_custom_call.1} parent=75 // pred_fallthru
          _
      $region76: #{tpu_custom_call.1} parent=5 // pred_fallthru
        _
      %p3464 = scmp.le.s32.totalorder 2, %s36
      // Predicated region
      $region113: #{tpu_custom_call.1} parent=5 // pred_check
        %p3465 = pneg %p3464
      $region114: #{tpu_custom_call.1} parent=5 // pred_check_branch
        %3467 = sbr.rel (%p3465) target = $region116
      $region115: #{tpu_custom_call.1} parent=5 // pred_region
        %s3468 = ssub.s32 %s36, 2
        // Predicated region
        $region117: #{tpu_custom_call.1} parent=115 // pred_check
          %p3469 = pneg %p379
        $region118: #{tpu_custom_call.1} parent=115 // pred_check_branch
          %3471 = sbr.rel (%p3469) target = $region120
        $region119: #{tpu_custom_call.1} parent=115 // pred_region
          %s3472 = sand.u32 %s364, 1
          %s3473 = scalar_lea.sflag [#allocation4], %s3472
          %s3474 = sand.u32 %s364, 1
          %s3475 = smul.addr %s3474, 16
          %s3476 = scalar_lea.vmem [#allocation14], %s3475
          %3477 = dma.done %s3473, 256
        $region120: #{tpu_custom_call.1} parent=115 // pred_fallthru
          _
        // Predicated region
        $region121: #{tpu_custom_call.1} parent=115 // pred_check
          %p3478 = pneg %p405
        $region122: #{tpu_custom_call.1} parent=115 // pred_check_branch
          %3480 = sbr.rel (%p3478) target = $region124
        $region123: #{tpu_custom_call.1} parent=115 // pred_region
          %s3481 = sand.u32 %s390, 1
          %s3482 = scalar_lea.sflag [#allocation16], %s3481
          %s3483 = sand.u32 %s390, 1
          %s3484 = smul.addr %s3483, 32
          %s3485 = scalar_lea.vmem [#allocation15], %s3484
          %3486 = dma.done %s3482, 512
        $region124: #{tpu_custom_call.1} parent=115 // pred_fallthru
          _
      $region116: #{tpu_custom_call.1} parent=5 // pred_fallthru
        _
    $region6: #{tpu_custom_call.1} parent=1 // loop_footer
      %s40 = sadd.s32 1, %s36
    $region7: #{tpu_custom_call.1} parent=1 // loop_footer_branch
      %35 = sbr.rel target = $region3
    $region8: #{tpu_custom_call.1} parent=1 // loop_exit
      _
    %3487 = vsyncpa [#allocation3], 1
    %s3488 = scalar_lea.sflag [#allocation3], 1
    %3489 = vsyncpa %s3488, 1
    %3490 = vsyncpa [#allocation6], 1
    %s3491 = scalar_lea.sflag [#allocation6], 1
    %3492 = vsyncpa %s3491, 1
    %3493 = vsyncpa [#allocation9], 1
    %3494 = vsyncpa [#allocation12], 1
    %3495 = vsyncpa [#allocation4], 1
    %s3496 = scalar_lea.sflag [#allocation4], 1
    %3497 = vsyncpa %s3496, 1
    %3498 = vsyncpa [#allocation16], 1
    %s3499 = scalar_lea.sflag [#allocation16], 1
    %3500 = vsyncpa %s3499, 1

</llo_original>
